<compile_context>
chip_gen: v6e
topology: v6e:2x2x1
jax: 0.10.0
libtpu: 0.0.40
codegen_flags: <defaults>
</compile_context>

<pallas_src>
import numpy as np
import jax
import jax.numpy as jnp
from jax.experimental import pallas as pl
from jax.experimental.pallas import tpu as pltpu  # noqa: F401  (kept per harness instructions)


# ----------------------------------------------------------------------------
# Pallas kernels (single invocation, full-array blocks -- everything is < ~200 KiB)
# ----------------------------------------------------------------------------

def mapping_kernel(z_ref, w_ref, o_ref):
    # Fused mapping network: L x (WeightScaledLinear -> PixelwiseNorm -> Mish).
    # z: (B, D), w: (L, D, D) pre-scaled & transposed layer weights.
    h = z_ref[...]
    for l in range(w_ref.shape[0]):
        h = jnp.dot(h, w_ref[l], preferred_element_type=jnp.float32)
        h = h * jax.lax.rsqrt(jnp.mean(h * h, axis=-1, keepdims=True) + 1e-8)
        h = h * jnp.tanh(jnp.logaddexp(h, 0.0))          # Mish = x * tanh(softplus(x))
    o_ref[...] = h


def matmul2d_kernel(a_ref, b_ref, o_ref):
    o_ref[...] = jnp.dot(a_ref[...], b_ref[...], preferred_element_type=jnp.float32)


def conv_noise_pixnorm_kernel(p_ref, w_ref, d_ref, n_ref, nw_ref, o_ref):
    # Fused ModulatedConv2d (as im2col matmul) + demod + Noise + PixelwiseNorm.
    # p : (K*K*Cin, B*N)  style-pre-scaled patches (channel-first, batch in columns)
    # w : (Cout, K*K*Cin) batch-shared base weight
    # d : (Cout, 1)       demodulation (from un-modulated weight, as in reference)
    # n : (1, B*N)        per-pixel noise (shared across channels)
    # nw: (1, 1)          learned noise weight (zero at init)
    y = jnp.dot(w_ref[...], p_ref[...], preferred_element_type=jnp.float32)
    y = y * d_ref[...] + nw_ref[...] * n_ref[...]
    o_ref[...] = y * jax.lax.rsqrt(jnp.mean(y * y, axis=0, keepdims=True) + 1e-8)


def _frelu(x, p_ref, w_ref):
    # FReLU: depthwise 3x3 conv (9 leading-axis taps) + BatchNorm2d(training
    # stats, gamma=1/beta=0 at init, biased variance over B*H*W) + max(x, tx).
    # x: (C, B*N), p: (9, C, B*N), w: (9, C, 1).
    tx = p_ref[0] * w_ref[0]
    for k in range(1, 9):
        tx = tx + p_ref[k] * w_ref[k]
    mean = jnp.mean(tx, axis=1, keepdims=True)
    var = jnp.mean((tx - mean) * (tx - mean), axis=1, keepdims=True)
    txn = (tx - mean) * jax.lax.rsqrt(var + 1e-5)
    return jnp.maximum(x, txn)


def frelu_kernel(x_ref, p_ref, w_ref, o_ref):
    o_ref[...] = _frelu(x_ref[...], p_ref, w_ref)


def frelu_torgb_kernel(x_ref, p_ref, w_ref, wrgb_ref, o_ref, rgb_ref):
    # FReLU fused with the toRGB 1x1 conv:  rgb (3, B*N) = Wrgb (3, C) @ z (C, B*N).
    z = _frelu(x_ref[...], p_ref, w_ref)
    o_ref[...] = z
    rgb_ref[...] = jnp.dot(wrgb_ref[...], z, preferred_element_type=jnp.float32)


def upsample_add_sig_kernel(prev_ref, m_ref, rgb_ref, acc_ref, sig_ref):
    # Bilinear x2 upsample (align_corners) of prev RGB as a lane-dense matmul,
    # skip-add with the new RGB, and fused sigmoid.
    # prev: (3*B, Nin), m: (Nin, Nout), rgb: (3*B, Nout).
    up = jnp.dot(prev_ref[...], m_ref[...], preferred_element_type=jnp.float32)
    acc = rgb_ref[...] + up
    acc_ref[...] = acc
    sig_ref[...] = 1.0 / (1.0 + jnp.exp(-acc))


def sigmoid_kernel(x_ref, o_ref):
    o_ref[...] = 1.0 / (1.0 + jnp.exp(-x_ref[...]))


# ----------------------------------------------------------------------------
# Pallas wrappers
# ----------------------------------------------------------------------------

def pallas_mapping(z, w_stack):
    return pl.pallas_call(
        mapping_kernel,
        out_shape=jax.ShapeDtypeStruct(z.shape, jnp.float32),
    )(z, w_stack)


def pallas_matmul2d(a, b):
    return pl.pallas_call(
        matmul2d_kernel,
        out_shape=jax.ShapeDtypeStruct((a.shape[0], b.shape[1]), jnp.float32),
    )(a, b)


def pallas_conv_noise_pixnorm(pT, wT, demod, noise, noise_w):
    return pl.pallas_call(
        conv_noise_pixnorm_kernel,
        out_shape=jax.ShapeDtypeStruct((wT.shape[0], pT.shape[1]), jnp.float32),
    )(pT, wT, demod, noise, noise_w)


def pallas_frelu(x, p9, w_dw):
    return pl.pallas_call(
        frelu_kernel,
        out_shape=jax.ShapeDtypeStruct(x.shape, jnp.float32),
    )(x, p9, w_dw)


def pallas_frelu_torgb(x, p9, w_dw, w_rgb):
    C, BN = x.shape
    return pl.pallas_call(
        frelu_torgb_kernel,
        out_shape=(jax.ShapeDtypeStruct((C, BN), jnp.float32),
                   jax.ShapeDtypeStruct((w_rgb.shape[0], BN), jnp.float32)),
    )(x, p9, w_dw, w_rgb)


def pallas_upsample_add_sig(prev_rows, m2t, rgb_rows):
    return pl.pallas_call(
        upsample_add_sig_kernel,
        out_shape=(jax.ShapeDtypeStruct(rgb_rows.shape, jnp.float32),
                   jax.ShapeDtypeStruct(rgb_rows.shape, jnp.float32)),
    )(prev_rows, m2t, rgb_rows)


def pallas_sigmoid(x):
    return pl.pallas_call(
        sigmoid_kernel,
        out_shape=jax.ShapeDtypeStruct(x.shape, jnp.float32),
    )(x)


# ----------------------------------------------------------------------------
# Glue: channel-first patch extraction, upsample matrix, parameter init
# ----------------------------------------------------------------------------

def extract_patches_cf(xpad, K, OH, OW):
    """xpad: (C, B, Hp, Wp) -> (K*K, C, B*OH*OW); tap index = ky*K + kx."""
    C, B, _, _ = xpad.shape
    taps = [xpad[:, :, ky:ky + OH, kx:kx + OW].reshape(C, B * OH * OW)
            for ky in range(K) for kx in range(K)]
    return jnp.stack(taps, axis=0)


def bilinear_matrix(n_in, n_out):
    """1-D bilinear interpolation matrix (align_corners=True), numpy (n_out, n_in)."""
    dst = np.arange(n_out, dtype=np.float64)
    src = dst * (n_in - 1) / (n_out - 1)
    lo = np.clip(np.floor(src).astype(np.int64), 0, n_in - 2)
    frac = src - lo
    M = np.zeros((n_out, n_in), dtype=np.float32)
    M[np.arange(n_out), lo] += (1.0 - frac).astype(np.float32)
    M[np.arange(n_out), lo + 1] += frac.astype(np.float32)
    return M


def init_params(key, num_depth, num_fmap, num_mapping, n_channel, dim_latent):
    keys = list(jax.random.split(key, 7 * num_depth + num_mapping))
    kit = iter(keys)
    params = {}

    # mapping network: pre-scaled, transposed layer weights stacked (L, D, D)
    maps = []
    for _ in range(num_mapping):
        w = jax.random.normal(next(kit), (dim_latent, dim_latent), jnp.float32)
        maps.append((w * np.sqrt(2.0 / dim_latent)).T)
    params['map_w'] = jnp.stack(maps, axis=0)

    blocks = []
    mod_cols = []
    for i in range(num_depth):
        I, O = num_fmap(i), num_fmap(i + 1)
        bp = {}
        # conv1: ModulatedConv2d deconv (k=4, s=2, p=1) -> flipped regular conv
        w1 = jax.random.normal(next(kit), (O, I, 4, 4), jnp.float32)
        base1 = (w1 * np.sqrt(2.0 / (I * 16)))[:, :, ::-1, ::-1]
        bp['conv1_wT'] = jnp.transpose(base1, (0, 2, 3, 1)).reshape(O, 16 * I)
        bp['demod1'] = jax.lax.rsqrt(jnp.sum(w1 ** 2, axis=(1, 2, 3)) + 1e-8).reshape(O, 1)
        m1 = jax.random.normal(next(kit), (I, dim_latent), jnp.float32)
        mod1T = (m1 * np.sqrt(2.0 / dim_latent)).T                       # (D, I)
        bp['noise1_w'] = jnp.zeros((1, 1), jnp.float32)
        f1 = jax.random.normal(next(kit), (O, 1, 3, 3), jnp.float32)
        bp['frelu1_w'] = jnp.transpose(f1[:, 0] * np.sqrt(2.0 / (O * 9)),
                                       (1, 2, 0)).reshape(9, O)[:, :, None]
        # conv2: ModulatedConv2d (k=3, s=1, p=1)
        w2 = jax.random.normal(next(kit), (O, O, 3, 3), jnp.float32)
        base2 = w2 * np.sqrt(2.0 / (O * 9))
        bp['conv2_wT'] = jnp.transpose(base2, (0, 2, 3, 1)).reshape(O, 9 * O)
        bp['demod2'] = jax.lax.rsqrt(jnp.sum(w2 ** 2, axis=(1, 2, 3)) + 1e-8).reshape(O, 1)
        m2 = jax.random.normal(next(kit), (O, dim_latent), jnp.float32)
        mod2T = (m2 * np.sqrt(2.0 / dim_latent)).T                       # (D, O)
        bp['noise2_w'] = jnp.zeros((1, 1), jnp.float32)
        f2 = jax.random.normal(next(kit), (O, 1, 3, 3), jnp.float32)
        bp['frelu2_w'] = jnp.transpose(f2[:, 0] * np.sqrt(2.0 / (O * 9)),
                                       (1, 2, 0)).reshape(9, O)[:, :, None]
        # toRGB: WeightScaledConv2d 1x1
        wr = jax.random.normal(next(kit), (n_channel, O, 1, 1), jnp.float32)
        bp['rgb_wT'] = wr[:, :, 0, 0] * np.sqrt(2.0 / O)                 # (3, O)
        blocks.append(bp)
        mod_cols.append(jnp.concatenate([mod1T, mod2T], axis=1))         # (D, I+O)
    params['blocks'] = blocks

    # Block-diagonal style-modulation weight: every block's two modulate()
    # linears computed by ONE matmul of shape (B, nblocks*D) @ (nblocks*D, S).
    D = dim_latent
    widths = [c.shape[1] for c in mod_cols]
    mod_bd = jnp.zeros((num_depth * D, sum(widths)), jnp.float32)
    off = 0
    for i, c in enumerate(mod_cols):
        mod_bd = mod_bd.at[i * D:(i + 1) * D, off:off + widths[i]].set(c)
        off += widths[i]
    params['mod_bd'] = mod_bd
    return params


# ----------------------------------------------------------------------------
# Forward pass
# ----------------------------------------------------------------------------

def generator_forward(params, styles_list, small_size, noise_key):
    # mapping network: one fused kernel per latent
    mapped = [pallas_mapping(z, params['map_w']) for z in styles_list]
    blocks = params['blocks']
    nblocks = len(blocks)
    while len(mapped) < nblocks:
        mapped.append(mapped[-1])
    styles = jnp.stack(mapped, axis=1)                                   # (B, nblocks, D)
    B, _, D = styles.shape

    # all per-block style modulations in one matmul
    sm_all = pallas_matmul2d(styles.reshape(B, nblocks * D), params['mod_bd'])

    C0 = blocks[0]['conv1_wT'].shape[1] // 16
    x = jnp.ones((C0, B, 2, 2), jnp.float32)                             # const input
    H = 2
    nkeys = jax.random.split(noise_key, 2 * nblocks)

    prev_rows, prev_sig = None, None
    small_sig, small_H = None, None
    off = 0
    pad1 = ((0, 0), (0, 0), (1, 1), (1, 1))

    for i, bp in enumerate(blocks):
        I = bp['conv1_wT'].shape[1] // 16
        O = bp['conv1_wT'].shape[0]
        sm1 = sm_all[:, off:off + I]                                     # (B, I)
        sm2 = sm_all[:, off + I:off + I + O]                             # (B, O)
        off += I + O

        # conv1: modulated transposed conv 4x4 s2 p1 (H -> 2H).
        # Style scale folded into the input (per channel) before im2col.
        xs = x * sm1.T[:, :, None, None]
        d = jnp.zeros((I, B, 2 * H - 1, 2 * H - 1), jnp.float32)
        d = d.at[:, :, ::2, ::2].set(xs)                                 # stride-2 zero dilation
        dpad = jnp.pad(d, ((0, 0), (0, 0), (2, 2), (2, 2)))              # pad = k-1-p = 2
        H = 2 * H
        N = H * H
        pT = extract_patches_cf(dpad, 4, H, H).reshape(16 * I, B * N)
        noise1 = jax.random.normal(nkeys[2 * i], (1, B * N), jnp.float32)
        y1 = pallas_conv_noise_pixnorm(pT, bp['conv1_wT'], bp['demod1'],
                                       noise1, bp['noise1_w'])           # (O, B*N)

        # FReLU 1
        p9 = extract_patches_cf(jnp.pad(y1.reshape(O, B, H, H), pad1), 3, H, H)
        z1 = pallas_frelu(y1, p9, bp['frelu1_w'])                        # (O, B*N)

        # conv2: modulated conv 3x3 s1 p1 (style pre-scale in glue, then im2col)
        z1s = z1.reshape(O, B, H, H) * sm2.T[:, :, None, None]
        p2 = extract_patches_cf(jnp.pad(z1s, pad1), 3, H, H).reshape(9 * O, B * N)
        noise2 = jax.random.normal(nkeys[2 * i + 1], (1, B * N), jnp.float32)
        y2 = pallas_conv_noise_pixnorm(p2, bp['conv2_wT'], bp['demod2'],
                                       noise2, bp['noise2_w'])           # (O, B*N)

        # FReLU 2 + toRGB (fused)
        p9b = extract_patches_cf(jnp.pad(y2.reshape(O, B, H, H), pad1), 3, H, H)
        z2, rgbT = pallas_frelu_torgb(y2, p9b, bp['frelu2_w'], bp['rgb_wT'])
        rgb_rows = rgbT.reshape(-1, N)                                   # (3*B, N)

        # skip accumulation: upsample prev RGB, add, fused sigmoid
        if prev_rows is not None:
            M1 = bilinear_matrix(H // 2, H)
            m2t = jnp.asarray(np.kron(M1, M1).T)                         # (Nin, Nout)
            rgb_rows, rgb_sig = pallas_upsample_add_sig(prev_rows, m2t, rgb_rows)
        else:
            rgb_sig = None
        prev_rows, prev_sig = rgb_rows, rgb_sig
        if H == small_size:
            small_sig = rgb_sig if rgb_sig is not None else pallas_sigmoid(rgb_rows)
            small_H = H
        x = z2.reshape(O, B, H, H)

    final_sig = prev_sig if prev_sig is not None else pallas_sigmoid(prev_rows)
    if small_sig is None:
        # TODO(synk): reference raises if no intermediate matches small_size; fall back to final.
        small_sig, small_H = final_sig, H

    def rows_to_nchw(rows, side):
        n_ch = rows.shape[0] // B
        return jnp.transpose(rows.reshape(n_ch, B, side, side), (1, 0, 2, 3))

    return rows_to_nchw(final_sig, H), rows_to_nchw(small_sig, small_H), styles


# ----------------------------------------------------------------------------
# Main
# ----------------------------------------------------------------------------

if __name__ == "__main__":
    key = jax.random.PRNGKey(0)
    kp, kz, kn = jax.random.split(key, 3)

    num_depth = 3
    num_fmap = lambda i: 32 // (2 ** i)        # 32, 16, 8, 4
    num_mapping = 2
    small_size = 8
    n_channel = 3
    dim_latent = num_fmap(0)                   # 32
    B = 2

    params = init_params(kp, num_depth, num_fmap, num_mapping, n_channel, dim_latent)
    z = jax.random.normal(kz, (B, dim_latent), jnp.float32)

    fwd = jax.jit(lambda p, zs, k: generator_forward(p, zs, small_size, k))
    rgb, rgb_small, styles = fwd(params, [z], kn)
    jax.block_until_ready((rgb, rgb_small, styles))

    assert rgb.shape == (B, n_channel, 16, 16)
    assert rgb_small.shape == (B, n_channel, small_size, small_size)
    assert styles.shape == (B, num_depth, dim_latent)
    assert bool(jnp.all(jnp.isfinite(rgb))) and bool(jnp.all(jnp.isfinite(rgb_small)))
    assert bool(jnp.all((rgb >= 0.0) & (rgb <= 1.0)))
    print("KERNEL_OK")
</pallas_src>

<mosaic_0001>
module attributes {stable_mosaic.version = 11 : i64} {
  func.func @mapping_kernel(%arg0: memref<2x32xf32, #tpu.memory_space<vmem>>, %arg1: memref<2x32x32xf32, #tpu.memory_space<vmem>>, %arg2: memref<2x32xf32, #tpu.memory_space<vmem>>) attributes {dimension_semantics = [], scalar_prefetch = 0 : i64, scratch_operands = 0 : i64, tpu.core_type = #tpu.core_type<tc>} {
    %c0 = arith.constant 0 : index
    %c0_0 = arith.constant 0 : index
    %0 = vector.load %arg0[%c0, %c0_0] : memref<2x32xf32, #tpu.memory_space<vmem>>, vector<2x32xf32>
    %c0_1 = arith.constant 0 : index
    %c0_2 = arith.constant 0 : index
    %c0_3 = arith.constant 0 : index
    %1 = vector.load %arg1[%c0_1, %c0_2, %c0_3] : memref<2x32x32xf32, #tpu.memory_space<vmem>>, vector<1x32x32xf32>
    %2 = vector.shape_cast %1 : vector<1x32x32xf32> to vector<32x32xf32>
    %cst = arith.constant dense<0.000000e+00> : vector<2x32xf32>
    %3 = tpu.matmul %0, %2, %cst {dimension_numbers = #tpu.dot_dimension_numbers<[1], [0], [0], [1], [0, 0, 1, 1], [], []>} : vector<2x32xf32>, vector<32x32xf32>, vector<2x32xf32> -> vector<2x32xf32>
    %4 = arith.mulf %3, %3 : vector<2x32xf32>
    %cst_4 = arith.constant dense<0.000000e+00> : vector<2xf32>
    %5 = vector.multi_reduction <add>, %4, %cst_4 [1] : vector<2x32xf32> to vector<2xf32>
    %6 = vector.shape_cast %5 : vector<2xf32> to vector<2x1xf32>
    %cst_5 = arith.constant 3.200000e+01 : f32
    %7 = vector.broadcast %cst_5 : f32 to vector<2x1xf32>
    %8 = arith.divf %6, %7 : vector<2x1xf32>
    %cst_6 = arith.constant 9.99999993E-9 : f32
    %9 = vector.broadcast %cst_6 : f32 to vector<2x1xf32>
    %10 = arith.addf %8, %9 : vector<2x1xf32>
    %11 = math.rsqrt %10 : vector<2x1xf32>
    %12 = vector.broadcast %11 : vector<2x1xf32> to vector<2x32xf32>
    %13 = arith.mulf %3, %12 : vector<2x32xf32>
    %cst_7 = arith.constant 0.000000e+00 : f32
    %14 = vector.broadcast %cst_7 : f32 to vector<2x32xf32>
    %15 = arith.maximumf %13, %14 : vector<2x32xf32>
    %16 = vector.broadcast %cst_7 : f32 to vector<2x32xf32>
    %17 = arith.subf %13, %16 : vector<2x32xf32>
    %18 = arith.cmpf one, %17, %17 : vector<2x32xf32>
    %19 = vector.broadcast %cst_7 : f32 to vector<2x32xf32>
    %20 = arith.addf %13, %19 : vector<2x32xf32>
    %21 = math.absf %17 : vector<2x32xf32>
    %cst_8 = arith.constant 0.000000e+00 : f32
    %22 = vector.broadcast %cst_8 : f32 to vector<2x32xf32>
    %23 = arith.subf %22, %21 : vector<2x32xf32>
    %24 = math.exp %23 : vector<2x32xf32>
    %25 = math.log1p %24 : vector<2x32xf32>
    %26 = arith.addf %15, %25 : vector<2x32xf32>
    %27 = arith.select %18, %20, %26 : vector<2x32xi1>, vector<2x32xf32>
    %28 = math.tanh %27 : vector<2x32xf32>
    %29 = arith.mulf %13, %28 : vector<2x32xf32>
    %c1 = arith.constant 1 : index
    %c0_9 = arith.constant 0 : index
    %c0_10 = arith.constant 0 : index
    %30 = vector.load %arg1[%c1, %c0_9, %c0_10] : memref<2x32x32xf32, #tpu.memory_space<vmem>>, vector<1x32x32xf32>
    %31 = vector.shape_cast %30 : vector<1x32x32xf32> to vector<32x32xf32>
    %cst_11 = arith.constant dense<0.000000e+00> : vector<2x32xf32>
    %32 = tpu.matmul %29, %31, %cst_11 {dimension_numbers = #tpu.dot_dimension_numbers<[1], [0], [0], [1], [0, 0, 1, 1], [], []>} : vector<2x32xf32>, vector<32x32xf32>, vector<2x32xf32> -> vector<2x32xf32>
    %33 = arith.mulf %32, %32 : vector<2x32xf32>
    %cst_12 = arith.constant dense<0.000000e+00> : vector<2xf32>
    %34 = vector.multi_reduction <add>, %33, %cst_12 [1] : vector<2x32xf32> to vector<2xf32>
    %35 = vector.shape_cast %34 : vector<2xf32> to vector<2x1xf32>
    %cst_13 = arith.constant 3.200000e+01 : f32
    %36 = vector.broadcast %cst_13 : f32 to vector<2x1xf32>
    %37 = arith.divf %35, %36 : vector<2x1xf32>
    %cst_14 = arith.constant 9.99999993E-9 : f32
    %38 = vector.broadcast %cst_14 : f32 to vector<2x1xf32>
    %39 = arith.addf %37, %38 : vector<2x1xf32>
    %40 = math.rsqrt %39 : vector<2x1xf32>
    %41 = vector.broadcast %40 : vector<2x1xf32> to vector<2x32xf32>
    %42 = arith.mulf %32, %41 : vector<2x32xf32>
    %cst_15 = arith.constant 0.000000e+00 : f32
    %43 = vector.broadcast %cst_15 : f32 to vector<2x32xf32>
    %44 = arith.maximumf %42, %43 : vector<2x32xf32>
    %45 = vector.broadcast %cst_15 : f32 to vector<2x32xf32>
    %46 = arith.subf %42, %45 : vector<2x32xf32>
    %47 = arith.cmpf one, %46, %46 : vector<2x32xf32>
    %48 = vector.broadcast %cst_15 : f32 to vector<2x32xf32>
    %49 = arith.addf %42, %48 : vector<2x32xf32>
    %50 = math.absf %46 : vector<2x32xf32>
    %cst_16 = arith.constant 0.000000e+00 : f32
    %51 = vector.broadcast %cst_16 : f32 to vector<2x32xf32>
    %52 = arith.subf %51, %50 : vector<2x32xf32>
    %53 = math.exp %52 : vector<2x32xf32>
    %54 = math.log1p %53 : vector<2x32xf32>
    %55 = arith.addf %44, %54 : vector<2x32xf32>
    %56 = arith.select %47, %49, %55 : vector<2x32xi1>, vector<2x32xf32>
    %57 = math.tanh %56 : vector<2x32xf32>
    %58 = arith.mulf %42, %57 : vector<2x32xf32>
    %c0_17 = arith.constant 0 : index
    %c0_18 = arith.constant 0 : index
    %59 = vector.load %arg2[%c0_17, %c0_18] : memref<2x32xf32, #tpu.memory_space<vmem>>, vector<2x32xf32>
    tpu.vector_store %arg2[%c0_17, %c0_18], %58 {strides = array<i32>} : memref<2x32xf32, #tpu.memory_space<vmem>>, vector<2x32xf32>,
    return
  }
}

module attributes {stable_mosaic.version = 11 : i64} {
  func.func @matmul2d_kernel(%arg0: memref<2x96xf32, #tpu.memory_space<vmem>>, %arg1: memref<96x84xf32, #tpu.memory_space<vmem>>, %arg2: memref<2x84xf32, #tpu.memory_space<vmem>>) attributes {dimension_semantics = [], scalar_prefetch = 0 : i64, scratch_operands = 0 : i64, tpu.core_type = #tpu.core_type<tc>} {
    %c0 = arith.constant 0 : index
    %c0_0 = arith.constant 0 : index
    %0 = vector.load %arg0[%c0, %c0_0] : memref<2x96xf32, #tpu.memory_space<vmem>>, vector<2x96xf32>
    %c0_1 = arith.constant 0 : index
    %c0_2 = arith.constant 0 : index
    %1 = vector.load %arg1[%c0_1, %c0_2] : memref<96x84xf32, #tpu.memory_space<vmem>>, vector<96x84xf32>
    %cst = arith.constant dense<0.000000e+00> : vector<2x84xf32>
    %2 = tpu.matmul %0, %1, %cst {dimension_numbers = #tpu.dot_dimension_numbers<[1], [0], [0], [1], [0, 0, 1, 1], [], []>} : vector<2x96xf32>, vector<96x84xf32>, vector<2x84xf32> -> vector<2x84xf32>
    %c0_3 = arith.constant 0 : index
    %c0_4 = arith.constant 0 : index
    %3 = vector.load %arg2[%c0_3, %c0_4] : memref<2x84xf32, #tpu.memory_space<vmem>>, vector<2x84xf32>
    tpu.vector_store %arg2[%c0_3, %c0_4], %2 {strides = array<i32>} : memref<2x84xf32, #tpu.memory_space<vmem>>, vector<2x84xf32>,
    return
  }
}

module attributes {stable_mosaic.version = 11 : i64} {
  func.func @conv_noise_pixnorm_kernel(%arg0: memref<512x32xf32, #tpu.memory_space<vmem>>, %arg1: memref<16x512xf32, #tpu.memory_space<vmem>>, %arg2: memref<16x1xf32, #tpu.memory_space<vmem>>, %arg3: memref<1x32xf32, #tpu.memory_space<vmem>>, %arg4: memref<1x1xf32, #tpu.memory_space<vmem>>, %arg5: memref<16x32xf32, #tpu.memory_space<vmem>>) attributes {dimension_semantics = [], scalar_prefetch = 0 : i64, scratch_operands = 0 : i64, tpu.core_type = #tpu.core_type<tc>} {
    %c0 = arith.constant 0 : index
    %c0_0 = arith.constant 0 : index
    %0 = vector.load %arg1[%c0, %c0_0] : memref<16x512xf32, #tpu.memory_space<vmem>>, vector<16x512xf32>
    %c0_1 = arith.constant 0 : index
    %c0_2 = arith.constant 0 : index
    %1 = vector.load %arg0[%c0_1, %c0_2] : memref<512x32xf32, #tpu.memory_space<vmem>>, vector<512x32xf32>
    %cst = arith.constant dense<0.000000e+00> : vector<16x32xf32>
    %2 = tpu.matmul %0, %1, %cst {dimension_numbers = #tpu.dot_dimension_numbers<[1], [0], [0], [1], [0, 0, 1, 1], [], []>} : vector<16x512xf32>, vector<512x32xf32>, vector<16x32xf32> -> vector<16x32xf32>
    %c0_3 = arith.constant 0 : index
    %c0_4 = arith.constant 0 : index
    %3 = vector.load %arg2[%c0_3, %c0_4] : memref<16x1xf32, #tpu.memory_space<vmem>>, vector<16x1xf32>
    %4 = vector.broadcast %3 : vector<16x1xf32> to vector<16x32xf32>
    %5 = arith.mulf %2, %4 : vector<16x32xf32>
    %c0_5 = arith.constant 0 : index
    %c0_6 = arith.constant 0 : index
    %6 = vector.load %arg4[%c0_5, %c0_6] : memref<1x1xf32, #tpu.memory_space<vmem>>, vector<1x1xf32>
    %c0_7 = arith.constant 0 : index
    %c0_8 = arith.constant 0 : index
    %7 = vector.load %arg3[%c0_7, %c0_8] : memref<1x32xf32, #tpu.memory_space<vmem>>, vector<1x32xf32>
    %8 = vector.broadcast %6 : vector<1x1xf32> to vector<1x32xf32>
    %9 = arith.mulf %8, %7 : vector<1x32xf32>
    %10 = vector.broadcast %9 : vector<1x32xf32> to vector<16x32xf32>
    %11 = arith.addf %5, %10 : vector<16x32xf32>
    %12 = arith.mulf %11, %11 : vector<16x32xf32>
    %cst_9 = arith.constant dense<0.000000e+00> : vector<32xf32>
    %13 = vector.multi_reduction <add>, %12, %cst_9 [0] : vector<16x32xf32> to vector<32xf32>
    %14 = vector.shape_cast %13 : vector<32xf32> to vector<1x32xf32>
    %cst_10 = arith.constant 1.600000e+01 : f32
    %15 = vector.broadcast %cst_10 : f32 to vector<1x32xf32>
    %16 = arith.divf %14, %15 : vector<1x32xf32>
    %cst_11 = arith.constant 9.99999993E-9 : f32
    %17 = vector.broadcast %cst_11 : f32 to vector<1x32xf32>
    %18 = arith.addf %16, %17 : vector<1x32xf32>
    %19 = math.rsqrt %18 : vector<1x32xf32>
    %20 = vector.broadcast %19 : vector<1x32xf32> to vector<16x32xf32>
    %21 = arith.mulf %11, %20 : vector<16x32xf32>
    %c0_12 = arith.constant 0 : index
    %c0_13 = arith.constant 0 : index
    %22 = vector.load %arg5[%c0_12, %c0_13] : memref<16x32xf32, #tpu.memory_space<vmem>>, vector<16x32xf32>
    tpu.vector_store %arg5[%c0_12, %c0_13], %21 {strides = array<i32>} : memref<16x32xf32, #tpu.memory_space<vmem>>, vector<16x32xf32>,
    return
  }
}

module attributes {stable_mosaic.version = 11 : i64} {
  func.func @frelu_kernel(%arg0: memref<16x32xf32, #tpu.memory_space<vmem>>, %arg1: memref<9x16x32xf32, #tpu.memory_space<vmem>>, %arg2: memref<9x16x1xf32, #tpu.memory_space<vmem>>, %arg3: memref<16x32xf32, #tpu.memory_space<vmem>>) attributes {dimension_semantics = [], scalar_prefetch = 0 : i64, scratch_operands = 0 : i64, tpu.core_type = #tpu.core_type<tc>} {
    %c0 = arith.constant 0 : index
    %c0_0 = arith.constant 0 : index
    %0 = vector.load %arg0[%c0, %c0_0] : memref<16x32xf32, #tpu.memory_space<vmem>>, vector<16x32xf32>
    %c0_1 = arith.constant 0 : index
    %c0_2 = arith.constant 0 : index
    %c0_3 = arith.constant 0 : index
    %1 = vector.load %arg1[%c0_1, %c0_2, %c0_3] : memref<9x16x32xf32, #tpu.memory_space<vmem>>, vector<1x16x32xf32>
    %2 = vector.shape_cast %1 : vector<1x16x32xf32> to vector<16x32xf32>
    %c0_4 = arith.constant 0 : index
    %c0_5 = arith.constant 0 : index
    %c0_6 = arith.constant 0 : index
    %3 = vector.load %arg2[%c0_4, %c0_5, %c0_6] : memref<9x16x1xf32, #tpu.memory_space<vmem>>, vector<1x16x1xf32>
    %4 = vector.shape_cast %3 : vector<1x16x1xf32> to vector<16x1xf32>
    %5 = vector.broadcast %4 : vector<16x1xf32> to vector<16x32xf32>
    %6 = arith.mulf %2, %5 : vector<16x32xf32>
    %c1 = arith.constant 1 : index
    %c0_7 = arith.constant 0 : index
    %c0_8 = arith.constant 0 : index
    %7 = vector.load %arg1[%c1, %c0_7, %c0_8] : memref<9x16x32xf32, #tpu.memory_space<vmem>>, vector<1x16x32xf32>
    %8 = vector.shape_cast %7 : vector<1x16x32xf32> to vector<16x32xf32>
    %c1_9 = arith.constant 1 : index
    %c0_10 = arith.constant 0 : index
    %c0_11 = arith.constant 0 : index
    %9 = vector.load %arg2[%c1_9, %c0_10, %c0_11] : memref<9x16x1xf32, #tpu.memory_space<vmem>>, vector<1x16x1xf32>
    %10 = vector.shape_cast %9 : vector<1x16x1xf32> to vector<16x1xf32>
    %11 = vector.broadcast %10 : vector<16x1xf32> to vector<16x32xf32>
    %12 = arith.mulf %8, %11 : vector<16x32xf32>
    %13 = arith.addf %6, %12 : vector<16x32xf32>
    %c2 = arith.constant 2 : index
    %c0_12 = arith.constant 0 : index
    %c0_13 = arith.constant 0 : index
    %14 = vector.load %arg1[%c2, %c0_12, %c0_13] : memref<9x16x32xf32, #tpu.memory_space<vmem>>, vector<1x16x32xf32>
    %15 = vector.shape_cast %14 : vector<1x16x32xf32> to vector<16x32xf32>
    %c2_14 = arith.constant 2 : index
    %c0_15 = arith.constant 0 : index
    %c0_16 = arith.constant 0 : index
    %16 = vector.load %arg2[%c2_14, %c0_15, %c0_16] : memref<9x16x1xf32, #tpu.memory_space<vmem>>, vector<1x16x1xf32>
    %17 = vector.shape_cast %16 : vector<1x16x1xf32> to vector<16x1xf32>
    %18 = vector.broadcast %17 : vector<16x1xf32> to vector<16x32xf32>
    %19 = arith.mulf %15, %18 : vector<16x32xf32>
    %20 = arith.addf %13, %19 : vector<16x32xf32>
    %c3 = arith.constant 3 : index
    %c0_17 = arith.constant 0 : index
    %c0_18 = arith.constant 0 : index
    %21 = vector.load %arg1[%c3, %c0_17, %c0_18] : memref<9x16x32xf32, #tpu.memory_space<vmem>>, vector<1x16x32xf32>
    %22 = vector.shape_cast %21 : vector<1x16x32xf32> to vector<16x32xf32>
    %c3_19 = arith.constant 3 : index
    %c0_20 = arith.constant 0 : index
    %c0_21 = arith.constant 0 : index
    %23 = vector.load %arg2[%c3_19, %c0_20, %c0_21] : memref<9x16x1xf32, #tpu.memory_space<vmem>>, vector<1x16x1xf32>
    %24 = vector.shape_cast %23 : vector<1x16x1xf32> to vector<16x1xf32>
    %25 = vector.broadcast %24 : vector<16x1xf32> to vector<16x32xf32>
    %26 = arith.mulf %22, %25 : vector<16x32xf32>
    %27 = arith.addf %20, %26 : vector<16x32xf32>
    %c4 = arith.constant 4 : index
    %c0_22 = arith.constant 0 : index
    %c0_23 = arith.constant 0 : index
    %28 = vector.load %arg1[%c4, %c0_22, %c0_23] : memref<9x16x32xf32, #tpu.memory_space<vmem>>, vector<1x16x32xf32>
    %29 = vector.shape_cast %28 : vector<1x16x32xf32> to vector<16x32xf32>
    %c4_24 = arith.constant 4 : index
    %c0_25 = arith.constant 0 : index
    %c0_26 = arith.constant 0 : index
    %30 = vector.load %arg2[%c4_24, %c0_25, %c0_26] : memref<9x16x1xf32, #tpu.memory_space<vmem>>, vector<1x16x1xf32>
    %31 = vector.shape_cast %30 : vector<1x16x1xf32> to vector<16x1xf32>
    %32 = vector.broadcast %31 : vector<16x1xf32> to vector<16x32xf32>
    %33 = arith.mulf %29, %32 : vector<16x32xf32>
    %34 = arith.addf %27, %33 : vector<16x32xf32>
    %c5 = arith.constant 5 : index
    %c0_27 = arith.constant 0 : index
    %c0_28 = arith.constant 0 : index
    %35 = vector.load %arg1[%c5, %c0_27, %c0_28] : memref<9x16x32xf32, #tpu.memory_space<vmem>>, vector<1x16x32xf32>
    %36 = vector.shape_cast %35 : vector<1x16x32xf32> to vector<16x32xf32>
    %c5_29 = arith.constant 5 : index
    %c0_30 = arith.constant 0 : index
    %c0_31 = arith.constant 0 : index
    %37 = vector.load %arg2[%c5_29, %c0_30, %c0_31] : memref<9x16x1xf32, #tpu.memory_space<vmem>>, vector<1x16x1xf32>
    %38 = vector.shape_cast %37 : vector<1x16x1xf32> to vector<16x1xf32>
    %39 = vector.broadcast %38 : vector<16x1xf32> to vector<16x32xf32>
    %40 = arith.mulf %36, %39 : vector<16x32xf32>
    %41 = arith.addf %34, %40 : vector<16x32xf32>
    %c6 = arith.constant 6 : index
    %c0_32 = arith.constant 0 : index
    %c0_33 = arith.constant 0 : index
    %42 = vector.load %arg1[%c6, %c0_32, %c0_33] : memref<9x16x32xf32, #tpu.memory_space<vmem>>, vector<1x16x32xf32>
    %43 = vector.shape_cast %42 : vector<1x16x32xf32> to vector<16x32xf32>
    %c6_34 = arith.constant 6 : index
    %c0_35 = arith.constant 0 : index
    %c0_36 = arith.constant 0 : index
    %44 = vector.load %arg2[%c6_34, %c0_35, %c0_36] : memref<9x16x1xf32, #tpu.memory_space<vmem>>, vector<1x16x1xf32>
    %45 = vector.shape_cast %44 : vector<1x16x1xf32> to vector<16x1xf32>
    %46 = vector.broadcast %45 : vector<16x1xf32> to vector<16x32xf32>
    %47 = arith.mulf %43, %46 : vector<16x32xf32>
    %48 = arith.addf %41, %47 : vector<16x32xf32>
    %c7 = arith.constant 7 : index
    %c0_37 = arith.constant 0 : index
    %c0_38 = arith.constant 0 : index
    %49 = vector.load %arg1[%c7, %c0_37, %c0_38] : memref<9x16x32xf32, #tpu.memory_space<vmem>>, vector<1x16x32xf32>
    %50 = vector.shape_cast %49 : vector<1x16x32xf32> to vector<16x32xf32>
    %c7_39 = arith.constant 7 : index
    %c0_40 = arith.constant 0 : index
    %c0_41 = arith.constant 0 : index
    %51 = vector.load %arg2[%c7_39, %c0_40, %c0_41] : memref<9x16x1xf32, #tpu.memory_space<vmem>>, vector<1x16x1xf32>
    %52 = vector.shape_cast %51 : vector<1x16x1xf32> to vector<16x1xf32>
    %53 = vector.broadcast %52 : vector<16x1xf32> to vector<16x32xf32>
    %54 = arith.mulf %50, %53 : vector<16x32xf32>
    %55 = arith.addf %48, %54 : vector<16x32xf32>
    %c8 = arith.constant 8 : index
    %c0_42 = arith.constant 0 : index
    %c0_43 = arith.constant 0 : index
    %56 = vector.load %arg1[%c8, %c0_42, %c0_43] : memref<9x16x32xf32, #tpu.memory_space<vmem>>, vector<1x16x32xf32>
    %57 = vector.shape_cast %56 : vector<1x16x32xf32> to vector<16x32xf32>
    %c8_44 = arith.constant 8 : index
    %c0_45 = arith.constant 0 : index
    %c0_46 = arith.constant 0 : index
    %58 = vector.load %arg2[%c8_44, %c0_45, %c0_46] : memref<9x16x1xf32, #tpu.memory_space<vmem>>, vector<1x16x1xf32>
    %59 = vector.shape_cast %58 : vector<1x16x1xf32> to vector<16x1xf32>
    %60 = vector.broadcast %59 : vector<16x1xf32> to vector<16x32xf32>
    %61 = arith.mulf %57, %60 : vector<16x32xf32>
    %62 = arith.addf %55, %61 : vector<16x32xf32>
    %cst = arith.constant dense<0.000000e+00> : vector<16xf32>
    %63 = vector.multi_reduction <add>, %62, %cst [1] : vector<16x32xf32> to vector<16xf32>
    %64 = vector.shape_cast %63 : vector<16xf32> to vector<16x1xf32>
    %cst_47 = arith.constant 3.200000e+01 : f32
    %65 = vector.broadcast %cst_47 : f32 to vector<16x1xf32>
    %66 = arith.divf %64, %65 : vector<16x1xf32>
    %67 = vector.broadcast %66 : vector<16x1xf32> to vector<16x32xf32>
    %68 = arith.subf %62, %67 : vector<16x32xf32>
    %69 = vector.broadcast %66 : vector<16x1xf32> to vector<16x32xf32>
    %70 = arith.subf %62, %69 : vector<16x32xf32>
    %71 = arith.mulf %68, %70 : vector<16x32xf32>
    %cst_48 = arith.constant dense<0.000000e+00> : vector<16xf32>
    %72 = vector.multi_reduction <add>, %71, %cst_48 [1] : vector<16x32xf32> to vector<16xf32>
    %73 = vector.shape_cast %72 : vector<16xf32> to vector<16x1xf32>
    %cst_49 = arith.constant 3.200000e+01 : f32
    %74 = vector.broadcast %cst_49 : f32 to vector<16x1xf32>
    %75 = arith.divf %73, %74 : vector<16x1xf32>
    %76 = vector.broadcast %66 : vector<16x1xf32> to vector<16x32xf32>
    %77 = arith.subf %62, %76 : vector<16x32xf32>
    %cst_50 = arith.constant 9.99999974E-6 : f32
    %78 = vector.broadcast %cst_50 : f32 to vector<16x1xf32>
    %79 = arith.addf %75, %78 : vector<16x1xf32>
    %80 = math.rsqrt %79 : vector<16x1xf32>
    %81 = vector.broadcast %80 : vector<16x1xf32> to vector<16x32xf32>
    %82 = arith.mulf %77, %81 : vector<16x32xf32>
    %83 = arith.maximumf %0, %82 : vector<16x32xf32>
    %c0_51 = arith.constant 0 : index
    %c0_52 = arith.constant 0 : index
    %84 = vector.load %arg3[%c0_51, %c0_52] : memref<16x32xf32, #tpu.memory_space<vmem>>, vector<16x32xf32>
    tpu.vector_store %arg3[%c0_51, %c0_52], %83 {strides = array<i32>} : memref<16x32xf32, #tpu.memory_space<vmem>>, vector<16x32xf32>,
    return
  }
}

module attributes {stable_mosaic.version = 11 : i64} {
  func.func @conv_noise_pixnorm_kernel(%arg0: memref<144x32xf32, #tpu.memory_space<vmem>>, %arg1: memref<16x144xf32, #tpu.memory_space<vmem>>, %arg2: memref<16x1xf32, #tpu.memory_space<vmem>>, %arg3: memref<1x32xf32, #tpu.memory_space<vmem>>, %arg4: memref<1x1xf32, #tpu.memory_space<vmem>>, %arg5: memref<16x32xf32, #tpu.memory_space<vmem>>) attributes {dimension_semantics = [], scalar_prefetch = 0 : i64, scratch_operands = 0 : i64, tpu.core_type = #tpu.core_type<tc>} {
    %c0 = arith.constant 0 : index
    %c0_0 = arith.constant 0 : index
    %0 = vector.load %arg1[%c0, %c0_0] : memref<16x144xf32, #tpu.memory_space<vmem>>, vector<16x144xf32>
    %c0_1 = arith.constant 0 : index
    %c0_2 = arith.constant 0 : index
    %1 = vector.load %arg0[%c0_1, %c0_2] : memref<144x32xf32, #tpu.memory_space<vmem>>, vector<144x32xf32>
    %cst = arith.constant dense<0.000000e+00> : vector<16x32xf32>
    %2 = tpu.matmul %0, %1, %cst {dimension_numbers = #tpu.dot_dimension_numbers<[1], [0], [0], [1], [0, 0, 1, 1], [], []>} : vector<16x144xf32>, vector<144x32xf32>, vector<16x32xf32> -> vector<16x32xf32>
    %c0_3 = arith.constant 0 : index
    %c0_4 = arith.constant 0 : index
    %3 = vector.load %arg2[%c0_3, %c0_4] : memref<16x1xf32, #tpu.memory_space<vmem>>, vector<16x1xf32>
    %4 = vector.broadcast %3 : vector<16x1xf32> to vector<16x32xf32>
    %5 = arith.mulf %2, %4 : vector<16x32xf32>
    %c0_5 = arith.constant 0 : index
    %c0_6 = arith.constant 0 : index
    %6 = vector.load %arg4[%c0_5, %c0_6] : memref<1x1xf32, #tpu.memory_space<vmem>>, vector<1x1xf32>
    %c0_7 = arith.constant 0 : index
    %c0_8 = arith.constant 0 : index
    %7 = vector.load %arg3[%c0_7, %c0_8] : memref<1x32xf32, #tpu.memory_space<vmem>>, vector<1x32xf32>
    %8 = vector.broadcast %6 : vector<1x1xf32> to vector<1x32xf32>
    %9 = arith.mulf %8, %7 : vector<1x32xf32>
    %10 = vector.broadcast %9 : vector<1x32xf32> to vector<16x32xf32>
    %11 = arith.addf %5, %10 : vector<16x32xf32>
    %12 = arith.mulf %11, %11 : vector<16x32xf32>
    %cst_9 = arith.constant dense<0.000000e+00> : vector<32xf32>
    %13 = vector.multi_reduction <add>, %12, %cst_9 [0] : vector<16x32xf32> to vector<32xf32>
    %14 = vector.shape_cast %13 : vector<32xf32> to vector<1x32xf32>
    %cst_10 = arith.constant 1.600000e+01 : f32
    %15 = vector.broadcast %cst_10 : f32 to vector<1x32xf32>
    %16 = arith.divf %14, %15 : vector<1x32xf32>
    %cst_11 = arith.constant 9.99999993E-9 : f32
    %17 = vector.broadcast %cst_11 : f32 to vector<1x32xf32>
    %18 = arith.addf %16, %17 : vector<1x32xf32>
    %19 = math.rsqrt %18 : vector<1x32xf32>
    %20 = vector.broadcast %19 : vector<1x32xf32> to vector<16x32xf32>
    %21 = arith.mulf %11, %20 : vector<16x32xf32>
    %c0_12 = arith.constant 0 : index
    %c0_13 = arith.constant 0 : index
    %22 = vector.load %arg5[%c0_12, %c0_13] : memref<16x32xf32, #tpu.memory_space<vmem>>, vector<16x32xf32>
    tpu.vector_store %arg5[%c0_12, %c0_13], %21 {strides = array<i32>} : memref<16x32xf32, #tpu.memory_space<vmem>>, vector<16x32xf32>,
    return
  }
}

module attributes {stable_mosaic.version = 11 : i64} {
  func.func @frelu_torgb_kernel(%arg0: memref<16x32xf32, #tpu.memory_space<vmem>>, %arg1: memref<9x16x32xf32, #tpu.memory_space<vmem>>, %arg2: memref<9x16x1xf32, #tpu.memory_space<vmem>>, %arg3: memref<3x16xf32, #tpu.memory_space<vmem>>, %arg4: memref<16x32xf32, #tpu.memory_space<vmem>>, %arg5: memref<3x32xf32, #tpu.memory_space<vmem>>) attributes {dimension_semantics = [], scalar_prefetch = 0 : i64, scratch_operands = 0 : i64, tpu.core_type = #tpu.core_type<tc>} {
    %c0 = arith.constant 0 : index
    %c0_0 = arith.constant 0 : index
    %0 = vector.load %arg0[%c0, %c0_0] : memref<16x32xf32, #tpu.memory_space<vmem>>, vector<16x32xf32>
    %c0_1 = arith.constant 0 : index
    %c0_2 = arith.constant 0 : index
    %c0_3 = arith.constant 0 : index
    %1 = vector.load %arg1[%c0_1, %c0_2, %c0_3] : memref<9x16x32xf32, #tpu.memory_space<vmem>>, vector<1x16x32xf32>
    %2 = vector.shape_cast %1 : vector<1x16x32xf32> to vector<16x32xf32>
    %c0_4 = arith.constant 0 : index
    %c0_5 = arith.constant 0 : index
    %c0_6 = arith.constant 0 : index
    %3 = vector.load %arg2[%c0_4, %c0_5, %c0_6] : memref<9x16x1xf32, #tpu.memory_space<vmem>>, vector<1x16x1xf32>
    %4 = vector.shape_cast %3 : vector<1x16x1xf32> to vector<16x1xf32>
    %5 = vector.broadcast %4 : vector<16x1xf32> to vector<16x32xf32>
    %6 = arith.mulf %2, %5 : vector<16x32xf32>
    %c1 = arith.constant 1 : index
    %c0_7 = arith.constant 0 : index
    %c0_8 = arith.constant 0 : index
    %7 = vector.load %arg1[%c1, %c0_7, %c0_8] : memref<9x16x32xf32, #tpu.memory_space<vmem>>, vector<1x16x32xf32>
    %8 = vector.shape_cast %7 : vector<1x16x32xf32> to vector<16x32xf32>
    %c1_9 = arith.constant 1 : index
    %c0_10 = arith.constant 0 : index
    %c0_11 = arith.constant 0 : index
    %9 = vector.load %arg2[%c1_9, %c0_10, %c0_11] : memref<9x16x1xf32, #tpu.memory_space<vmem>>, vector<1x16x1xf32>
    %10 = vector.shape_cast %9 : vector<1x16x1xf32> to vector<16x1xf32>
    %11 = vector.broadcast %10 : vector<16x1xf32> to vector<16x32xf32>
    %12 = arith.mulf %8, %11 : vector<16x32xf32>
    %13 = arith.addf %6, %12 : vector<16x32xf32>
    %c2 = arith.constant 2 : index
    %c0_12 = arith.constant 0 : index
    %c0_13 = arith.constant 0 : index
    %14 = vector.load %arg1[%c2, %c0_12, %c0_13] : memref<9x16x32xf32, #tpu.memory_space<vmem>>, vector<1x16x32xf32>
    %15 = vector.shape_cast %14 : vector<1x16x32xf32> to vector<16x32xf32>
    %c2_14 = arith.constant 2 : index
    %c0_15 = arith.constant 0 : index
    %c0_16 = arith.constant 0 : index
    %16 = vector.load %arg2[%c2_14, %c0_15, %c0_16] : memref<9x16x1xf32, #tpu.memory_space<vmem>>, vector<1x16x1xf32>
    %17 = vector.shape_cast %16 : vector<1x16x1xf32> to vector<16x1xf32>
    %18 = vector.broadcast %17 : vector<16x1xf32> to vector<16x32xf32>
    %19 = arith.mulf %15, %18 : vector<16x32xf32>
    %20 = arith.addf %13, %19 : vector<16x32xf32>
    %c3 = arith.constant 3 : index
    %c0_17 = arith.constant 0 : index
    %c0_18 = arith.constant 0 : index
    %21 = vector.load %arg1[%c3, %c0_17, %c0_18] : memref<9x16x32xf32, #tpu.memory_space<vmem>>, vector<1x16x32xf32>
    %22 = vector.shape_cast %21 : vector<1x16x32xf32> to vector<16x32xf32>
    %c3_19 = arith.constant 3 : index
    %c0_20 = arith.constant 0 : index
    %c0_21 = arith.constant 0 : index
    %23 = vector.load %arg2[%c3_19, %c0_20, %c0_21] : memref<9x16x1xf32, #tpu.memory_space<vmem>>, vector<1x16x1xf32>
    %24 = vector.shape_cast %23 : vector<1x16x1xf32> to vector<16x1xf32>
    %25 = vector.broadcast %24 : vector<16x1xf32> to vector<16x32xf32>
    %26 = arith.mulf %22, %25 : vector<16x32xf32>
    %27 = arith.addf %20, %26 : vector<16x32xf32>
    %c4 = arith.constant 4 : index
    %c0_22 = arith.constant 0 : index
    %c0_23 = arith.constant 0 : index
    %28 = vector.load %arg1[%c4, %c0_22, %c0_23] : memref<9x16x32xf32, #tpu.memory_space<vmem>>, vector<1x16x32xf32>
    %29 = vector.shape_cast %28 : vector<1x16x32xf32> to vector<16x32xf32>
    %c4_24 = arith.constant 4 : index
    %c0_25 = arith.constant 0 : index
    %c0_26 = arith.constant 0 : index
    %30 = vector.load %arg2[%c4_24, %c0_25, %c0_26] : memref<9x16x1xf32, #tpu.memory_space<vmem>>, vector<1x16x1xf32>
    %31 = vector.shape_cast %30 : vector<1x16x1xf32> to vector<16x1xf32>
    %32 = vector.broadcast %31 : vector<16x1xf32> to vector<16x32xf32>
    %33 = arith.mulf %29, %32 : vector<16x32xf32>
    %34 = arith.addf %27, %33 : vector<16x32xf32>
    %c5 = arith.constant 5 : index
    %c0_27 = arith.constant 0 : index
    %c0_28 = arith.constant 0 : index
    %35 = vector.load %arg1[%c5, %c0_27, %c0_28] : memref<9x16x32xf32, #tpu.memory_space<vmem>>, vector<1x16x32xf32>
    %36 = vector.shape_cast %35 : vector<1x16x32xf32> to vector<16x32xf32>
    %c5_29 = arith.constant 5 : index
    %c0_30 = arith.constant 0 : index
    %c0_31 = arith.constant 0 : index
    %37 = vector.load %arg2[%c5_29, %c0_30, %c0_31] : memref<9x16x1xf32, #tpu.memory_space<vmem>>, vector<1x16x1xf32>
    %38 = vector.shape_cast %37 : vector<1x16x1xf32> to vector<16x1xf32>
    %39 = vector.broadcast %38 : vector<16x1xf32> to vector<16x32xf32>
    %40 = arith.mulf %36, %39 : vector<16x32xf32>
    %41 = arith.addf %34, %40 : vector<16x32xf32>
    %c6 = arith.constant 6 : index
    %c0_32 = arith.constant 0 : index
    %c0_33 = arith.constant 0 : index
    %42 = vector.load %arg1[%c6, %c0_32, %c0_33] : memref<9x16x32xf32, #tpu.memory_space<vmem>>, vector<1x16x32xf32>
    %43 = vector.shape_cast %42 : vector<1x16x32xf32> to vector<16x32xf32>
    %c6_34 = arith.constant 6 : index
    %c0_35 = arith.constant 0 : index
    %c0_36 = arith.constant 0 : index
    %44 = vector.load %arg2[%c6_34, %c0_35, %c0_36] : memref<9x16x1xf32, #tpu.memory_space<vmem>>, vector<1x16x1xf32>
    %45 = vector.shape_cast %44 : vector<1x16x1xf32> to vector<16x1xf32>
    %46 = vector.broadcast %45 : vector<16x1xf32> to vector<16x32xf32>
    %47 = arith.mulf %43, %46 : vector<16x32xf32>
    %48 = arith.addf %41, %47 : vector<16x32xf32>
    %c7 = arith.constant 7 : index
    %c0_37 = arith.constant 0 : index
    %c0_38 = arith.constant 0 : index
    %49 = vector.load %arg1[%c7, %c0_37, %c0_38] : memref<9x16x32xf32, #tpu.memory_space<vmem>>, vector<1x16x32xf32>
    %50 = vector.shape_cast %49 : vector<1x16x32xf32> to vector<16x32xf32>
    %c7_39 = arith.constant 7 : index
    %c0_40 = arith.constant 0 : index
    %c0_41 = arith.constant 0 : index
    %51 = vector.load %arg2[%c7_39, %c0_40, %c0_41] : memref<9x16x1xf32, #tpu.memory_space<vmem>>, vector<1x16x1xf32>
    %52 = vector.shape_cast %51 : vector<1x16x1xf32> to vector<16x1xf32>
    %53 = vector.broadcast %52 : vector<16x1xf32> to vector<16x32xf32>
    %54 = arith.mulf %50, %53 : vector<16x32xf32>
    %55 = arith.addf %48, %54 : vector<16x32xf32>
    %c8 = arith.constant 8 : index
    %c0_42 = arith.constant 0 : index
    %c0_43 = arith.constant 0 : index
    %56 = vector.load %arg1[%c8, %c0_42, %c0_43] : memref<9x16x32xf32, #tpu.memory_space<vmem>>, vector<1x16x32xf32>
    %57 = vector.shape_cast %56 : vector<1x16x32xf32> to vector<16x32xf32>
    %c8_44 = arith.constant 8 : index
    %c0_45 = arith.constant 0 : index
    %c0_46 = arith.constant 0 : index
    %58 = vector.load %arg2[%c8_44, %c0_45, %c0_46] : memref<9x16x1xf32, #tpu.memory_space<vmem>>, vector<1x16x1xf32>
    %59 = vector.shape_cast %58 : vector<1x16x1xf32> to vector<16x1xf32>
    %60 = vector.broadcast %59 : vector<16x1xf32> to vector<16x32xf32>
    %61 = arith.mulf %57, %60 : vector<16x32xf32>
    %62 = arith.addf %55, %61 : vector<16x32xf32>
    %cst = arith.constant dense<0.000000e+00> : vector<16xf32>
    %63 = vector.multi_reduction <add>, %62, %cst [1] : vector<16x32xf32> to vector<16xf32>
    %64 = vector.shape_cast %63 : vector<16xf32> to vector<16x1xf32>
    %cst_47 = arith.constant 3.200000e+01 : f32
    %65 = vector.broadcast %cst_47 : f32 to vector<16x1xf32>
    %66 = arith.divf %64, %65 : vector<16x1xf32>
    %67 = vector.broadcast %66 : vector<16x1xf32> to vector<16x32xf32>
    %68 = arith.subf %62, %67 : vector<16x32xf32>
    %69 = vector.broadcast %66 : vector<16x1xf32> to vector<16x32xf32>
    %70 = arith.subf %62, %69 : vector<16x32xf32>
    %71 = arith.mulf %68, %70 : vector<16x32xf32>
    %cst_48 = arith.constant dense<0.000000e+00> : vector<16xf32>
    %72 = vector.multi_reduction <add>, %71, %cst_48 [1] : vector<16x32xf32> to vector<16xf32>
    %73 = vector.shape_cast %72 : vector<16xf32> to vector<16x1xf32>
    %cst_49 = arith.constant 3.200000e+01 : f32
    %74 = vector.broadcast %cst_49 : f32 to vector<16x1xf32>
    %75 = arith.divf %73, %74 : vector<16x1xf32>
    %76 = vector.broadcast %66 : vector<16x1xf32> to vector<16x32xf32>
    %77 = arith.subf %62, %76 : vector<16x32xf32>
    %cst_50 = arith.constant 9.99999974E-6 : f32
    %78 = vector.broadcast %cst_50 : f32 to vector<16x1xf32>
    %79 = arith.addf %75, %78 : vector<16x1xf32>
    %80 = math.rsqrt %79 : vector<16x1xf32>
    %81 = vector.broadcast %80 : vector<16x1xf32> to vector<16x32xf32>
    %82 = arith.mulf %77, %81 : vector<16x32xf32>
    %83 = arith.maximumf %0, %82 : vector<16x32xf32>
    %c0_51 = arith.constant 0 : index
    %c0_52 = arith.constant 0 : index
    %84 = vector.load %arg4[%c0_51, %c0_52] : memref<16x32xf32, #tpu.memory_space<vmem>>, vector<16x32xf32>
    tpu.vector_store %arg4[%c0_51, %c0_52], %83 {strides = array<i32>} : memref<16x32xf32, #tpu.memory_space<vmem>>, vector<16x32xf32>,
    %c0_53 = arith.constant 0 : index
    %c0_54 = arith.constant 0 : index
    %85 = vector.load %arg3[%c0_53, %c0_54] : memref<3x16xf32, #tpu.memory_space<vmem>>, vector<3x16xf32>
    %cst_55 = arith.constant dense<0.000000e+00> : vector<3x32xf32>
    %86 = tpu.matmul %85, %83, %cst_55 {dimension_numbers = #tpu.dot_dimension_numbers<[1], [0], [0], [1], [0, 0, 1, 1], [], []>} : vector<3x16xf32>, vector<16x32xf32>, vector<3x32xf32> -> vector<3x32xf32>
    %c0_56 = arith.constant 0 : index
    %c0_57 = arith.constant 0 : index
    %87 = vector.load %arg5[%c0_56, %c0_57] : memref<3x32xf32, #tpu.memory_space<vmem>>, vector<3x32xf32>
    tpu.vector_store %arg5[%c0_56, %c0_57], %86 {strides = array<i32>} : memref<3x32xf32, #tpu.memory_space<vmem>>, vector<3x32xf32>,
    return
  }
}

module attributes {stable_mosaic.version = 11 : i64} {
  func.func @conv_noise_pixnorm_kernel(%arg0: memref<256x128xf32, #tpu.memory_space<vmem>>, %arg1: memref<8x256xf32, #tpu.memory_space<vmem>>, %arg2: memref<8x1xf32, #tpu.memory_space<vmem>>, %arg3: memref<1x128xf32, #tpu.memory_space<vmem>>, %arg4: memref<1x1xf32, #tpu.memory_space<vmem>>, %arg5: memref<8x128xf32, #tpu.memory_space<vmem>>) attributes {dimension_semantics = [], scalar_prefetch = 0 : i64, scratch_operands = 0 : i64, tpu.core_type = #tpu.core_type<tc>} {
    %c0 = arith.constant 0 : index
    %c0_0 = arith.constant 0 : index
    %0 = vector.load %arg1[%c0, %c0_0] : memref<8x256xf32, #tpu.memory_space<vmem>>, vector<8x256xf32>
    %c0_1 = arith.constant 0 : index
    %c0_2 = arith.constant 0 : index
    %1 = vector.load %arg0[%c0_1, %c0_2] : memref<256x128xf32, #tpu.memory_space<vmem>>, vector<256x128xf32>
    %cst = arith.constant dense<0.000000e+00> : vector<8x128xf32>
    %2 = tpu.matmul %0, %1, %cst {dimension_numbers = #tpu.dot_dimension_numbers<[1], [0], [0], [1], [0, 0, 1, 1], [], []>} : vector<8x256xf32>, vector<256x128xf32>, vector<8x128xf32> -> vector<8x128xf32>
    %c0_3 = arith.constant 0 : index
    %c0_4 = arith.constant 0 : index
    %3 = vector.load %arg2[%c0_3, %c0_4] : memref<8x1xf32, #tpu.memory_space<vmem>>, vector<8x1xf32>
    %4 = vector.broadcast %3 : vector<8x1xf32> to vector<8x128xf32>
    %5 = arith.mulf %2, %4 : vector<8x128xf32>
    %c0_5 = arith.constant 0 : index
    %c0_6 = arith.constant 0 : index
    %6 = vector.load %arg4[%c0_5, %c0_6] : memref<1x1xf32, #tpu.memory_space<vmem>>, vector<1x1xf32>
    %c0_7 = arith.constant 0 : index
    %c0_8 = arith.constant 0 : index
    %7 = vector.load %arg3[%c0_7, %c0_8] : memref<1x128xf32, #tpu.memory_space<vmem>>, vector<1x128xf32>
    %8 = vector.broadcast %6 : vector<1x1xf32> to vector<1x128xf32>
    %9 = arith.mulf %8, %7 : vector<1x128xf32>
    %10 = vector.broadcast %9 : vector<1x128xf32> to vector<8x128xf32>
    %11 = arith.addf %5, %10 : vector<8x128xf32>
    %12 = arith.mulf %11, %11 : vector<8x128xf32>
    %cst_9 = arith.constant dense<0.000000e+00> : vector<128xf32>
    %13 = vector.multi_reduction <add>, %12, %cst_9 [0] : vector<8x128xf32> to vector<128xf32>
    %14 = vector.shape_cast %13 : vector<128xf32> to vector<1x128xf32>
    %cst_10 = arith.constant 8.000000e+00 : f32
    %15 = vector.broadcast %cst_10 : f32 to vector<1x128xf32>
    %16 = arith.divf %14, %15 : vector<1x128xf32>
    %cst_11 = arith.constant 9.99999993E-9 : f32
    %17 = vector.broadcast %cst_11 : f32 to vector<1x128xf32>
    %18 = arith.addf %16, %17 : vector<1x128xf32>
    %19 = math.rsqrt %18 : vector<1x128xf32>
    %20 = vector.broadcast %19 : vector<1x128xf32> to vector<8x128xf32>
    %21 = arith.mulf %11, %20 : vector<8x128xf32>
    %c0_12 = arith.constant 0 : index
    %c0_13 = arith.constant 0 : index
    %22 = vector.load %arg5[%c0_12, %c0_13] : memref<8x128xf32, #tpu.memory_space<vmem>>, vector<8x128xf32>
    tpu.vector_store %arg5[%c0_12, %c0_13], %21 {strides = array<i32>} : memref<8x128xf32, #tpu.memory_space<vmem>>, vector<8x128xf32>,
    return
  }
}

module attributes {stable_mosaic.version = 11 : i64} {
  func.func @frelu_kernel(%arg0: memref<8x128xf32, #tpu.memory_space<vmem>>, %arg1: memref<9x8x128xf32, #tpu.memory_space<vmem>>, %arg2: memref<9x8x1xf32, #tpu.memory_space<vmem>>, %arg3: memref<8x128xf32, #tpu.memory_space<vmem>>) attributes {dimension_semantics = [], scalar_prefetch = 0 : i64, scratch_operands = 0 : i64, tpu.core_type = #tpu.core_type<tc>} {
    %c0 = arith.constant 0 : index
    %c0_0 = arith.constant 0 : index
    %0 = vector.load %arg0[%c0, %c0_0] : memref<8x128xf32, #tpu.memory_space<vmem>>, vector<8x128xf32>
    %c0_1 = arith.constant 0 : index
    %c0_2 = arith.constant 0 : index
    %c0_3 = arith.constant 0 : index
    %1 = vector.load %arg1[%c0_1, %c0_2, %c0_3] : memref<9x8x128xf32, #tpu.memory_space<vmem>>, vector<1x8x128xf32>
    %2 = vector.shape_cast %1 : vector<1x8x128xf32> to vector<8x128xf32>
    %c0_4 = arith.constant 0 : index
    %c0_5 = arith.constant 0 : index
    %c0_6 = arith.constant 0 : index
    %3 = vector.load %arg2[%c0_4, %c0_5, %c0_6] : memref<9x8x1xf32, #tpu.memory_space<vmem>>, vector<1x8x1xf32>
    %4 = vector.shape_cast %3 : vector<1x8x1xf32> to vector<8x1xf32>
    %5 = vector.broadcast %4 : vector<8x1xf32> to vector<8x128xf32>
    %6 = arith.mulf %2, %5 : vector<8x128xf32>
    %c1 = arith.constant 1 : index
    %c0_7 = arith.constant 0 : index
    %c0_8 = arith.constant 0 : index
    %7 = vector.load %arg1[%c1, %c0_7, %c0_8] : memref<9x8x128xf32, #tpu.memory_space<vmem>>, vector<1x8x128xf32>
    %8 = vector.shape_cast %7 : vector<1x8x128xf32> to vector<8x128xf32>
    %c1_9 = arith.constant 1 : index
    %c0_10 = arith.constant 0 : index
    %c0_11 = arith.constant 0 : index
    %9 = vector.load %arg2[%c1_9, %c0_10, %c0_11] : memref<9x8x1xf32, #tpu.memory_space<vmem>>, vector<1x8x1xf32>
    %10 = vector.shape_cast %9 : vector<1x8x1xf32> to vector<8x1xf32>
    %11 = vector.broadcast %10 : vector<8x1xf32> to vector<8x128xf32>
    %12 = arith.mulf %8, %11 : vector<8x128xf32>
    %13 = arith.addf %6, %12 : vector<8x128xf32>
    %c2 = arith.constant 2 : index
    %c0_12 = arith.constant 0 : index
    %c0_13 = arith.constant 0 : index
    %14 = vector.load %arg1[%c2, %c0_12, %c0_13] : memref<9x8x128xf32, #tpu.memory_space<vmem>>, vector<1x8x128xf32>
    %15 = vector.shape_cast %14 : vector<1x8x128xf32> to vector<8x128xf32>
    %c2_14 = arith.constant 2 : index
    %c0_15 = arith.constant 0 : index
    %c0_16 = arith.constant 0 : index
    %16 = vector.load %arg2[%c2_14, %c0_15, %c0_16] : memref<9x8x1xf32, #tpu.memory_space<vmem>>, vector<1x8x1xf32>
    %17 = vector.shape_cast %16 : vector<1x8x1xf32> to vector<8x1xf32>
    %18 = vector.broadcast %17 : vector<8x1xf32> to vector<8x128xf32>
    %19 = arith.mulf %15, %18 : vector<8x128xf32>
    %20 = arith.addf %13, %19 : vector<8x128xf32>
    %c3 = arith.constant 3 : index
    %c0_17 = arith.constant 0 : index
    %c0_18 = arith.constant 0 : index
    %21 = vector.load %arg1[%c3, %c0_17, %c0_18] : memref<9x8x128xf32, #tpu.memory_space<vmem>>, vector<1x8x128xf32>
    %22 = vector.shape_cast %21 : vector<1x8x128xf32> to vector<8x128xf32>
    %c3_19 = arith.constant 3 : index
    %c0_20 = arith.constant 0 : index
    %c0_21 = arith.constant 0 : index
    %23 = vector.load %arg2[%c3_19, %c0_20, %c0_21] : memref<9x8x1xf32, #tpu.memory_space<vmem>>, vector<1x8x1xf32>
    %24 = vector.shape_cast %23 : vector<1x8x1xf32> to vector<8x1xf32>
    %25 = vector.broadcast %24 : vector<8x1xf32> to vector<8x128xf32>
    %26 = arith.mulf %22, %25 : vector<8x128xf32>
    %27 = arith.addf %20, %26 : vector<8x128xf32>
    %c4 = arith.constant 4 : index
    %c0_22 = arith.constant 0 : index
    %c0_23 = arith.constant 0 : index
    %28 = vector.load %arg1[%c4, %c0_22, %c0_23] : memref<9x8x128xf32, #tpu.memory_space<vmem>>, vector<1x8x128xf32>
    %29 = vector.shape_cast %28 : vector<1x8x128xf32> to vector<8x128xf32>
    %c4_24 = arith.constant 4 : index
    %c0_25 = arith.constant 0 : index
    %c0_26 = arith.constant 0 : index
    %30 = vector.load %arg2[%c4_24, %c0_25, %c0_26] : memref<9x8x1xf32, #tpu.memory_space<vmem>>, vector<1x8x1xf32>
    %31 = vector.shape_cast %30 : vector<1x8x1xf32> to vector<8x1xf32>
    %32 = vector.broadcast %31 : vector<8x1xf32> to vector<8x128xf32>
    %33 = arith.mulf %29, %32 : vector<8x128xf32>
    %34 = arith.addf %27, %33 : vector<8x128xf32>
    %c5 = arith.constant 5 : index
    %c0_27 = arith.constant 0 : index
    %c0_28 = arith.constant 0 : index
    %35 = vector.load %arg1[%c5, %c0_27, %c0_28] : memref<9x8x128xf32, #tpu.memory_space<vmem>>, vector<1x8x128xf32>
    %36 = vector.shape_cast %35 : vector<1x8x128xf32> to vector<8x128xf32>
    %c5_29 = arith.constant 5 : index
    %c0_30 = arith.constant 0 : index
    %c0_31 = arith.constant 0 : index
    %37 = vector.load %arg2[%c5_29, %c0_30, %c0_31] : memref<9x8x1xf32, #tpu.memory_space<vmem>>, vector<1x8x1xf32>
    %38 = vector.shape_cast %37 : vector<1x8x1xf32> to vector<8x1xf32>
    %39 = vector.broadcast %38 : vector<8x1xf32> to vector<8x128xf32>
    %40 = arith.mulf %36, %39 : vector<8x128xf32>
    %41 = arith.addf %34, %40 : vector<8x128xf32>
    %c6 = arith.constant 6 : index
    %c0_32 = arith.constant 0 : index
    %c0_33 = arith.constant 0 : index
    %42 = vector.load %arg1[%c6, %c0_32, %c0_33] : memref<9x8x128xf32, #tpu.memory_space<vmem>>, vector<1x8x128xf32>
    %43 = vector.shape_cast %42 : vector<1x8x128xf32> to vector<8x128xf32>
    %c6_34 = arith.constant 6 : index
    %c0_35 = arith.constant 0 : index
    %c0_36 = arith.constant 0 : index
    %44 = vector.load %arg2[%c6_34, %c0_35, %c0_36] : memref<9x8x1xf32, #tpu.memory_space<vmem>>, vector<1x8x1xf32>
    %45 = vector.shape_cast %44 : vector<1x8x1xf32> to vector<8x1xf32>
    %46 = vector.broadcast %45 : vector<8x1xf32> to vector<8x128xf32>
    %47 = arith.mulf %43, %46 : vector<8x128xf32>
    %48 = arith.addf %41, %47 : vector<8x128xf32>
    %c7 = arith.constant 7 : index
    %c0_37 = arith.constant 0 : index
    %c0_38 = arith.constant 0 : index
    %49 = vector.load %arg1[%c7, %c0_37, %c0_38] : memref<9x8x128xf32, #tpu.memory_space<vmem>>, vector<1x8x128xf32>
    %50 = vector.shape_cast %49 : vector<1x8x128xf32> to vector<8x128xf32>
    %c7_39 = arith.constant 7 : index
    %c0_40 = arith.constant 0 : index
    %c0_41 = arith.constant 0 : index
    %51 = vector.load %arg2[%c7_39, %c0_40, %c0_41] : memref<9x8x1xf32, #tpu.memory_space<vmem>>, vector<1x8x1xf32>
    %52 = vector.shape_cast %51 : vector<1x8x1xf32> to vector<8x1xf32>
    %53 = vector.broadcast %52 : vector<8x1xf32> to vector<8x128xf32>
    %54 = arith.mulf %50, %53 : vector<8x128xf32>
    %55 = arith.addf %48, %54 : vector<8x128xf32>
    %c8 = arith.constant 8 : index
    %c0_42 = arith.constant 0 : index
    %c0_43 = arith.constant 0 : index
    %56 = vector.load %arg1[%c8, %c0_42, %c0_43] : memref<9x8x128xf32, #tpu.memory_space<vmem>>, vector<1x8x128xf32>
    %57 = vector.shape_cast %56 : vector<1x8x128xf32> to vector<8x128xf32>
    %c8_44 = arith.constant 8 : index
    %c0_45 = arith.constant 0 : index
    %c0_46 = arith.constant 0 : index
    %58 = vector.load %arg2[%c8_44, %c0_45, %c0_46] : memref<9x8x1xf32, #tpu.memory_space<vmem>>, vector<1x8x1xf32>
    %59 = vector.shape_cast %58 : vector<1x8x1xf32> to vector<8x1xf32>
    %60 = vector.broadcast %59 : vector<8x1xf32> to vector<8x128xf32>
    %61 = arith.mulf %57, %60 : vector<8x128xf32>
    %62 = arith.addf %55, %61 : vector<8x128xf32>
    %cst = arith.constant dense<0.000000e+00> : vector<8xf32>
    %63 = vector.multi_reduction <add>, %62, %cst [1] : vector<8x128xf32> to vector<8xf32>
    %64 = vector.shape_cast %63 : vector<8xf32> to vector<8x1xf32>
    %cst_47 = arith.constant 1.280000e+02 : f32
    %65 = vector.broadcast %cst_47 : f32 to vector<8x1xf32>
    %66 = arith.divf %64, %65 : vector<8x1xf32>
    %67 = vector.broadcast %66 : vector<8x1xf32> to vector<8x128xf32>
    %68 = arith.subf %62, %67 : vector<8x128xf32>
    %69 = vector.broadcast %66 : vector<8x1xf32> to vector<8x128xf32>
    %70 = arith.subf %62, %69 : vector<8x128xf32>
    %71 = arith.mulf %68, %70 : vector<8x128xf32>
    %cst_48 = arith.constant dense<0.000000e+00> : vector<8xf32>
    %72 = vector.multi_reduction <add>, %71, %cst_48 [1] : vector<8x128xf32> to vector<8xf32>
    %73 = vector.shape_cast %72 : vector<8xf32> to vector<8x1xf32>
    %cst_49 = arith.constant 1.280000e+02 : f32
    %74 = vector.broadcast %cst_49 : f32 to vector<8x1xf32>
    %75 = arith.divf %73, %74 : vector<8x1xf32>
    %76 = vector.broadcast %66 : vector<8x1xf32> to vector<8x128xf32>
    %77 = arith.subf %62, %76 : vector<8x128xf32>
    %cst_50 = arith.constant 9.99999974E-6 : f32
    %78 = vector.broadcast %cst_50 : f32 to vector<8x1xf32>
    %79 = arith.addf %75, %78 : vector<8x1xf32>
    %80 = math.rsqrt %79 : vector<8x1xf32>
    %81 = vector.broadcast %80 : vector<8x1xf32> to vector<8x128xf32>
    %82 = arith.mulf %77, %81 : vector<8x128xf32>
    %83 = arith.maximumf %0, %82 : vector<8x128xf32>
    %c0_51 = arith.constant 0 : index
    %c0_52 = arith.constant 0 : index
    %84 = vector.load %arg3[%c0_51, %c0_52] : memref<8x128xf32, #tpu.memory_space<vmem>>, vector<8x128xf32>
    tpu.vector_store %arg3[%c0_51, %c0_52], %83 {strides = array<i32>} : memref<8x128xf32, #tpu.memory_space<vmem>>, vector<8x128xf32>,
    return
  }
}

module attributes {stable_mosaic.version = 11 : i64} {
  func.func @conv_noise_pixnorm_kernel(%arg0: memref<72x128xf32, #tpu.memory_space<vmem>>, %arg1: memref<8x72xf32, #tpu.memory_space<vmem>>, %arg2: memref<8x1xf32, #tpu.memory_space<vmem>>, %arg3: memref<1x128xf32, #tpu.memory_space<vmem>>, %arg4: memref<1x1xf32, #tpu.memory_space<vmem>>, %arg5: memref<8x128xf32, #tpu.memory_space<vmem>>) attributes {dimension_semantics = [], scalar_prefetch = 0 : i64, scratch_operands = 0 : i64, tpu.core_type = #tpu.core_type<tc>} {
    %c0 = arith.constant 0 : index
    %c0_0 = arith.constant 0 : index
    %0 = vector.load %arg1[%c0, %c0_0] : memref<8x72xf32, #tpu.memory_space<vmem>>, vector<8x72xf32>
    %c0_1 = arith.constant 0 : index
    %c0_2 = arith.constant 0 : index
    %1 = vector.load %arg0[%c0_1, %c0_2] : memref<72x128xf32, #tpu.memory_space<vmem>>, vector<72x128xf32>
    %cst = arith.constant dense<0.000000e+00> : vector<8x128xf32>
    %2 = tpu.matmul %0, %1, %cst {dimension_numbers = #tpu.dot_dimension_numbers<[1], [0], [0], [1], [0, 0, 1, 1], [], []>} : vector<8x72xf32>, vector<72x128xf32>, vector<8x128xf32> -> vector<8x128xf32>
    %c0_3 = arith.constant 0 : index
    %c0_4 = arith.constant 0 : index
    %3 = vector.load %arg2[%c0_3, %c0_4] : memref<8x1xf32, #tpu.memory_space<vmem>>, vector<8x1xf32>
    %4 = vector.broadcast %3 : vector<8x1xf32> to vector<8x128xf32>
    %5 = arith.mulf %2, %4 : vector<8x128xf32>
    %c0_5 = arith.constant 0 : index
    %c0_6 = arith.constant 0 : index
    %6 = vector.load %arg4[%c0_5, %c0_6] : memref<1x1xf32, #tpu.memory_space<vmem>>, vector<1x1xf32>
    %c0_7 = arith.constant 0 : index
    %c0_8 = arith.constant 0 : index
    %7 = vector.load %arg3[%c0_7, %c0_8] : memref<1x128xf32, #tpu.memory_space<vmem>>, vector<1x128xf32>
    %8 = vector.broadcast %6 : vector<1x1xf32> to vector<1x128xf32>
    %9 = arith.mulf %8, %7 : vector<1x128xf32>
    %10 = vector.broadcast %9 : vector<1x128xf32> to vector<8x128xf32>
    %11 = arith.addf %5, %10 : vector<8x128xf32>
    %12 = arith.mulf %11, %11 : vector<8x128xf32>
    %cst_9 = arith.constant dense<0.000000e+00> : vector<128xf32>
    %13 = vector.multi_reduction <add>, %12, %cst_9 [0] : vector<8x128xf32> to vector<128xf32>
    %14 = vector.shape_cast %13 : vector<128xf32> to vector<1x128xf32>
    %cst_10 = arith.constant 8.000000e+00 : f32
    %15 = vector.broadcast %cst_10 : f32 to vector<1x128xf32>
    %16 = arith.divf %14, %15 : vector<1x128xf32>
    %cst_11 = arith.constant 9.99999993E-9 : f32
    %17 = vector.broadcast %cst_11 : f32 to vector<1x128xf32>
    %18 = arith.addf %16, %17 : vector<1x128xf32>
    %19 = math.rsqrt %18 : vector<1x128xf32>
    %20 = vector.broadcast %19 : vector<1x128xf32> to vector<8x128xf32>
    %21 = arith.mulf %11, %20 : vector<8x128xf32>
    %c0_12 = arith.constant 0 : index
    %c0_13 = arith.constant 0 : index
    %22 = vector.load %arg5[%c0_12, %c0_13] : memref<8x128xf32, #tpu.memory_space<vmem>>, vector<8x128xf32>
    tpu.vector_store %arg5[%c0_12, %c0_13], %21 {strides = array<i32>} : memref<8x128xf32, #tpu.memory_space<vmem>>, vector<8x128xf32>,
    return
  }
}

module attributes {stable_mosaic.version = 11 : i64} {
  func.func @frelu_torgb_kernel(%arg0: memref<8x128xf32, #tpu.memory_space<vmem>>, %arg1: memref<9x8x128xf32, #tpu.memory_space<vmem>>, %arg2: memref<9x8x1xf32, #tpu.memory_space<vmem>>, %arg3: memref<3x8xf32, #tpu.memory_space<vmem>>, %arg4: memref<8x128xf32, #tpu.memory_space<vmem>>, %arg5: memref<3x128xf32, #tpu.memory_space<vmem>>) attributes {dimension_semantics = [], scalar_prefetch = 0 : i64, scratch_operands = 0 : i64, tpu.core_type = #tpu.core_type<tc>} {
    %c0 = arith.constant 0 : index
    %c0_0 = arith.constant 0 : index
    %0 = vector.load %arg0[%c0, %c0_0] : memref<8x128xf32, #tpu.memory_space<vmem>>, vector<8x128xf32>
    %c0_1 = arith.constant 0 : index
    %c0_2 = arith.constant 0 : index
    %c0_3 = arith.constant 0 : index
    %1 = vector.load %arg1[%c0_1, %c0_2, %c0_3] : memref<9x8x128xf32, #tpu.memory_space<vmem>>, vector<1x8x128xf32>
    %2 = vector.shape_cast %1 : vector<1x8x128xf32> to vector<8x128xf32>
    %c0_4 = arith.constant 0 : index
    %c0_5 = arith.constant 0 : index
    %c0_6 = arith.constant 0 : index
    %3 = vector.load %arg2[%c0_4, %c0_5, %c0_6] : memref<9x8x1xf32, #tpu.memory_space<vmem>>, vector<1x8x1xf32>
    %4 = vector.shape_cast %3 : vector<1x8x1xf32> to vector<8x1xf32>
    %5 = vector.broadcast %4 : vector<8x1xf32> to vector<8x128xf32>
    %6 = arith.mulf %2, %5 : vector<8x128xf32>
    %c1 = arith.constant 1 : index
    %c0_7 = arith.constant 0 : index
    %c0_8 = arith.constant 0 : index
    %7 = vector.load %arg1[%c1, %c0_7, %c0_8] : memref<9x8x128xf32, #tpu.memory_space<vmem>>, vector<1x8x128xf32>
    %8 = vector.shape_cast %7 : vector<1x8x128xf32> to vector<8x128xf32>
    %c1_9 = arith.constant 1 : index
    %c0_10 = arith.constant 0 : index
    %c0_11 = arith.constant 0 : index
    %9 = vector.load %arg2[%c1_9, %c0_10, %c0_11] : memref<9x8x1xf32, #tpu.memory_space<vmem>>, vector<1x8x1xf32>
    %10 = vector.shape_cast %9 : vector<1x8x1xf32> to vector<8x1xf32>
    %11 = vector.broadcast %10 : vector<8x1xf32> to vector<8x128xf32>
    %12 = arith.mulf %8, %11 : vector<8x128xf32>
    %13 = arith.addf %6, %12 : vector<8x128xf32>
    %c2 = arith.constant 2 : index
    %c0_12 = arith.constant 0 : index
    %c0_13 = arith.constant 0 : index
    %14 = vector.load %arg1[%c2, %c0_12, %c0_13] : memref<9x8x128xf32, #tpu.memory_space<vmem>>, vector<1x8x128xf32>
    %15 = vector.shape_cast %14 : vector<1x8x128xf32> to vector<8x128xf32>
    %c2_14 = arith.constant 2 : index
    %c0_15 = arith.constant 0 : index
    %c0_16 = arith.constant 0 : index
    %16 = vector.load %arg2[%c2_14, %c0_15, %c0_16] : memref<9x8x1xf32, #tpu.memory_space<vmem>>, vector<1x8x1xf32>
    %17 = vector.shape_cast %16 : vector<1x8x1xf32> to vector<8x1xf32>
    %18 = vector.broadcast %17 : vector<8x1xf32> to vector<8x128xf32>
    %19 = arith.mulf %15, %18 : vector<8x128xf32>
    %20 = arith.addf %13, %19 : vector<8x128xf32>
    %c3 = arith.constant 3 : index
    %c0_17 = arith.constant 0 : index
    %c0_18 = arith.constant 0 : index
    %21 = vector.load %arg1[%c3, %c0_17, %c0_18] : memref<9x8x128xf32, #tpu.memory_space<vmem>>, vector<1x8x128xf32>
    %22 = vector.shape_cast %21 : vector<1x8x128xf32> to vector<8x128xf32>
    %c3_19 = arith.constant 3 : index
    %c0_20 = arith.constant 0 : index
    %c0_21 = arith.constant 0 : index
    %23 = vector.load %arg2[%c3_19, %c0_20, %c0_21] : memref<9x8x1xf32, #tpu.memory_space<vmem>>, vector<1x8x1xf32>
    %24 = vector.shape_cast %23 : vector<1x8x1xf32> to vector<8x1xf32>
    %25 = vector.broadcast %24 : vector<8x1xf32> to vector<8x128xf32>
    %26 = arith.mulf %22, %25 : vector<8x128xf32>
    %27 = arith.addf %20, %26 : vector<8x128xf32>
    %c4 = arith.constant 4 : index
    %c0_22 = arith.constant 0 : index
    %c0_23 = arith.constant 0 : index
    %28 = vector.load %arg1[%c4, %c0_22, %c0_23] : memref<9x8x128xf32, #tpu.memory_space<vmem>>, vector<1x8x128xf32>
    %29 = vector.shape_cast %28 : vector<1x8x128xf32> to vector<8x128xf32>
    %c4_24 = arith.constant 4 : index
    %c0_25 = arith.constant 0 : index
    %c0_26 = arith.constant 0 : index
    %30 = vector.load %arg2[%c4_24, %c0_25, %c0_26] : memref<9x8x1xf32, #tpu.memory_space<vmem>>, vector<1x8x1xf32>
    %31 = vector.shape_cast %30 : vector<1x8x1xf32> to vector<8x1xf32>
    %32 = vector.broadcast %31 : vector<8x1xf32> to vector<8x128xf32>
    %33 = arith.mulf %29, %32 : vector<8x128xf32>
    %34 = arith.addf %27, %33 : vector<8x128xf32>
    %c5 = arith.constant 5 : index
    %c0_27 = arith.constant 0 : index
    %c0_28 = arith.constant 0 : index
    %35 = vector.load %arg1[%c5, %c0_27, %c0_28] : memref<9x8x128xf32, #tpu.memory_space<vmem>>, vector<1x8x128xf32>
    %36 = vector.shape_cast %35 : vector<1x8x128xf32> to vector<8x128xf32>
    %c5_29 = arith.constant 5 : index
    %c0_30 = arith.constant 0 : index
    %c0_31 = arith.constant 0 : index
    %37 = vector.load %arg2[%c5_29, %c0_30, %c0_31] : memref<9x8x1xf32, #tpu.memory_space<vmem>>, vector<1x8x1xf32>
    %38 = vector.shape_cast %37 : vector<1x8x1xf32> to vector<8x1xf32>
    %39 = vector.broadcast %38 : vector<8x1xf32> to vector<8x128xf32>
    %40 = arith.mulf %36, %39 : vector<8x128xf32>
    %41 = arith.addf %34, %40 : vector<8x128xf32>
    %c6 = arith.constant 6 : index
    %c0_32 = arith.constant 0 : index
    %c0_33 = arith.constant 0 : index
    %42 = vector.load %arg1[%c6, %c0_32, %c0_33] : memref<9x8x128xf32, #tpu.memory_space<vmem>>, vector<1x8x128xf32>
    %43 = vector.shape_cast %42 : vector<1x8x128xf32> to vector<8x128xf32>
    %c6_34 = arith.constant 6 : index
    %c0_35 = arith.constant 0 : index
    %c0_36 = arith.constant 0 : index
    %44 = vector.load %arg2[%c6_34, %c0_35, %c0_36] : memref<9x8x1xf32, #tpu.memory_space<vmem>>, vector<1x8x1xf32>
    %45 = vector.shape_cast %44 : vector<1x8x1xf32> to vector<8x1xf32>
    %46 = vector.broadcast %45 : vector<8x1xf32> to vector<8x128xf32>
    %47 = arith.mulf %43, %46 : vector<8x128xf32>
    %48 = arith.addf %41, %47 : vector<8x128xf32>
    %c7 = arith.constant 7 : index
    %c0_37 = arith.constant 0 : index
    %c0_38 = arith.constant 0 : index
    %49 = vector.load %arg1[%c7, %c0_37, %c0_38] : memref<9x8x128xf32, #tpu.memory_space<vmem>>, vector<1x8x128xf32>
    %50 = vector.shape_cast %49 : vector<1x8x128xf32> to vector<8x128xf32>
    %c7_39 = arith.constant 7 : index
    %c0_40 = arith.constant 0 : index
    %c0_41 = arith.constant 0 : index
    %51 = vector.load %arg2[%c7_39, %c0_40, %c0_41] : memref<9x8x1xf32, #tpu.memory_space<vmem>>, vector<1x8x1xf32>
    %52 = vector.shape_cast %51 : vector<1x8x1xf32> to vector<8x1xf32>
    %53 = vector.broadcast %52 : vector<8x1xf32> to vector<8x128xf32>
    %54 = arith.mulf %50, %53 : vector<8x128xf32>
    %55 = arith.addf %48, %54 : vector<8x128xf32>
    %c8 = arith.constant 8 : index
    %c0_42 = arith.constant 0 : index
    %c0_43 = arith.constant 0 : index
    %56 = vector.load %arg1[%c8, %c0_42, %c0_43] : memref<9x8x128xf32, #tpu.memory_space<vmem>>, vector<1x8x128xf32>
    %57 = vector.shape_cast %56 : vector<1x8x128xf32> to vector<8x128xf32>
    %c8_44 = arith.constant 8 : index
    %c0_45 = arith.constant 0 : index
    %c0_46 = arith.constant 0 : index
    %58 = vector.load %arg2[%c8_44, %c0_45, %c0_46] : memref<9x8x1xf32, #tpu.memory_space<vmem>>, vector<1x8x1xf32>
    %59 = vector.shape_cast %58 : vector<1x8x1xf32> to vector<8x1xf32>
    %60 = vector.broadcast %59 : vector<8x1xf32> to vector<8x128xf32>
    %61 = arith.mulf %57, %60 : vector<8x128xf32>
    %62 = arith.addf %55, %61 : vector<8x128xf32>
    %cst = arith.constant dense<0.000000e+00> : vector<8xf32>
    %63 = vector.multi_reduction <add>, %62, %cst [1] : vector<8x128xf32> to vector<8xf32>
    %64 = vector.shape_cast %63 : vector<8xf32> to vector<8x1xf32>
    %cst_47 = arith.constant 1.280000e+02 : f32
    %65 = vector.broadcast %cst_47 : f32 to vector<8x1xf32>
    %66 = arith.divf %64, %65 : vector<8x1xf32>
    %67 = vector.broadcast %66 : vector<8x1xf32> to vector<8x128xf32>
    %68 = arith.subf %62, %67 : vector<8x128xf32>
    %69 = vector.broadcast %66 : vector<8x1xf32> to vector<8x128xf32>
    %70 = arith.subf %62, %69 : vector<8x128xf32>
    %71 = arith.mulf %68, %70 : vector<8x128xf32>
    %cst_48 = arith.constant dense<0.000000e+00> : vector<8xf32>
    %72 = vector.multi_reduction <add>, %71, %cst_48 [1] : vector<8x128xf32> to vector<8xf32>
    %73 = vector.shape_cast %72 : vector<8xf32> to vector<8x1xf32>
    %cst_49 = arith.constant 1.280000e+02 : f32
    %74 = vector.broadcast %cst_49 : f32 to vector<8x1xf32>
    %75 = arith.divf %73, %74 : vector<8x1xf32>
    %76 = vector.broadcast %66 : vector<8x1xf32> to vector<8x128xf32>
    %77 = arith.subf %62, %76 : vector<8x128xf32>
    %cst_50 = arith.constant 9.99999974E-6 : f32
    %78 = vector.broadcast %cst_50 : f32 to vector<8x1xf32>
    %79 = arith.addf %75, %78 : vector<8x1xf32>
    %80 = math.rsqrt %79 : vector<8x1xf32>
    %81 = vector.broadcast %80 : vector<8x1xf32> to vector<8x128xf32>
    %82 = arith.mulf %77, %81 : vector<8x128xf32>
    %83 = arith.maximumf %0, %82 : vector<8x128xf32>
    %c0_51 = arith.constant 0 : index
    %c0_52 = arith.constant 0 : index
    %84 = vector.load %arg4[%c0_51, %c0_52] : memref<8x128xf32, #tpu.memory_space<vmem>>, vector<8x128xf32>
    tpu.vector_store %arg4[%c0_51, %c0_52], %83 {strides = array<i32>} : memref<8x128xf32, #tpu.memory_space<vmem>>, vector<8x128xf32>,
    %c0_53 = arith.constant 0 : index
    %c0_54 = arith.constant 0 : index
    %85 = vector.load %arg3[%c0_53, %c0_54] : memref<3x8xf32, #tpu.memory_space<vmem>>, vector<3x8xf32>
    %cst_55 = arith.constant dense<0.000000e+00> : vector<3x128xf32>
    %86 = tpu.matmul %85, %83, %cst_55 {dimension_numbers = #tpu.dot_dimension_numbers<[1], [0], [0], [1], [0, 0, 1, 1], [], []>} : vector<3x8xf32>, vector<8x128xf32>, vector<3x128xf32> -> vector<3x128xf32>
    %c0_56 = arith.constant 0 : index
    %c0_57 = arith.constant 0 : index
    %87 = vector.load %arg5[%c0_56, %c0_57] : memref<3x128xf32, #tpu.memory_space<vmem>>, vector<3x128xf32>
    tpu.vector_store %arg5[%c0_56, %c0_57], %86 {strides = array<i32>} : memref<3x128xf32, #tpu.memory_space<vmem>>, vector<3x128xf32>,
    return
  }
}

module attributes {stable_mosaic.version = 11 : i64} {
  func.func @conv_noise_pixnorm_kernel(%arg0: memref<128x512xf32, #tpu.memory_space<vmem>>, %arg1: memref<4x128xf32, #tpu.memory_space<vmem>>, %arg2: memref<4x1xf32, #tpu.memory_space<vmem>>, %arg3: memref<1x512xf32, #tpu.memory_space<vmem>>, %arg4: memref<1x1xf32, #tpu.memory_space<vmem>>, %arg5: memref<4x512xf32, #tpu.memory_space<vmem>>) attributes {dimension_semantics = [], scalar_prefetch = 0 : i64, scratch_operands = 0 : i64, tpu.core_type = #tpu.core_type<tc>} {
    %c0 = arith.constant 0 : index
    %c0_0 = arith.constant 0 : index
    %0 = vector.load %arg1[%c0, %c0_0] : memref<4x128xf32, #tpu.memory_space<vmem>>, vector<4x128xf32>
    %c0_1 = arith.constant 0 : index
    %c0_2 = arith.constant 0 : index
    %1 = vector.load %arg0[%c0_1, %c0_2] : memref<128x512xf32, #tpu.memory_space<vmem>>, vector<128x512xf32>
    %cst = arith.constant dense<0.000000e+00> : vector<4x512xf32>
    %2 = tpu.matmul %0, %1, %cst {dimension_numbers = #tpu.dot_dimension_numbers<[1], [0], [0], [1], [0, 0, 1, 1], [], []>} : vector<4x128xf32>, vector<128x512xf32>, vector<4x512xf32> -> vector<4x512xf32>
    %c0_3 = arith.constant 0 : index
    %c0_4 = arith.constant 0 : index
    %3 = vector.load %arg2[%c0_3, %c0_4] : memref<4x1xf32, #tpu.memory_space<vmem>>, vector<4x1xf32>
    %4 = vector.broadcast %3 : vector<4x1xf32> to vector<4x512xf32>
    %5 = arith.mulf %2, %4 : vector<4x512xf32>
    %c0_5 = arith.constant 0 : index
    %c0_6 = arith.constant 0 : index
    %6 = vector.load %arg4[%c0_5, %c0_6] : memref<1x1xf32, #tpu.memory_space<vmem>>, vector<1x1xf32>
    %c0_7 = arith.constant 0 : index
    %c0_8 = arith.constant 0 : index
    %7 = vector.load %arg3[%c0_7, %c0_8] : memref<1x512xf32, #tpu.memory_space<vmem>>, vector<1x512xf32>
    %8 = vector.broadcast %6 : vector<1x1xf32> to vector<1x512xf32>
    %9 = arith.mulf %8, %7 : vector<1x512xf32>
    %10 = vector.broadcast %9 : vector<1x512xf32> to vector<4x512xf32>
    %11 = arith.addf %5, %10 : vector<4x512xf32>
    %12 = arith.mulf %11, %11 : vector<4x512xf32>
    %cst_9 = arith.constant dense<0.000000e+00> : vector<512xf32>
    %13 = vector.multi_reduction <add>, %12, %cst_9 [0] : vector<4x512xf32> to vector<512xf32>
    %14 = vector.shape_cast %13 : vector<512xf32> to vector<1x512xf32>
    %cst_10 = arith.constant 4.000000e+00 : f32
    %15 = vector.broadcast %cst_10 : f32 to vector<1x512xf32>
    %16 = arith.divf %14, %15 : vector<1x512xf32>
    %cst_11 = arith.constant 9.99999993E-9 : f32
    %17 = vector.broadcast %cst_11 : f32 to vector<1x512xf32>
    %18 = arith.addf %16, %17 : vector<1x512xf32>
    %19 = math.rsqrt %18 : vector<1x512xf32>
    %20 = vector.broadcast %19 : vector<1x512xf32> to vector<4x512xf32>
    %21 = arith.mulf %11, %20 : vector<4x512xf32>
    %c0_12 = arith.constant 0 : index
    %c0_13 = arith.constant 0 : index
    %22 = vector.load %arg5[%c0_12, %c0_13] : memref<4x512xf32, #tpu.memory_space<vmem>>, vector<4x512xf32>
    tpu.vector_store %arg5[%c0_12, %c0_13], %21 {strides = array<i32>} : memref<4x512xf32, #tpu.memory_space<vmem>>, vector<4x512xf32>,
    return
  }
}

module attributes {stable_mosaic.version = 11 : i64} {
  func.func @frelu_kernel(%arg0: memref<4x512xf32, #tpu.memory_space<vmem>>, %arg1: memref<9x4x512xf32, #tpu.memory_space<vmem>>, %arg2: memref<9x4x1xf32, #tpu.memory_space<vmem>>, %arg3: memref<4x512xf32, #tpu.memory_space<vmem>>) attributes {dimension_semantics = [], scalar_prefetch = 0 : i64, scratch_operands = 0 : i64, tpu.core_type = #tpu.core_type<tc>} {
    %c0 = arith.constant 0 : index
    %c0_0 = arith.constant 0 : index
    %0 = vector.load %arg0[%c0, %c0_0] : memref<4x512xf32, #tpu.memory_space<vmem>>, vector<4x512xf32>
    %c0_1 = arith.constant 0 : index
    %c0_2 = arith.constant 0 : index
    %c0_3 = arith.constant 0 : index
    %1 = vector.load %arg1[%c0_1, %c0_2, %c0_3] : memref<9x4x512xf32, #tpu.memory_space<vmem>>, vector<1x4x512xf32>
    %2 = vector.shape_cast %1 : vector<1x4x512xf32> to vector<4x512xf32>
    %c0_4 = arith.constant 0 : index
    %c0_5 = arith.constant 0 : index
    %c0_6 = arith.constant 0 : index
    %3 = vector.load %arg2[%c0_4, %c0_5, %c0_6] : memref<9x4x1xf32, #tpu.memory_space<vmem>>, vector<1x4x1xf32>
    %4 = vector.shape_cast %3 : vector<1x4x1xf32> to vector<4x1xf32>
    %5 = vector.broadcast %4 : vector<4x1xf32> to vector<4x512xf32>
    %6 = arith.mulf %2, %5 : vector<4x512xf32>
    %c1 = arith.constant 1 : index
    %c0_7 = arith.constant 0 : index
    %c0_8 = arith.constant 0 : index
    %7 = vector.load %arg1[%c1, %c0_7, %c0_8] : memref<9x4x512xf32, #tpu.memory_space<vmem>>, vector<1x4x512xf32>
    %8 = vector.shape_cast %7 : vector<1x4x512xf32> to vector<4x512xf32>
    %c1_9 = arith.constant 1 : index
    %c0_10 = arith.constant 0 : index
    %c0_11 = arith.constant 0 : index
    %9 = vector.load %arg2[%c1_9, %c0_10, %c0_11] : memref<9x4x1xf32, #tpu.memory_space<vmem>>, vector<1x4x1xf32>
    %10 = vector.shape_cast %9 : vector<1x4x1xf32> to vector<4x1xf32>
    %11 = vector.broadcast %10 : vector<4x1xf32> to vector<4x512xf32>
    %12 = arith.mulf %8, %11 : vector<4x512xf32>
    %13 = arith.addf %6, %12 : vector<4x512xf32>
    %c2 = arith.constant 2 : index
    %c0_12 = arith.constant 0 : index
    %c0_13 = arith.constant 0 : index
    %14 = vector.load %arg1[%c2, %c0_12, %c0_13] : memref<9x4x512xf32, #tpu.memory_space<vmem>>, vector<1x4x512xf32>
    %15 = vector.shape_cast %14 : vector<1x4x512xf32> to vector<4x512xf32>
    %c2_14 = arith.constant 2 : index
    %c0_15 = arith.constant 0 : index
    %c0_16 = arith.constant 0 : index
    %16 = vector.load %arg2[%c2_14, %c0_15, %c0_16] : memref<9x4x1xf32, #tpu.memory_space<vmem>>, vector<1x4x1xf32>
    %17 = vector.shape_cast %16 : vector<1x4x1xf32> to vector<4x1xf32>
    %18 = vector.broadcast %17 : vector<4x1xf32> to vector<4x512xf32>
    %19 = arith.mulf %15, %18 : vector<4x512xf32>
    %20 = arith.addf %13, %19 : vector<4x512xf32>
    %c3 = arith.constant 3 : index
    %c0_17 = arith.constant 0 : index
    %c0_18 = arith.constant 0 : index
    %21 = vector.load %arg1[%c3, %c0_17, %c0_18] : memref<9x4x512xf32, #tpu.memory_space<vmem>>, vector<1x4x512xf32>
    %22 = vector.shape_cast %21 : vector<1x4x512xf32> to vector<4x512xf32>
    %c3_19 = arith.constant 3 : index
    %c0_20 = arith.constant 0 : index
    %c0_21 = arith.constant 0 : index
    %23 = vector.load %arg2[%c3_19, %c0_20, %c0_21] : memref<9x4x1xf32, #tpu.memory_space<vmem>>, vector<1x4x1xf32>
    %24 = vector.shape_cast %23 : vector<1x4x1xf32> to vector<4x1xf32>
    %25 = vector.broadcast %24 : vector<4x1xf32> to vector<4x512xf32>
    %26 = arith.mulf %22, %25 : vector<4x512xf32>
    %27 = arith.addf %20, %26 : vector<4x512xf32>
    %c4 = arith.constant 4 : index
    %c0_22 = arith.constant 0 : index
    %c0_23 = arith.constant 0 : index
    %28 = vector.load %arg1[%c4, %c0_22, %c0_23] : memref<9x4x512xf32, #tpu.memory_space<vmem>>, vector<1x4x512xf32>
    %29 = vector.shape_cast %28 : vector<1x4x512xf32> to vector<4x512xf32>
    %c4_24 = arith.constant 4 : index
    %c0_25 = arith.constant 0 : index
    %c0_26 = arith.constant 0 : index
    %30 = vector.load %arg2[%c4_24, %c0_25, %c0_26] : memref<9x4x1xf32, #tpu.memory_space<vmem>>, vector<1x4x1xf32>
    %31 = vector.shape_cast %30 : vector<1x4x1xf32> to vector<4x1xf32>
    %32 = vector.broadcast %31 : vector<4x1xf32> to vector<4x512xf32>
    %33 = arith.mulf %29, %32 : vector<4x512xf32>
    %34 = arith.addf %27, %33 : vector<4x512xf32>
    %c5 = arith.constant 5 : index
    %c0_27 = arith.constant 0 : index
    %c0_28 = arith.constant 0 : index
    %35 = vector.load %arg1[%c5, %c0_27, %c0_28] : memref<9x4x512xf32, #tpu.memory_space<vmem>>, vector<1x4x512xf32>
    %36 = vector.shape_cast %35 : vector<1x4x512xf32> to vector<4x512xf32>
    %c5_29 = arith.constant 5 : index
    %c0_30 = arith.constant 0 : index
    %c0_31 = arith.constant 0 : index
    %37 = vector.load %arg2[%c5_29, %c0_30, %c0_31] : memref<9x4x1xf32, #tpu.memory_space<vmem>>, vector<1x4x1xf32>
    %38 = vector.shape_cast %37 : vector<1x4x1xf32> to vector<4x1xf32>
    %39 = vector.broadcast %38 : vector<4x1xf32> to vector<4x512xf32>
    %40 = arith.mulf %36, %39 : vector<4x512xf32>
    %41 = arith.addf %34, %40 : vector<4x512xf32>
    %c6 = arith.constant 6 : index
    %c0_32 = arith.constant 0 : index
    %c0_33 = arith.constant 0 : index
    %42 = vector.load %arg1[%c6, %c0_32, %c0_33] : memref<9x4x512xf32, #tpu.memory_space<vmem>>, vector<1x4x512xf32>
    %43 = vector.shape_cast %42 : vector<1x4x512xf32> to vector<4x512xf32>
    %c6_34 = arith.constant 6 : index
    %c0_35 = arith.constant 0 : index
    %c0_36 = arith.constant 0 : index
    %44 = vector.load %arg2[%c6_34, %c0_35, %c0_36] : memref<9x4x1xf32, #tpu.memory_space<vmem>>, vector<1x4x1xf32>
    %45 = vector.shape_cast %44 : vector<1x4x1xf32> to vector<4x1xf32>
    %46 = vector.broadcast %45 : vector<4x1xf32> to vector<4x512xf32>
    %47 = arith.mulf %43, %46 : vector<4x512xf32>
    %48 = arith.addf %41, %47 : vector<4x512xf32>
    %c7 = arith.constant 7 : index
    %c0_37 = arith.constant 0 : index
    %c0_38 = arith.constant 0 : index
    %49 = vector.load %arg1[%c7, %c0_37, %c0_38] : memref<9x4x512xf32, #tpu.memory_space<vmem>>, vector<1x4x512xf32>
    %50 = vector.shape_cast %49 : vector<1x4x512xf32> to vector<4x512xf32>
    %c7_39 = arith.constant 7 : index
    %c0_40 = arith.constant 0 : index
    %c0_41 = arith.constant 0 : index
    %51 = vector.load %arg2[%c7_39, %c0_40, %c0_41] : memref<9x4x1xf32, #tpu.memory_space<vmem>>, vector<1x4x1xf32>
    %52 = vector.shape_cast %51 : vector<1x4x1xf32> to vector<4x1xf32>
    %53 = vector.broadcast %52 : vector<4x1xf32> to vector<4x512xf32>
    %54 = arith.mulf %50, %53 : vector<4x512xf32>
    %55 = arith.addf %48, %54 : vector<4x512xf32>
    %c8 = arith.constant 8 : index
    %c0_42 = arith.constant 0 : index
    %c0_43 = arith.constant 0 : index
    %56 = vector.load %arg1[%c8, %c0_42, %c0_43] : memref<9x4x512xf32, #tpu.memory_space<vmem>>, vector<1x4x512xf32>
    %57 = vector.shape_cast %56 : vector<1x4x512xf32> to vector<4x512xf32>
    %c8_44 = arith.constant 8 : index
    %c0_45 = arith.constant 0 : index
    %c0_46 = arith.constant 0 : index
    %58 = vector.load %arg2[%c8_44, %c0_45, %c0_46] : memref<9x4x1xf32, #tpu.memory_space<vmem>>, vector<1x4x1xf32>
    %59 = vector.shape_cast %58 : vector<1x4x1xf32> to vector<4x1xf32>
    %60 = vector.broadcast %59 : vector<4x1xf32> to vector<4x512xf32>
    %61 = arith.mulf %57, %60 : vector<4x512xf32>
    %62 = arith.addf %55, %61 : vector<4x512xf32>
    %cst = arith.constant dense<0.000000e+00> : vector<4xf32>
    %63 = vector.multi_reduction <add>, %62, %cst [1] : vector<4x512xf32> to vector<4xf32>
    %64 = vector.shape_cast %63 : vector<4xf32> to vector<4x1xf32>
    %cst_47 = arith.constant 5.120000e+02 : f32
    %65 = vector.broadcast %cst_47 : f32 to vector<4x1xf32>
    %66 = arith.divf %64, %65 : vector<4x1xf32>
    %67 = vector.broadcast %66 : vector<4x1xf32> to vector<4x512xf32>
    %68 = arith.subf %62, %67 : vector<4x512xf32>
    %69 = vector.broadcast %66 : vector<4x1xf32> to vector<4x512xf32>
    %70 = arith.subf %62, %69 : vector<4x512xf32>
    %71 = arith.mulf %68, %70 : vector<4x512xf32>
    %cst_48 = arith.constant dense<0.000000e+00> : vector<4xf32>
    %72 = vector.multi_reduction <add>, %71, %cst_48 [1] : vector<4x512xf32> to vector<4xf32>
    %73 = vector.shape_cast %72 : vector<4xf32> to vector<4x1xf32>
    %cst_49 = arith.constant 5.120000e+02 : f32
    %74 = vector.broadcast %cst_49 : f32 to vector<4x1xf32>
    %75 = arith.divf %73, %74 : vector<4x1xf32>
    %76 = vector.broadcast %66 : vector<4x1xf32> to vector<4x512xf32>
    %77 = arith.subf %62, %76 : vector<4x512xf32>
    %cst_50 = arith.constant 9.99999974E-6 : f32
    %78 = vector.broadcast %cst_50 : f32 to vector<4x1xf32>
    %79 = arith.addf %75, %78 : vector<4x1xf32>
    %80 = math.rsqrt %79 : vector<4x1xf32>
    %81 = vector.broadcast %80 : vector<4x1xf32> to vector<4x512xf32>
    %82 = arith.mulf %77, %81 : vector<4x512xf32>
    %83 = arith.maximumf %0, %82 : vector<4x512xf32>
    %c0_51 = arith.constant 0 : index
    %c0_52 = arith.constant 0 : index
    %84 = vector.load %arg3[%c0_51, %c0_52] : memref<4x512xf32, #tpu.memory_space<vmem>>, vector<4x512xf32>
    tpu.vector_store %arg3[%c0_51, %c0_52], %83 {strides = array<i32>} : memref<4x512xf32, #tpu.memory_space<vmem>>, vector<4x512xf32>,
    return
  }
}

module attributes {stable_mosaic.version = 11 : i64} {
  func.func @frelu_torgb_kernel(%arg0: memref<4x512xf32, #tpu.memory_space<vmem>>, %arg1: memref<9x4x512xf32, #tpu.memory_space<vmem>>, %arg2: memref<9x4x1xf32, #tpu.memory_space<vmem>>, %arg3: memref<3x4xf32, #tpu.memory_space<vmem>>, %arg4: memref<4x512xf32, #tpu.memory_space<vmem>>, %arg5: memref<3x512xf32, #tpu.memory_space<vmem>>) attributes {dimension_semantics = [], scalar_prefetch = 0 : i64, scratch_operands = 0 : i64, tpu.core_type = #tpu.core_type<tc>} {
    %c0 = arith.constant 0 : index
    %c0_0 = arith.constant 0 : index
    %0 = vector.load %arg0[%c0, %c0_0] : memref<4x512xf32, #tpu.memory_space<vmem>>, vector<4x512xf32>
    %c0_1 = arith.constant 0 : index
    %c0_2 = arith.constant 0 : index
    %c0_3 = arith.constant 0 : index
    %1 = vector.load %arg1[%c0_1, %c0_2, %c0_3] : memref<9x4x512xf32, #tpu.memory_space<vmem>>, vector<1x4x512xf32>
    %2 = vector.shape_cast %1 : vector<1x4x512xf32> to vector<4x512xf32>
    %c0_4 = arith.constant 0 : index
    %c0_5 = arith.constant 0 : index
    %c0_6 = arith.constant 0 : index
    %3 = vector.load %arg2[%c0_4, %c0_5, %c0_6] : memref<9x4x1xf32, #tpu.memory_space<vmem>>, vector<1x4x1xf32>
    %4 = vector.shape_cast %3 : vector<1x4x1xf32> to vector<4x1xf32>
    %5 = vector.broadcast %4 : vector<4x1xf32> to vector<4x512xf32>
    %6 = arith.mulf %2, %5 : vector<4x512xf32>
    %c1 = arith.constant 1 : index
    %c0_7 = arith.constant 0 : index
    %c0_8 = arith.constant 0 : index
    %7 = vector.load %arg1[%c1, %c0_7, %c0_8] : memref<9x4x512xf32, #tpu.memory_space<vmem>>, vector<1x4x512xf32>
    %8 = vector.shape_cast %7 : vector<1x4x512xf32> to vector<4x512xf32>
    %c1_9 = arith.constant 1 : index
    %c0_10 = arith.constant 0 : index
    %c0_11 = arith.constant 0 : index
    %9 = vector.load %arg2[%c1_9, %c0_10, %c0_11] : memref<9x4x1xf32, #tpu.memory_space<vmem>>, vector<1x4x1xf32>
    %10 = vector.shape_cast %9 : vector<1x4x1xf32> to vector<4x1xf32>
    %11 = vector.broadcast %10 : vector<4x1xf32> to vector<4x512xf32>
    %12 = arith.mulf %8, %11 : vector<4x512xf32>
    %13 = arith.addf %6, %12 : vector<4x512xf32>
    %c2 = arith.constant 2 : index
    %c0_12 = arith.constant 0 : index
    %c0_13 = arith.constant 0 : index
    %14 = vector.load %arg1[%c2, %c0_12, %c0_13] : memref<9x4x512xf32, #tpu.memory_space<vmem>>, vector<1x4x512xf32>
    %15 = vector.shape_cast %14 : vector<1x4x512xf32> to vector<4x512xf32>
    %c2_14 = arith.constant 2 : index
    %c0_15 = arith.constant 0 : index
    %c0_16 = arith.constant 0 : index
    %16 = vector.load %arg2[%c2_14, %c0_15, %c0_16] : memref<9x4x1xf32, #tpu.memory_space<vmem>>, vector<1x4x1xf32>
    %17 = vector.shape_cast %16 : vector<1x4x1xf32> to vector<4x1xf32>
    %18 = vector.broadcast %17 : vector<4x1xf32> to vector<4x512xf32>
    %19 = arith.mulf %15, %18 : vector<4x512xf32>
    %20 = arith.addf %13, %19 : vector<4x512xf32>
    %c3 = arith.constant 3 : index
    %c0_17 = arith.constant 0 : index
    %c0_18 = arith.constant 0 : index
    %21 = vector.load %arg1[%c3, %c0_17, %c0_18] : memref<9x4x512xf32, #tpu.memory_space<vmem>>, vector<1x4x512xf32>
    %22 = vector.shape_cast %21 : vector<1x4x512xf32> to vector<4x512xf32>
    %c3_19 = arith.constant 3 : index
    %c0_20 = arith.constant 0 : index
    %c0_21 = arith.constant 0 : index
    %23 = vector.load %arg2[%c3_19, %c0_20, %c0_21] : memref<9x4x1xf32, #tpu.memory_space<vmem>>, vector<1x4x1xf32>
    %24 = vector.shape_cast %23 : vector<1x4x1xf32> to vector<4x1xf32>
    %25 = vector.broadcast %24 : vector<4x1xf32> to vector<4x512xf32>
    %26 = arith.mulf %22, %25 : vector<4x512xf32>
    %27 = arith.addf %20, %26 : vector<4x512xf32>
    %c4 = arith.constant 4 : index
    %c0_22 = arith.constant 0 : index
    %c0_23 = arith.constant 0 : index
    %28 = vector.load %arg1[%c4, %c0_22, %c0_23] : memref<9x4x512xf32, #tpu.memory_space<vmem>>, vector<1x4x512xf32>
    %29 = vector.shape_cast %28 : vector<1x4x512xf32> to vector<4x512xf32>
    %c4_24 = arith.constant 4 : index
    %c0_25 = arith.constant 0 : index
    %c0_26 = arith.constant 0 : index
    %30 = vector.load %arg2[%c4_24, %c0_25, %c0_26] : memref<9x4x1xf32, #tpu.memory_space<vmem>>, vector<1x4x1xf32>
    %31 = vector.shape_cast %30 : vector<1x4x1xf32> to vector<4x1xf32>
    %32 = vector.broadcast %31 : vector<4x1xf32> to vector<4x512xf32>
    %33 = arith.mulf %29, %32 : vector<4x512xf32>
    %34 = arith.addf %27, %33 : vector<4x512xf32>
    %c5 = arith.constant 5 : index
    %c0_27 = arith.constant 0 : index
    %c0_28 = arith.constant 0 : index
    %35 = vector.load %arg1[%c5, %c0_27, %c0_28] : memref<9x4x512xf32, #tpu.memory_space<vmem>>, vector<1x4x512xf32>
    %36 = vector.shape_cast %35 : vector<1x4x512xf32> to vector<4x512xf32>
    %c5_29 = arith.constant 5 : index
    %c0_30 = arith.constant 0 : index
    %c0_31 = arith.constant 0 : index
    %37 = vector.load %arg2[%c5_29, %c0_30, %c0_31] : memref<9x4x1xf32, #tpu.memory_space<vmem>>, vector<1x4x1xf32>
    %38 = vector.shape_cast %37 : vector<1x4x1xf32> to vector<4x1xf32>
    %39 = vector.broadcast %38 : vector<4x1xf32> to vector<4x512xf32>
    %40 = arith.mulf %36, %39 : vector<4x512xf32>
    %41 = arith.addf %34, %40 : vector<4x512xf32>
    %c6 = arith.constant 6 : index
    %c0_32 = arith.constant 0 : index
    %c0_33 = arith.constant 0 : index
    %42 = vector.load %arg1[%c6, %c0_32, %c0_33] : memref<9x4x512xf32, #tpu.memory_space<vmem>>, vector<1x4x512xf32>
    %43 = vector.shape_cast %42 : vector<1x4x512xf32> to vector<4x512xf32>
    %c6_34 = arith.constant 6 : index
    %c0_35 = arith.constant 0 : index
    %c0_36 = arith.constant 0 : index
    %44 = vector.load %arg2[%c6_34, %c0_35, %c0_36] : memref<9x4x1xf32, #tpu.memory_space<vmem>>, vector<1x4x1xf32>
    %45 = vector.shape_cast %44 : vector<1x4x1xf32> to vector<4x1xf32>
    %46 = vector.broadcast %45 : vector<4x1xf32> to vector<4x512xf32>
    %47 = arith.mulf %43, %46 : vector<4x512xf32>
    %48 = arith.addf %41, %47 : vector<4x512xf32>
    %c7 = arith.constant 7 : index
    %c0_37 = arith.constant 0 : index
    %c0_38 = arith.constant 0 : index
    %49 = vector.load %arg1[%c7, %c0_37, %c0_38] : memref<9x4x512xf32, #tpu.memory_space<vmem>>, vector<1x4x512xf32>
    %50 = vector.shape_cast %49 : vector<1x4x512xf32> to vector<4x512xf32>
    %c7_39 = arith.constant 7 : index
    %c0_40 = arith.constant 0 : index
    %c0_41 = arith.constant 0 : index
    %51 = vector.load %arg2[%c7_39, %c0_40, %c0_41] : memref<9x4x1xf32, #tpu.memory_space<vmem>>, vector<1x4x1xf32>
    %52 = vector.shape_cast %51 : vector<1x4x1xf32> to vector<4x1xf32>
    %53 = vector.broadcast %52 : vector<4x1xf32> to vector<4x512xf32>
    %54 = arith.mulf %50, %53 : vector<4x512xf32>
    %55 = arith.addf %48, %54 : vector<4x512xf32>
    %c8 = arith.constant 8 : index
    %c0_42 = arith.constant 0 : index
    %c0_43 = arith.constant 0 : index
    %56 = vector.load %arg1[%c8, %c0_42, %c0_43] : memref<9x4x512xf32, #tpu.memory_space<vmem>>, vector<1x4x512xf32>
    %57 = vector.shape_cast %56 : vector<1x4x512xf32> to vector<4x512xf32>
    %c8_44 = arith.constant 8 : index
    %c0_45 = arith.constant 0 : index
    %c0_46 = arith.constant 0 : index
    %58 = vector.load %arg2[%c8_44, %c0_45, %c0_46] : memref<9x4x1xf32, #tpu.memory_space<vmem>>, vector<1x4x1xf32>
    %59 = vector.shape_cast %58 : vector<1x4x1xf32> to vector<4x1xf32>
    %60 = vector.broadcast %59 : vector<4x1xf32> to vector<4x512xf32>
    %61 = arith.mulf %57, %60 : vector<4x512xf32>
    %62 = arith.addf %55, %61 : vector<4x512xf32>
    %cst = arith.constant dense<0.000000e+00> : vector<4xf32>
    %63 = vector.multi_reduction <add>, %62, %cst [1] : vector<4x512xf32> to vector<4xf32>
    %64 = vector.shape_cast %63 : vector<4xf32> to vector<4x1xf32>
    %cst_47 = arith.constant 5.120000e+02 : f32
    %65 = vector.broadcast %cst_47 : f32 to vector<4x1xf32>
    %66 = arith.divf %64, %65 : vector<4x1xf32>
    %67 = vector.broadcast %66 : vector<4x1xf32> to vector<4x512xf32>
    %68 = arith.subf %62, %67 : vector<4x512xf32>
    %69 = vector.broadcast %66 : vector<4x1xf32> to vector<4x512xf32>
    %70 = arith.subf %62, %69 : vector<4x512xf32>
    %71 = arith.mulf %68, %70 : vector<4x512xf32>
    %cst_48 = arith.constant dense<0.000000e+00> : vector<4xf32>
    %72 = vector.multi_reduction <add>, %71, %cst_48 [1] : vector<4x512xf32> to vector<4xf32>
    %73 = vector.shape_cast %72 : vector<4xf32> to vector<4x1xf32>
    %cst_49 = arith.constant 5.120000e+02 : f32
    %74 = vector.broadcast %cst_49 : f32 to vector<4x1xf32>
    %75 = arith.divf %73, %74 : vector<4x1xf32>
    %76 = vector.broadcast %66 : vector<4x1xf32> to vector<4x512xf32>
    %77 = arith.subf %62, %76 : vector<4x512xf32>
    %cst_50 = arith.constant 9.99999974E-6 : f32
    %78 = vector.broadcast %cst_50 : f32 to vector<4x1xf32>
    %79 = arith.addf %75, %78 : vector<4x1xf32>
    %80 = math.rsqrt %79 : vector<4x1xf32>
    %81 = vector.broadcast %80 : vector<4x1xf32> to vector<4x512xf32>
    %82 = arith.mulf %77, %81 : vector<4x512xf32>
    %83 = arith.maximumf %0, %82 : vector<4x512xf32>
    %c0_51 = arith.constant 0 : index
    %c0_52 = arith.constant 0 : index
    %84 = vector.load %arg4[%c0_51, %c0_52] : memref<4x512xf32, #tpu.memory_space<vmem>>, vector<4x512xf32>
    tpu.vector_store %arg4[%c0_51, %c0_52], %83 {strides = array<i32>} : memref<4x512xf32, #tpu.memory_space<vmem>>, vector<4x512xf32>,
    %c0_53 = arith.constant 0 : index
    %c0_54 = arith.constant 0 : index
    %85 = vector.load %arg3[%c0_53, %c0_54] : memref<3x4xf32, #tpu.memory_space<vmem>>, vector<3x4xf32>
    %cst_55 = arith.constant dense<0.000000e+00> : vector<3x512xf32>
    %86 = tpu.matmul %85, %83, %cst_55 {dimension_numbers = #tpu.dot_dimension_numbers<[1], [0], [0], [1], [0, 0, 1, 1], [], []>} : vector<3x4xf32>, vector<4x512xf32>, vector<3x512xf32> -> vector<3x512xf32>
    %c0_56 = arith.constant 0 : index
    %c0_57 = arith.constant 0 : index
    %87 = vector.load %arg5[%c0_56, %c0_57] : memref<3x512xf32, #tpu.memory_space<vmem>>, vector<3x512xf32>
    tpu.vector_store %arg5[%c0_56, %c0_57], %86 {strides = array<i32>} : memref<3x512xf32, #tpu.memory_space<vmem>>, vector<3x512xf32>,
    return
  }
}

module attributes {stable_mosaic.version = 11 : i64} {
  func.func @conv_noise_pixnorm_kernel(%arg0: memref<36x512xf32, #tpu.memory_space<vmem>>, %arg1: memref<4x36xf32, #tpu.memory_space<vmem>>, %arg2: memref<4x1xf32, #tpu.memory_space<vmem>>, %arg3: memref<1x512xf32, #tpu.memory_space<vmem>>, %arg4: memref<1x1xf32, #tpu.memory_space<vmem>>, %arg5: memref<4x512xf32, #tpu.memory_space<vmem>>) attributes {dimension_semantics = [], scalar_prefetch = 0 : i64, scratch_operands = 0 : i64, tpu.core_type = #tpu.core_type<tc>} {
    %c0 = arith.constant 0 : index
    %c0_0 = arith.constant 0 : index
    %0 = vector.load %arg1[%c0, %c0_0] : memref<4x36xf32, #tpu.memory_space<vmem>>, vector<4x36xf32>
    %c0_1 = arith.constant 0 : index
    %c0_2 = arith.constant 0 : index
    %1 = vector.load %arg0[%c0_1, %c0_2] : memref<36x512xf32, #tpu.memory_space<vmem>>, vector<36x512xf32>
    %cst = arith.constant dense<0.000000e+00> : vector<4x512xf32>
    %2 = tpu.matmul %0, %1, %cst {dimension_numbers = #tpu.dot_dimension_numbers<[1], [0], [0], [1], [0, 0, 1, 1], [], []>} : vector<4x36xf32>, vector<36x512xf32>, vector<4x512xf32> -> vector<4x512xf32>
    %c0_3 = arith.constant 0 : index
    %c0_4 = arith.constant 0 : index
    %3 = vector.load %arg2[%c0_3, %c0_4] : memref<4x1xf32, #tpu.memory_space<vmem>>, vector<4x1xf32>
    %4 = vector.broadcast %3 : vector<4x1xf32> to vector<4x512xf32>
    %5 = arith.mulf %2, %4 : vector<4x512xf32>
    %c0_5 = arith.constant 0 : index
    %c0_6 = arith.constant 0 : index
    %6 = vector.load %arg4[%c0_5, %c0_6] : memref<1x1xf32, #tpu.memory_space<vmem>>, vector<1x1xf32>
    %c0_7 = arith.constant 0 : index
    %c0_8 = arith.constant 0 : index
    %7 = vector.load %arg3[%c0_7, %c0_8] : memref<1x512xf32, #tpu.memory_space<vmem>>, vector<1x512xf32>
    %8 = vector.broadcast %6 : vector<1x1xf32> to vector<1x512xf32>
    %9 = arith.mulf %8, %7 : vector<1x512xf32>
    %10 = vector.broadcast %9 : vector<1x512xf32> to vector<4x512xf32>
    %11 = arith.addf %5, %10 : vector<4x512xf32>
    %12 = arith.mulf %11, %11 : vector<4x512xf32>
    %cst_9 = arith.constant dense<0.000000e+00> : vector<512xf32>
    %13 = vector.multi_reduction <add>, %12, %cst_9 [0] : vector<4x512xf32> to vector<512xf32>
    %14 = vector.shape_cast %13 : vector<512xf32> to vector<1x512xf32>
    %cst_10 = arith.constant 4.000000e+00 : f32
    %15 = vector.broadcast %cst_10 : f32 to vector<1x512xf32>
    %16 = arith.divf %14, %15 : vector<1x512xf32>
    %cst_11 = arith.constant 9.99999993E-9 : f32
    %17 = vector.broadcast %cst_11 : f32 to vector<1x512xf32>
    %18 = arith.addf %16, %17 : vector<1x512xf32>
    %19 = math.rsqrt %18 : vector<1x512xf32>
    %20 = vector.broadcast %19 : vector<1x512xf32> to vector<4x512xf32>
    %21 = arith.mulf %11, %20 : vector<4x512xf32>
    %c0_12 = arith.constant 0 : index
    %c0_13 = arith.constant 0 : index
    %22 = vector.load %arg5[%c0_12, %c0_13] : memref<4x512xf32, #tpu.memory_space<vmem>>, vector<4x512xf32>
    tpu.vector_store %arg5[%c0_12, %c0_13], %21 {strides = array<i32>} : memref<4x512xf32, #tpu.memory_space<vmem>>, vector<4x512xf32>,
    return
  }
}

module attributes {stable_mosaic.version = 11 : i64} {
  func.func @upsample_add_sig_kernel(%arg0: memref<6x16xf32, #tpu.memory_space<vmem>>, %arg1: memref<16x64xf32, #tpu.memory_space<vmem>>, %arg2: memref<6x64xf32, #tpu.memory_space<vmem>>, %arg3: memref<6x64xf32, #tpu.memory_space<vmem>>, %arg4: memref<6x64xf32, #tpu.memory_space<vmem>>) attributes {dimension_semantics = [], scalar_prefetch = 0 : i64, scratch_operands = 0 : i64, tpu.core_type = #tpu.core_type<tc>} {
    %c0 = arith.constant 0 : index
    %c0_0 = arith.constant 0 : index
    %0 = vector.load %arg0[%c0, %c0_0] : memref<6x16xf32, #tpu.memory_space<vmem>>, vector<6x16xf32>
    %c0_1 = arith.constant 0 : index
    %c0_2 = arith.constant 0 : index
    %1 = vector.load %arg1[%c0_1, %c0_2] : memref<16x64xf32, #tpu.memory_space<vmem>>, vector<16x64xf32>
    %cst = arith.constant dense<0.000000e+00> : vector<6x64xf32>
    %2 = tpu.matmul %0, %1, %cst {dimension_numbers = #tpu.dot_dimension_numbers<[1], [0], [0], [1], [0, 0, 1, 1], [], []>} : vector<6x16xf32>, vector<16x64xf32>, vector<6x64xf32> -> vector<6x64xf32>
    %c0_3 = arith.constant 0 : index
    %c0_4 = arith.constant 0 : index
    %3 = vector.load %arg2[%c0_3, %c0_4] : memref<6x64xf32, #tpu.memory_space<vmem>>, vector<6x64xf32>
    %4 = arith.addf %3, %2 : vector<6x64xf32>
    %c0_5 = arith.constant 0 : index
    %c0_6 = arith.constant 0 : index
    %5 = vector.load %arg3[%c0_5, %c0_6] : memref<6x64xf32, #tpu.memory_space<vmem>>, vector<6x64xf32>
    tpu.vector_store %arg3[%c0_5, %c0_6], %4 {strides = array<i32>} : memref<6x64xf32, #tpu.memory_space<vmem>>, vector<6x64xf32>,
    %cst_7 = arith.constant 0.000000e+00 : f32
    %6 = vector.broadcast %cst_7 : f32 to vector<6x64xf32>
    %7 = arith.subf %6, %4 : vector<6x64xf32>
    %8 = math.exp %7 : vector<6x64xf32>
    %cst_8 = arith.constant 1.000000e+00 : f32
    %9 = vector.broadcast %cst_8 : f32 to vector<6x64xf32>
    %10 = arith.addf %9, %8 : vector<6x64xf32>
    %cst_9 = arith.constant 1.000000e+00 : f32
    %11 = vector.broadcast %cst_9 : f32 to vector<6x64xf32>
    %12 = arith.divf %11, %10 : vector<6x64xf32>
    %c0_10 = arith.constant 0 : index
    %c0_11 = arith.constant 0 : index
    %13 = vector.load %arg4[%c0_10, %c0_11] : memref<6x64xf32, #tpu.memory_space<vmem>>, vector<6x64xf32>
    tpu.vector_store %arg4[%c0_10, %c0_11], %12 {strides = array<i32>} : memref<6x64xf32, #tpu.memory_space<vmem>>, vector<6x64xf32>,
    return
  }
}

module attributes {stable_mosaic.version = 11 : i64} {
  func.func @upsample_add_sig_kernel(%arg0: memref<6x64xf32, #tpu.memory_space<vmem>>, %arg1: memref<64x256xf32, #tpu.memory_space<vmem>>, %arg2: memref<6x256xf32, #tpu.memory_space<vmem>>, %arg3: memref<6x256xf32, #tpu.memory_space<vmem>>, %arg4: memref<6x256xf32, #tpu.memory_space<vmem>>) attributes {dimension_semantics = [], scalar_prefetch = 0 : i64, scratch_operands = 0 : i64, tpu.core_type = #tpu.core_type<tc>} {
    %c0 = arith.constant 0 : index
    %c0_0 = arith.constant 0 : index
    %0 = vector.load %arg0[%c0, %c0_0] : memref<6x64xf32, #tpu.memory_space<vmem>>, vector<6x64xf32>
    %c0_1 = arith.constant 0 : index
    %c0_2 = arith.constant 0 : index
    %1 = vector.load %arg1[%c0_1, %c0_2] : memref<64x256xf32, #tpu.memory_space<vmem>>, vector<64x256xf32>
    %cst = arith.constant dense<0.000000e+00> : vector<6x256xf32>
    %2 = tpu.matmul %0, %1, %cst {dimension_numbers = #tpu.dot_dimension_numbers<[1], [0], [0], [1], [0, 0, 1, 1], [], []>} : vector<6x64xf32>, vector<64x256xf32>, vector<6x256xf32> -> vector<6x256xf32>
    %c0_3 = arith.constant 0 : index
    %c0_4 = arith.constant 0 : index
    %3 = vector.load %arg2[%c0_3, %c0_4] : memref<6x256xf32, #tpu.memory_space<vmem>>, vector<6x256xf32>
    %4 = arith.addf %3, %2 : vector<6x256xf32>
    %c0_5 = arith.constant 0 : index
    %c0_6 = arith.constant 0 : index
    %5 = vector.load %arg3[%c0_5, %c0_6] : memref<6x256xf32, #tpu.memory_space<vmem>>, vector<6x256xf32>
    tpu.vector_store %arg3[%c0_5, %c0_6], %4 {strides = array<i32>} : memref<6x256xf32, #tpu.memory_space<vmem>>, vector<6x256xf32>,
    %cst_7 = arith.constant 0.000000e+00 : f32
    %6 = vector.broadcast %cst_7 : f32 to vector<6x256xf32>
    %7 = arith.subf %6, %4 : vector<6x256xf32>
    %8 = math.exp %7 : vector<6x256xf32>
    %cst_8 = arith.constant 1.000000e+00 : f32
    %9 = vector.broadcast %cst_8 : f32 to vector<6x256xf32>
    %10 = arith.addf %9, %8 : vector<6x256xf32>
    %cst_9 = arith.constant 1.000000e+00 : f32
    %11 = vector.broadcast %cst_9 : f32 to vector<6x256xf32>
    %12 = arith.divf %11, %10 : vector<6x256xf32>
    %c0_10 = arith.constant 0 : index
    %c0_11 = arith.constant 0 : index
    %13 = vector.load %arg4[%c0_10, %c0_11] : memref<6x256xf32, #tpu.memory_space<vmem>>, vector<6x256xf32>
    tpu.vector_store %arg4[%c0_10, %c0_11], %12 {strides = array<i32>} : memref<6x256xf32, #tpu.memory_space<vmem>>, vector<6x256xf32>,
    return
  }
}

</mosaic_0001>

<llo_original>
// kernel: _lambda_.17
$region0: #{_lambda_.17}
  #allocation0 [shape = 'u32[]', space=smem, size = 0x4, offset = 0x4, fixed_abs, tag = 'smem constant byte address 0x4 - core index']
  #allocation1 [shape = 'u32[144,128]{1,0:T(1,128)}', space=vmem, size = 0x12000, scoped, tag = 'internal scratch']
  %s0 = inlined_call_operand.vmem [shape: f32[2,96], index: 0, kind: input, shape index: {}]
  %s1 = inlined_call_operand.vmem [shape: f32[96,84], index: 1, kind: input, shape index: {}]
  %s2 = inlined_call_operand.vmem [shape: f32[2,84], index: 2, kind: output, shape index: {}]
  %s3 = sld [smem:[#allocation0]]
  $region18: #{_lambda_.17} parent=0
    _
  %s5 = ssub.s32 1, %s3
  %s6 = scalar_select 0, %s5, %s3
  // Predicated region
  $region2: #{_lambda_.17} parent=0 // pred_check
    _
  $region3: #{_lambda_.17} parent=0 // pred_check_branch
    %8 = sbr.rel (0) target = $region5
  $region4: #{_lambda_.17} parent=0 // pred_region
    _
  $region5: #{_lambda_.17} parent=0 // pred_fallthru
    _
  // Predicated region
  $region6: #{_lambda_.17} parent=0 // pred_check
    _
  $region7: #{_lambda_.17} parent=0 // pred_check_branch
    %10 = sbr.rel (0) target = $region9
  $region8: #{_lambda_.17} parent=0 // pred_region
    _
  $region9: #{_lambda_.17} parent=0 // pred_fallthru
    _
  %v11 = vld [vmem:[%s0] sm:$0x3]
  %v12 = vld [vmem:[%s1] sm:$0xff]
  %v13 = vld [vmem:[%s1 + $0x8] sm:$0xff]
  %v14 = vld [vmem:[%s1 + $0x10] sm:$0xff]
  %v15 = vld [vmem:[%s1 + $0x18] sm:$0xff]
  %v16 = vld [vmem:[%s1 + $0x20] sm:$0xff]
  %v17 = vld [vmem:[%s1 + $0x28] sm:$0xff]
  %v18 = vld [vmem:[%s1 + $0x30] sm:$0xff]
  %v19 = vld [vmem:[%s1 + $0x38] sm:$0xff]
  %v20 = vld [vmem:[%s1 + $0x40] sm:$0xff]
  %v21 = vld [vmem:[%s1 + $0x48] sm:$0xff]
  %v22 = vld [vmem:[%s1 + $0x50] sm:$0xff]
  %v23 = vld [vmem:[%s1 + $0x58] sm:$0xff]
  %vm24 = vcmask 785408
  %v26 = vsel %vm24, %v11, 0
  %28 = vmatprep.subr.mxu0 0.0
  %29 = vmatpush1.msra.mxu0 0.0
  %30 = vmatprep.subr.mxu0 0.0
  %31 = vmatpush1.msra.mxu0 0.0
  %32 = vmatprep.subr.mxu0 0.0
  %33 = vmatpush1.msra.mxu0 0.0
  %34 = vmatprep.subr.mxu0 0.0
  %35 = vmatpush1.msra.mxu0 0.0
  %36 = vmatprep.subr.mxu0 0.0
  %37 = vmatpush1.msra.mxu0 %v23
  %38 = vmatprep.subr.mxu0 0.0
  %39 = vmatpush1.msra.mxu0 %v22
  %40 = vmatprep.subr.mxu0 0.0
  %41 = vmatpush1.msra.mxu0 %v21
  %42 = vmatprep.subr.mxu0 0.0
  %43 = vmatpush1.msra.mxu0 %v20
  %44 = vmatprep.subr.mxu0 0.0
  %45 = vmatpush1.msra.mxu0 %v19
  %46 = vmatprep.subr.mxu0 0.0
  %47 = vmatpush1.msra.mxu0 %v18
  %48 = vmatprep.subr.mxu0 0.0
  %49 = vmatpush1.msra.mxu0 %v17
  %50 = vmatprep.subr.mxu0 0.0
  %51 = vmatpush1.msra.mxu0 %v16
  %52 = vmatprep.subr.mxu0 0.0
  %53 = vmatpush1.msra.mxu0 %v15
  %54 = vmatprep.subr.mxu0 0.0
  %55 = vmatpush1.msra.mxu0 %v14
  %56 = vmatprep.subr.mxu0 0.0
  %57 = vmatpush1.msra.mxu0 %v13
  %58 = vmatprep.subr.mxu0 0.0
  %59 = vmatpush1.msra.mxu0 %v12
  %60 = vmatprep.subr.mxu0 0.0
  %61 = vmatpush2.msra.mxu0 0.0
  %62 = vmatprep.subr.mxu0 0.0
  %63 = vmatpush2.msra.mxu0 0.0
  %64 = vmatprep.subr.mxu0 0.0
  %65 = vmatpush2.msra.mxu0 0.0
  %66 = vmatprep.subr.mxu0 0.0
  %67 = vmatpush2.msra.mxu0 0.0
  %68 = vmatprep.subr.mxu0 0.0
  %69 = vmatpush2.msra.mxu0 0.0
  %70 = vmatprep.subr.mxu0 0.0
  %71 = vmatpush2.msra.mxu0 0.0
  %72 = vmatprep.subr.mxu0 0.0
  %73 = vmatpush2.msra.mxu0 0.0
  %74 = vmatprep.subr.mxu0 0.0
  %75 = vmatpush2.msra.mxu0 0.0
  %76 = vmatprep.subr.mxu0 0.0
  %77 = vmatpush2.msra.mxu0 0.0
  %78 = vmatprep.subr.mxu0 0.0
  %79 = vmatpush2.msra.mxu0 0.0
  %80 = vmatprep.subr.mxu0 0.0
  %81 = vmatpush2.msra.mxu0 0.0
  %82 = vmatprep.subr.mxu0 0.0
  %83 = vmatpush2.msra.mxu0 0.0
  %84 = vmatprep.subr.mxu0 0.0
  %85 = vmatpush2.msra.mxu0 0.0
  %86 = vmatprep.subr.mxu0 0.0
  %87 = vmatpush2.msra.mxu0 0.0
  %88 = vmatprep.subr.mxu0 0.0
  %89 = vmatpush2.msra.mxu0 0.0
  %90 = vmatprep.subr.mxu0 0.0
  %91 = vmatpush2.msra.mxu0 0.0
  %92 = vmatprep.mubr.f32.mxu0 0.0
  %93 = vmatmul.mubr.f32.gmra.mxu0 %v26
  %v94 = vpop.f32.mrf.mxu0
  %v95 = vadd.f32 0.0, %v94
  %v96 = vpop.f32.mrf.mxu0
  %97 = vdwg.mxu0
  %vm98 = vcmask 680960
  %99 = vst.msk [vmem:[%s2] sm:$0x3] %vm98, %v95
  // Predicated region
  $region10: #{_lambda_.17} parent=0 // pred_check
    _
  $region11: #{_lambda_.17} parent=0 // pred_check_branch
    %101 = sbr.rel (0) target = $region13
  $region12: #{_lambda_.17} parent=0 // pred_region
    _
  $region13: #{_lambda_.17} parent=0 // pred_fallthru
    _
  // Predicated region
  $region14: #{_lambda_.17} parent=0 // pred_check
    _
  $region15: #{_lambda_.17} parent=0 // pred_check_branch
    %103 = sbr.rel (0) target = $region17
  $region16: #{_lambda_.17} parent=0 // pred_region
    _
  $region17: #{_lambda_.17} parent=0 // pred_fallthru
    _

// kernel: _lambda_.16
$region0: #{_lambda_.16}
  #allocation0 [shape = 'u32[]', space=smem, size = 0x4, offset = 0x4, fixed_abs, tag = 'smem constant byte address 0x4 - core index']
  #allocation1 [shape = 'u32[144,128]{1,0:T(1,128)}', space=vmem, size = 0x12000, scoped, tag = 'internal scratch']
  %s0 = inlined_call_operand.vmem [shape: f32[2,32], index: 0, kind: input, shape index: {}]
  %s1 = inlined_call_operand.hbm [shape: f32[2,32,32], index: 1, kind: input, shape index: {}]
  %s2 = inlined_call_operand.vmem [shape: f32[2,32], index: 2, kind: output, shape index: {}]
  %s3 = sld [smem:[#allocation0]]
  $region22: #{_lambda_.16} parent=0
    _
  %s5 = ssub.s32 1, %s3
  %s6 = scalar_select 0, %s5, %s3
  $region1: #{_lambda_.16} parent=0
    #allocation2 [shape = 'u8[32768]{0}', space=vmem, size = 0x8000, scoped, tag = 'input window, operand 1, single buffered']
    #allocation3 [shape = 's32[1]{0}', space=sflag, size = 0x4, scoped, tag = 'scoped memory for _lambda_.16']
    %7 = vsyncpa [#allocation3], 0
    // Predicated region
    $region2: #{_lambda_.16} parent=1 // pred_check
      _
    $region3: #{_lambda_.16} parent=1 // pred_check_branch
      %9 = sbr.rel (0) target = $region5
    $region4: #{_lambda_.16} parent=1 // pred_region
      _
    $region5: #{_lambda_.16} parent=1 // pred_fallthru
      _
    // Predicated region
    $region6: #{_lambda_.16} parent=1 // pred_check
      _
    $region7: #{_lambda_.16} parent=1 // pred_check_branch
      %11 = sbr.rel (0) target = $region9
    $region8: #{_lambda_.16} parent=1 // pred_region
      %s13 = ssub.s32 1024, 1024
      %14 = vsyncadd [#allocation3], %s13
      %s15 = sshll.u32 [#allocation2], 4
      %s16 = int_to_ptr.vmem [resolvable:$true] %s15
      %21 = dma.hbm_to_vmem [thread:$0]  %s1, 1024, %s16, [#allocation3], 128, 128, 8
    $region9: #{_lambda_.16} parent=1 // pred_fallthru
      _
    // Predicated region
    $region10: #{_lambda_.16} parent=1 // pred_check
      _
    $region11: #{_lambda_.16} parent=1 // pred_check_branch
      %23 = sbr.rel (0) target = $region13
    $region12: #{_lambda_.16} parent=1 // pred_region
      %24 = dma.done [#allocation3], 1024
    $region13: #{_lambda_.16} parent=1 // pred_fallthru
      _
    %v25 = vld [vmem:[%s0] sm:$0x3]
    %v26 = vld [vmem:[#allocation2] sm:$0xff]
    %v27 = vld [vmem:[#allocation2 + $0x8] sm:$0xff]
    %v28 = vld [vmem:[#allocation2 + $0x10] sm:$0xff]
    %v29 = vld [vmem:[#allocation2 + $0x18] sm:$0xff]
    %vm30 = vcmask 261120
    %v32 = vsel %vm30, %v25, 0
    %34 = vmatprep.subr.mxu0 0.0
    %35 = vmatpush1.msra.mxu0 0.0
    %36 = vmatprep.subr.mxu0 0.0
    %37 = vmatpush1.msra.mxu0 0.0
    %38 = vmatprep.subr.mxu0 0.0
    %39 = vmatpush1.msra.mxu0 0.0
    %40 = vmatprep.subr.mxu0 0.0
    %41 = vmatpush1.msra.mxu0 0.0
    %42 = vmatprep.subr.mxu0 0.0
    %43 = vmatpush1.msra.mxu0 0.0
    %44 = vmatprep.subr.mxu0 0.0
    %45 = vmatpush1.msra.mxu0 0.0
    %46 = vmatprep.subr.mxu0 0.0
    %47 = vmatpush1.msra.mxu0 0.0
    %48 = vmatprep.subr.mxu0 0.0
    %49 = vmatpush1.msra.mxu0 0.0
    %50 = vmatprep.subr.mxu0 0.0
    %51 = vmatpush1.msra.mxu0 0.0
    %52 = vmatprep.subr.mxu0 0.0
    %53 = vmatpush1.msra.mxu0 0.0
    %54 = vmatprep.subr.mxu0 0.0
    %55 = vmatpush1.msra.mxu0 0.0
    %56 = vmatprep.subr.mxu0 0.0
    %57 = vmatpush1.msra.mxu0 0.0
    %58 = vmatprep.subr.mxu0 0.0
    %59 = vmatpush1.msra.mxu0 %v29
    %60 = vmatprep.subr.mxu0 0.0
    %61 = vmatpush1.msra.mxu0 %v28
    %62 = vmatprep.subr.mxu0 0.0
    %63 = vmatpush1.msra.mxu0 %v27
    %64 = vmatprep.subr.mxu0 0.0
    %65 = vmatpush1.msra.mxu0 %v26
    %66 = vmatprep.subr.mxu0 0.0
    %67 = vmatpush2.msra.mxu0 0.0
    %68 = vmatprep.subr.mxu0 0.0
    %69 = vmatpush2.msra.mxu0 0.0
    %70 = vmatprep.subr.mxu0 0.0
    %71 = vmatpush2.msra.mxu0 0.0
    %72 = vmatprep.subr.mxu0 0.0
    %73 = vmatpush2.msra.mxu0 0.0
    %74 = vmatprep.subr.mxu0 0.0
    %75 = vmatpush2.msra.mxu0 0.0
    %76 = vmatprep.subr.mxu0 0.0
    %77 = vmatpush2.msra.mxu0 0.0
    %78 = vmatprep.subr.mxu0 0.0
    %79 = vmatpush2.msra.mxu0 0.0
    %80 = vmatprep.subr.mxu0 0.0
    %81 = vmatpush2.msra.mxu0 0.0
    %82 = vmatprep.subr.mxu0 0.0
    %83 = vmatpush2.msra.mxu0 0.0
    %84 = vmatprep.subr.mxu0 0.0
    %85 = vmatpush2.msra.mxu0 0.0
    %86 = vmatprep.subr.mxu0 0.0
    %87 = vmatpush2.msra.mxu0 0.0
    %88 = vmatprep.subr.mxu0 0.0
    %89 = vmatpush2.msra.mxu0 0.0
    %90 = vmatprep.subr.mxu0 0.0
    %91 = vmatpush2.msra.mxu0 0.0
    %92 = vmatprep.subr.mxu0 0.0
    %93 = vmatpush2.msra.mxu0 0.0
    %94 = vmatprep.subr.mxu0 0.0
    %95 = vmatpush2.msra.mxu0 0.0
    %96 = vmatprep.subr.mxu0 0.0
    %97 = vmatpush2.msra.mxu0 0.0
    %98 = vmatprep.mubr.f32.mxu0 0.0
    %99 = vmatmul.mubr.f32.gmra.mxu0 %v32
    %v100 = vpop.f32.mrf.mxu0
    %v101 = vadd.f32 0.0, %v100
    %v102 = vpop.f32.mrf.mxu0
    %103 = vdwg.mxu0
    %v104 = vmul.f32 %v101, %v101
    %vm105 = vcmask 254976
    %v106 = vsel %vm105, %v104, 0.0
    %107 = vadd.xlane.f32.xlu0 %v106
    %v108 = vpop.xlane.xlu0 %107
    %v109 = vrcp.pop 32.0
    %v110 = vmul.f32 %v108, %v109
    %v111 = vadd.f32 %v110, 1e-08
    %v112 = vrsqrt.pop %v111
    %v113 = vmul.f32 %v101, %v112
    %v114 = vmax.f32 %v113, 0.0
    %vm115 = vcmp.ne.f32.partialorder %v113, %v113
    %v116 = vadd.f32 %v113, 0.0
    %v117 = vand.u32 2147483647, %v113
    %v118 = vsub.f32 0.0, %v117
    %v119 = vmul.f32 %v118, 1.442695
    %v120 = vpow.pop %v119
    %v121 = vadd.f32 %v120, 1.0
    %v122 = vlog2.pop %v121
    %v123 = vmul.f32 %v122, 0.6931472
    %v124 = vmul.f32 -0.5, %v120
    %v125 = vadd.f32 %v124, 1.0
    %v126 = vmul.f32 %v125, %v120
    %v127 = vand.u32 2147483647, %v120
    %vm128 = vcmp.lt.f32.partialorder %v127, 0.0004427343
    %v129 = vsel %vm128, %v126, %v123
    %v130 = vadd.f32 %v114, %v129
    %v131 = vsel %vm115, %v116, %v130
    %v132 = vtanh.pop %v131
    %v133 = vmul.f32 %v113, %v132
    %s134 = scalar_lea.vmem [#allocation2], 32
    %v135 = vld [vmem:[%s134] sm:$0xff]
    %v136 = vld [vmem:[%s134 + $0x8] sm:$0xff]
    %v137 = vld [vmem:[%s134 + $0x10] sm:$0xff]
    %v138 = vld [vmem:[%s134 + $0x18] sm:$0xff]
    %v140 = vsel %vm30, %v133, 0
    %142 = vmatprep.subr.mxu0 0.0
    %143 = vmatpush1.msra.mxu0 0.0
    %144 = vmatprep.subr.mxu0 0.0
    %145 = vmatpush1.msra.mxu0 0.0
    %146 = vmatprep.subr.mxu0 0.0
    %147 = vmatpush1.msra.mxu0 0.0
    %148 = vmatprep.subr.mxu0 0.0
    %149 = vmatpush1.msra.mxu0 0.0
    %150 = vmatprep.subr.mxu0 0.0
    %151 = vmatpush1.msra.mxu0 0.0
    %152 = vmatprep.subr.mxu0 0.0
    %153 = vmatpush1.msra.mxu0 0.0
    %154 = vmatprep.subr.mxu0 0.0
    %155 = vmatpush1.msra.mxu0 0.0
    %156 = vmatprep.subr.mxu0 0.0
    %157 = vmatpush1.msra.mxu0 0.0
    %158 = vmatprep.subr.mxu0 0.0
    %159 = vmatpush1.msra.mxu0 0.0
    %160 = vmatprep.subr.mxu0 0.0
    %161 = vmatpush1.msra.mxu0 0.0
    %162 = vmatprep.subr.mxu0 0.0
    %163 = vmatpush1.msra.mxu0 0.0
    %164 = vmatprep.subr.mxu0 0.0
    %165 = vmatpush1.msra.mxu0 0.0
    %166 = vmatprep.subr.mxu0 0.0
    %167 = vmatpush1.msra.mxu0 %v138
    %168 = vmatprep.subr.mxu0 0.0
    %169 = vmatpush1.msra.mxu0 %v137
    %170 = vmatprep.subr.mxu0 0.0
    %171 = vmatpush1.msra.mxu0 %v136
    %172 = vmatprep.subr.mxu0 0.0
    %173 = vmatpush1.msra.mxu0 %v135
    %174 = vmatprep.subr.mxu0 0.0
    %175 = vmatpush2.msra.mxu0 0.0
    %176 = vmatprep.subr.mxu0 0.0
    %177 = vmatpush2.msra.mxu0 0.0
    %178 = vmatprep.subr.mxu0 0.0
    %179 = vmatpush2.msra.mxu0 0.0
    %180 = vmatprep.subr.mxu0 0.0
    %181 = vmatpush2.msra.mxu0 0.0
    %182 = vmatprep.subr.mxu0 0.0
    %183 = vmatpush2.msra.mxu0 0.0
    %184 = vmatprep.subr.mxu0 0.0
    %185 = vmatpush2.msra.mxu0 0.0
    %186 = vmatprep.subr.mxu0 0.0
    %187 = vmatpush2.msra.mxu0 0.0
    %188 = vmatprep.subr.mxu0 0.0
    %189 = vmatpush2.msra.mxu0 0.0
    %190 = vmatprep.subr.mxu0 0.0
    %191 = vmatpush2.msra.mxu0 0.0
    %192 = vmatprep.subr.mxu0 0.0
    %193 = vmatpush2.msra.mxu0 0.0
    %194 = vmatprep.subr.mxu0 0.0
    %195 = vmatpush2.msra.mxu0 0.0
    %196 = vmatprep.subr.mxu0 0.0
    %197 = vmatpush2.msra.mxu0 0.0
    %198 = vmatprep.subr.mxu0 0.0
    %199 = vmatpush2.msra.mxu0 0.0
    %200 = vmatprep.subr.mxu0 0.0
    %201 = vmatpush2.msra.mxu0 0.0
    %202 = vmatprep.subr.mxu0 0.0
    %203 = vmatpush2.msra.mxu0 0.0
    %204 = vmatprep.subr.mxu0 0.0
    %205 = vmatpush2.msra.mxu0 0.0
    %206 = vmatprep.mubr.f32.mxu0 0.0
    %207 = vmatmul.mubr.f32.gmra.mxu0 %v140
    %v208 = vpop.f32.mrf.mxu0
    %v209 = vadd.f32 0.0, %v208
    %v210 = vpop.f32.mrf.mxu0
    %211 = vdwg.mxu0
    %v212 = vmul.f32 %v209, %v209
    %v213 = vsel %vm105, %v212, 0.0
    %214 = vadd.xlane.f32.xlu0 %v213
    %v215 = vpop.xlane.xlu0 %214
    %v216 = vmul.f32 %v215, %v109
    %v217 = vadd.f32 %v216, 1e-08
    %v218 = vrsqrt.pop %v217
    %v219 = vmul.f32 %v209, %v218
    %v220 = vmax.f32 %v219, 0.0
    %vm221 = vcmp.ne.f32.partialorder %v219, %v219
    %v222 = vadd.f32 %v219, 0.0
    %v223 = vand.u32 2147483647, %v219
    %v224 = vsub.f32 0.0, %v223
    %v225 = vmul.f32 %v224, 1.442695
    %v226 = vpow.pop %v225
    %v227 = vadd.f32 %v226, 1.0
    %v228 = vlog2.pop %v227
    %v229 = vmul.f32 %v228, 0.6931472
    %v230 = vmul.f32 -0.5, %v226
    %v231 = vadd.f32 %v230, 1.0
    %v232 = vmul.f32 %v231, %v226
    %v233 = vand.u32 2147483647, %v226
    %vm234 = vcmp.lt.f32.partialorder %v233, 0.0004427343
    %v235 = vsel %vm234, %v232, %v229
    %v236 = vadd.f32 %v220, %v235
    %v237 = vsel %vm221, %v222, %v236
    %v238 = vtanh.pop %v237
    %v239 = vmul.f32 %v219, %v238
    %240 = vst.msk [vmem:[%s2] sm:$0x3] %vm105, %v239
    // Predicated region
    $region14: #{_lambda_.16} parent=1 // pred_check
      _
    $region15: #{_lambda_.16} parent=1 // pred_check_branch
      %242 = sbr.rel (0) target = $region17
    $region16: #{_lambda_.16} parent=1 // pred_region
      _
    $region17: #{_lambda_.16} parent=1 // pred_fallthru
      _
    // Predicated region
    $region18: #{_lambda_.16} parent=1 // pred_check
      _
    $region19: #{_lambda_.16} parent=1 // pred_check_branch
      %244 = sbr.rel (0) target = $region21
    $region20: #{_lambda_.16} parent=1 // pred_region
      _
    $region21: #{_lambda_.16} parent=1 // pred_fallthru
      _
    %245 = vsyncpa [#allocation3], 1

// kernel: mul.72
$region0: #{mul.72}
  #allocation0 [shape = 's32[1]{0}', space=sflag, size = 0x4, scoped, tag = 'scoped memory for mul.72']
  %s0 = inlined_call_operand.vmem [shape: f32[16,2], index: 0, kind: input, shape index: {}]
  %s1 = inlined_call_operand.vmem [shape: f32[16,2,4,4], index: 1, kind: output, shape index: {}]
  // Predicated region
  $region2: #{mul.72} parent=0 // pred_check
    _
  $region3: #{mul.72} parent=0 // pred_check_branch
    %3 = sbr.rel (0) target = $region5
  $region4: #{mul.72} parent=0 // pred_region
    _
  $region5: #{mul.72} parent=0 // pred_fallthru
    _
  %v4 = vld [vmem:[%s0] ss:$0 sm:$0xff]
  %5 = vst [vmem:[%s1] sm:$0xf] %v4
  %s6 = scalar_lea.vmem %s0, 1
  %v7 = vld [vmem:[%s6] ss:$0 sm:$0xff]
  %s8 = scalar_lea.vmem %s1, 16
  %9 = vst [vmem:[%s8] sm:$0xf] %v7
  %s10 = scalar_lea.vmem %s1, 4
  %11 = vst [vmem:[%s10] sm:$0xf] %v4
  %s12 = scalar_lea.vmem %s1, 20
  %13 = vst [vmem:[%s12] sm:$0xf] %v7
  %s14 = scalar_lea.vmem %s1, 8
  %15 = vst [vmem:[%s14] sm:$0xf] %v4
  %s16 = scalar_lea.vmem %s1, 24
  %17 = vst [vmem:[%s16] sm:$0xf] %v7
  %s18 = scalar_lea.vmem %s1, 12
  %19 = vst [vmem:[%s18] sm:$0xf] %v4
  %s20 = scalar_lea.vmem %s1, 28
  %21 = vst [vmem:[%s20] sm:$0xf] %v7

// kernel: _lambda_.18
$region0: #{_lambda_.18}
  #allocation0 [shape = 'u32[]', space=smem, size = 0x4, offset = 0x4, fixed_abs, tag = 'smem constant byte address 0x4 - core index']
  #allocation1 [shape = 'u32[144,128]{1,0:T(1,128)}', space=vmem, size = 0x12000, scoped, tag = 'internal scratch']
  #allocation2 [shape = 'f32[1,1]{1,0:T(1,128)S(1)}', space=vmem, size = 0x200, scoped, tag = 'scoped memory for _lambda_.18']
  %s0 = inlined_call_operand.vmem [shape: f32[512,32], index: 0, kind: input, shape index: {}]
  %s1 = inlined_call_operand.vmem [shape: f32[16,512], index: 1, kind: input, shape index: {}]
  %s2 = inlined_call_operand.vmem [shape: f32[16,1], index: 2, kind: input, shape index: {}]
  %s3 = inlined_call_operand.vmem [shape: f32[1,32], index: 3, kind: input, shape index: {}]
  %s4 = inlined_call_operand.<no memory space> [shape: f32[1,1], index: 4, kind: input, shape index: {}]
  %s5 = inlined_call_operand.vmem [shape: f32[16,32], index: 5, kind: output, shape index: {}]
  %s6 = sld [smem:[#allocation0]]
  $region30: #{_lambda_.18} parent=0
    _
  %s8 = ssub.s32 1, %s6
  %s9 = scalar_select 0, %s8, %s6
  %v10 = vstv %s4
  %11 = vst [vmem:[#allocation2] sm:$0x1] %v10
  // Predicated region
  $region2: #{_lambda_.18} parent=0 // pred_check
    _
  $region3: #{_lambda_.18} parent=0 // pred_check_branch
    %13 = sbr.rel (0) target = $region5
  $region4: #{_lambda_.18} parent=0 // pred_region
    _
  $region5: #{_lambda_.18} parent=0 // pred_fallthru
    _
  // Predicated region
  $region6: #{_lambda_.18} parent=0 // pred_check
    _
  $region7: #{_lambda_.18} parent=0 // pred_check_branch
    %15 = sbr.rel (0) target = $region9
  $region8: #{_lambda_.18} parent=0 // pred_region
    _
  $region9: #{_lambda_.18} parent=0 // pred_fallthru
    _
  // Predicated region
  $region10: #{_lambda_.18} parent=0 // pred_check
    _
  $region11: #{_lambda_.18} parent=0 // pred_check_branch
    %17 = sbr.rel (0) target = $region13
  $region12: #{_lambda_.18} parent=0 // pred_region
    _
  $region13: #{_lambda_.18} parent=0 // pred_fallthru
    _
  // Predicated region
  $region14: #{_lambda_.18} parent=0 // pred_check
    _
  $region15: #{_lambda_.18} parent=0 // pred_check_branch
    %19 = sbr.rel (0) target = $region17
  $region16: #{_lambda_.18} parent=0 // pred_region
    _
  $region17: #{_lambda_.18} parent=0 // pred_fallthru
    _
  // Predicated region
  $region18: #{_lambda_.18} parent=0 // pred_check
    _
  $region19: #{_lambda_.18} parent=0 // pred_check_branch
    %21 = sbr.rel (0) target = $region21
  $region20: #{_lambda_.18} parent=0 // pred_region
    _
  $region21: #{_lambda_.18} parent=0 // pred_fallthru
    _
  %v22 = vld [vmem:[%s1] sm:$0xff]
  %v23 = vld [vmem:[%s1 + $0x8] sm:$0xff]
  %v24 = vld [vmem:[%s1 + $0x10] sm:$0xff]
  %v25 = vld [vmem:[%s1 + $0x18] sm:$0xff]
  %v26 = vld [vmem:[%s1 + $0x20] sm:$0xff]
  %v27 = vld [vmem:[%s1 + $0x28] sm:$0xff]
  %v28 = vld [vmem:[%s1 + $0x30] sm:$0xff]
  %v29 = vld [vmem:[%s1 + $0x38] sm:$0xff]
  %v30 = vld [vmem:[%s0] sm:$0xff]
  %v31 = vld [vmem:[%s0 + $0x8] sm:$0xff]
  %v32 = vld [vmem:[%s0 + $0x10] sm:$0xff]
  %v33 = vld [vmem:[%s0 + $0x18] sm:$0xff]
  %v34 = vld [vmem:[%s0 + $0x20] sm:$0xff]
  %v35 = vld [vmem:[%s0 + $0x28] sm:$0xff]
  %v36 = vld [vmem:[%s0 + $0x30] sm:$0xff]
  %v37 = vld [vmem:[%s0 + $0x38] sm:$0xff]
  %v38 = vld [vmem:[%s0 + $0x40] sm:$0xff]
  %v39 = vld [vmem:[%s0 + $0x48] sm:$0xff]
  %v40 = vld [vmem:[%s0 + $0x50] sm:$0xff]
  %v41 = vld [vmem:[%s0 + $0x58] sm:$0xff]
  %v42 = vld [vmem:[%s0 + $0x60] sm:$0xff]
  %v43 = vld [vmem:[%s0 + $0x68] sm:$0xff]
  %v44 = vld [vmem:[%s0 + $0x70] sm:$0xff]
  %v45 = vld [vmem:[%s0 + $0x78] sm:$0xff]
  %v46 = vld [vmem:[%s0 + $0x80] sm:$0xff]
  %v47 = vld [vmem:[%s0 + $0x88] sm:$0xff]
  %v48 = vld [vmem:[%s0 + $0x90] sm:$0xff]
  %v49 = vld [vmem:[%s0 + $0x98] sm:$0xff]
  %v50 = vld [vmem:[%s0 + $0xa0] sm:$0xff]
  %v51 = vld [vmem:[%s0 + $0xa8] sm:$0xff]
  %v52 = vld [vmem:[%s0 + $0xb0] sm:$0xff]
  %v53 = vld [vmem:[%s0 + $0xb8] sm:$0xff]
  %v54 = vld [vmem:[%s0 + $0xc0] sm:$0xff]
  %v55 = vld [vmem:[%s0 + $0xc8] sm:$0xff]
  %v56 = vld [vmem:[%s0 + $0xd0] sm:$0xff]
  %v57 = vld [vmem:[%s0 + $0xd8] sm:$0xff]
  %v58 = vld [vmem:[%s0 + $0xe0] sm:$0xff]
  %v59 = vld [vmem:[%s0 + $0xe8] sm:$0xff]
  %v60 = vld [vmem:[%s0 + $0xf0] sm:$0xff]
  %v61 = vld [vmem:[%s0 + $0xf8] sm:$0xff]
  %v62 = vld [vmem:[%s0 + $0x100] sm:$0xff]
  %v63 = vld [vmem:[%s0 + $0x108] sm:$0xff]
  %v64 = vld [vmem:[%s0 + $0x110] sm:$0xff]
  %v65 = vld [vmem:[%s0 + $0x118] sm:$0xff]
  %v66 = vld [vmem:[%s0 + $0x120] sm:$0xff]
  %v67 = vld [vmem:[%s0 + $0x128] sm:$0xff]
  %v68 = vld [vmem:[%s0 + $0x130] sm:$0xff]
  %v69 = vld [vmem:[%s0 + $0x138] sm:$0xff]
  %v70 = vld [vmem:[%s0 + $0x140] sm:$0xff]
  %v71 = vld [vmem:[%s0 + $0x148] sm:$0xff]
  %v72 = vld [vmem:[%s0 + $0x150] sm:$0xff]
  %v73 = vld [vmem:[%s0 + $0x158] sm:$0xff]
  %v74 = vld [vmem:[%s0 + $0x160] sm:$0xff]
  %v75 = vld [vmem:[%s0 + $0x168] sm:$0xff]
  %v76 = vld [vmem:[%s0 + $0x170] sm:$0xff]
  %v77 = vld [vmem:[%s0 + $0x178] sm:$0xff]
  %v78 = vld [vmem:[%s0 + $0x180] sm:$0xff]
  %v79 = vld [vmem:[%s0 + $0x188] sm:$0xff]
  %v80 = vld [vmem:[%s0 + $0x190] sm:$0xff]
  %v81 = vld [vmem:[%s0 + $0x198] sm:$0xff]
  %v82 = vld [vmem:[%s0 + $0x1a0] sm:$0xff]
  %v83 = vld [vmem:[%s0 + $0x1a8] sm:$0xff]
  %v84 = vld [vmem:[%s0 + $0x1b0] sm:$0xff]
  %v85 = vld [vmem:[%s0 + $0x1b8] sm:$0xff]
  %v86 = vld [vmem:[%s0 + $0x1c0] sm:$0xff]
  %v87 = vld [vmem:[%s0 + $0x1c8] sm:$0xff]
  %v88 = vld [vmem:[%s0 + $0x1d0] sm:$0xff]
  %v89 = vld [vmem:[%s0 + $0x1d8] sm:$0xff]
  %v90 = vld [vmem:[%s0 + $0x1e0] sm:$0xff]
  %v91 = vld [vmem:[%s0 + $0x1e8] sm:$0xff]
  %v92 = vld [vmem:[%s0 + $0x1f0] sm:$0xff]
  %v93 = vld [vmem:[%s0 + $0x1f8] sm:$0xff]
  %94 = vmatprep.subr.mxu0 0.0
  %95 = vmatpush1.msra.mxu0 %v45
  %96 = vmatprep.subr.mxu0 0.0
  %97 = vmatpush1.msra.mxu0 %v44
  %98 = vmatprep.subr.mxu0 0.0
  %99 = vmatpush1.msra.mxu0 %v43
  %100 = vmatprep.subr.mxu0 0.0
  %101 = vmatpush1.msra.mxu0 %v42
  %102 = vmatprep.subr.mxu0 0.0
  %103 = vmatpush1.msra.mxu0 %v41
  %104 = vmatprep.subr.mxu0 0.0
  %105 = vmatpush1.msra.mxu0 %v40
  %106 = vmatprep.subr.mxu0 0.0
  %107 = vmatpush1.msra.mxu0 %v39
  %108 = vmatprep.subr.mxu0 0.0
  %109 = vmatpush1.msra.mxu0 %v38
  %110 = vmatprep.subr.mxu0 0.0
  %111 = vmatpush1.msra.mxu0 %v37
  %112 = vmatprep.subr.mxu0 0.0
  %113 = vmatpush1.msra.mxu0 %v36
  %114 = vmatprep.subr.mxu0 0.0
  %115 = vmatpush1.msra.mxu0 %v35
  %116 = vmatprep.subr.mxu0 0.0
  %117 = vmatpush1.msra.mxu0 %v34
  %118 = vmatprep.subr.mxu0 0.0
  %119 = vmatpush1.msra.mxu0 %v33
  %120 = vmatprep.subr.mxu0 0.0
  %121 = vmatpush1.msra.mxu0 %v32
  %122 = vmatprep.subr.mxu0 0.0
  %123 = vmatpush1.msra.mxu0 %v31
  %124 = vmatprep.subr.mxu0 0.0
  %125 = vmatpush1.msra.mxu0 %v30
  %126 = vmatprep.subr.mxu0 0.0
  %127 = vmatpush2.msra.mxu0 %v61
  %128 = vmatprep.subr.mxu0 0.0
  %129 = vmatpush2.msra.mxu0 %v60
  %130 = vmatprep.subr.mxu0 0.0
  %131 = vmatpush2.msra.mxu0 %v59
  %132 = vmatprep.subr.mxu0 0.0
  %133 = vmatpush2.msra.mxu0 %v58
  %134 = vmatprep.subr.mxu0 0.0
  %135 = vmatpush2.msra.mxu0 %v57
  %136 = vmatprep.subr.mxu0 0.0
  %137 = vmatpush2.msra.mxu0 %v56
  %138 = vmatprep.subr.mxu0 0.0
  %139 = vmatpush2.msra.mxu0 %v55
  %140 = vmatprep.subr.mxu0 0.0
  %141 = vmatpush2.msra.mxu0 %v54
  %142 = vmatprep.subr.mxu0 0.0
  %143 = vmatpush2.msra.mxu0 %v53
  %144 = vmatprep.subr.mxu0 0.0
  %145 = vmatpush2.msra.mxu0 %v52
  %146 = vmatprep.subr.mxu0 0.0
  %147 = vmatpush2.msra.mxu0 %v51
  %148 = vmatprep.subr.mxu0 0.0
  %149 = vmatpush2.msra.mxu0 %v50
  %150 = vmatprep.subr.mxu0 0.0
  %151 = vmatpush2.msra.mxu0 %v49
  %152 = vmatprep.subr.mxu0 0.0
  %153 = vmatpush2.msra.mxu0 %v48
  %154 = vmatprep.subr.mxu0 0.0
  %155 = vmatpush2.msra.mxu0 %v47
  %156 = vmatprep.subr.mxu0 0.0
  %157 = vmatpush2.msra.mxu0 %v46
  %158 = vmatprep.mubr.f32.mxu0 %v23
  %159 = vmatmul.mubr.f32.gmra.mxu0 %v22
  %v160 = vpop.f32.mrf.mxu0
  %v161 = vadd.f32 0.0, %v160
  %v162 = vpop.f32.mrf.mxu0
  %163 = vmatprep.mubr.f32.mxu0 %v27
  %164 = vmatmul.mubr.f32.gmra.mxu0 %v26
  %v165 = vpop.f32.mrf.mxu0
  %v166 = vadd.f32 0.0, %v165
  %v167 = vpop.f32.mrf.mxu0
  %168 = vdwg.mxu0
  %169 = vmatprep.subr.mxu0 0.0
  %170 = vmatpush1.msra.mxu0 %v77
  %171 = vmatprep.subr.mxu0 0.0
  %172 = vmatpush1.msra.mxu0 %v76
  %173 = vmatprep.subr.mxu0 0.0
  %174 = vmatpush1.msra.mxu0 %v75
  %175 = vmatprep.subr.mxu0 0.0
  %176 = vmatpush1.msra.mxu0 %v74
  %177 = vmatprep.subr.mxu0 0.0
  %178 = vmatpush1.msra.mxu0 %v73
  %179 = vmatprep.subr.mxu0 0.0
  %180 = vmatpush1.msra.mxu0 %v72
  %181 = vmatprep.subr.mxu0 0.0
  %182 = vmatpush1.msra.mxu0 %v71
  %183 = vmatprep.subr.mxu0 0.0
  %184 = vmatpush1.msra.mxu0 %v70
  %185 = vmatprep.subr.mxu0 0.0
  %186 = vmatpush1.msra.mxu0 %v69
  %187 = vmatprep.subr.mxu0 0.0
  %188 = vmatpush1.msra.mxu0 %v68
  %189 = vmatprep.subr.mxu0 0.0
  %190 = vmatpush1.msra.mxu0 %v67
  %191 = vmatprep.subr.mxu0 0.0
  %192 = vmatpush1.msra.mxu0 %v66
  %193 = vmatprep.subr.mxu0 0.0
  %194 = vmatpush1.msra.mxu0 %v65
  %195 = vmatprep.subr.mxu0 0.0
  %196 = vmatpush1.msra.mxu0 %v64
  %197 = vmatprep.subr.mxu0 0.0
  %198 = vmatpush1.msra.mxu0 %v63
  %199 = vmatprep.subr.mxu0 0.0
  %200 = vmatpush1.msra.mxu0 %v62
  %201 = vmatprep.subr.mxu0 0.0
  %202 = vmatpush2.msra.mxu0 %v93
  %203 = vmatprep.subr.mxu0 0.0
  %204 = vmatpush2.msra.mxu0 %v92
  %205 = vmatprep.subr.mxu0 0.0
  %206 = vmatpush2.msra.mxu0 %v91
  %207 = vmatprep.subr.mxu0 0.0
  %208 = vmatpush2.msra.mxu0 %v90
  %209 = vmatprep.subr.mxu0 0.0
  %210 = vmatpush2.msra.mxu0 %v89
  %211 = vmatprep.subr.mxu0 0.0
  %212 = vmatpush2.msra.mxu0 %v88
  %213 = vmatprep.subr.mxu0 0.0
  %214 = vmatpush2.msra.mxu0 %v87
  %215 = vmatprep.subr.mxu0 0.0
  %216 = vmatpush2.msra.mxu0 %v86
  %217 = vmatprep.subr.mxu0 0.0
  %218 = vmatpush2.msra.mxu0 %v85
  %219 = vmatprep.subr.mxu0 0.0
  %220 = vmatpush2.msra.mxu0 %v84
  %221 = vmatprep.subr.mxu0 0.0
  %222 = vmatpush2.msra.mxu0 %v83
  %223 = vmatprep.subr.mxu0 0.0
  %224 = vmatpush2.msra.mxu0 %v82
  %225 = vmatprep.subr.mxu0 0.0
  %226 = vmatpush2.msra.mxu0 %v81
  %227 = vmatprep.subr.mxu0 0.0
  %228 = vmatpush2.msra.mxu0 %v80
  %229 = vmatprep.subr.mxu0 0.0
  %230 = vmatpush2.msra.mxu0 %v79
  %231 = vmatprep.subr.mxu0 0.0
  %232 = vmatpush2.msra.mxu0 %v78
  %233 = vmatprep.mubr.f32.mxu0 %v25
  %234 = vmatmul.mubr.f32.gmra.mxu0 %v24
  %v235 = vpop.f32.mrf.mxu0
  %v236 = vadd.f32 %v161, %v235
  %v237 = vpop.f32.mrf.mxu0
  %238 = vmatprep.mubr.f32.mxu0 %v29
  %239 = vmatmul.mubr.f32.gmra.mxu0 %v28
  %v240 = vpop.f32.mrf.mxu0
  %v241 = vadd.f32 %v166, %v240
  %v242 = vpop.f32.mrf.mxu0
  %243 = vdwg.mxu0
  %v244 = vld [vmem:[%s2] sm:$0xff]
  %v245 = vld [vmem:[%s2 + $0x8] sm:$0xff]
  %247 = vset.pattern.permute.xlu0 0
  %248 = vperm.xlu0 %247, %v244
  %v249 = vpop.permute.xlu0 %248
  %252 = vset.pattern.permute.xlu0 0
  %253 = vperm.xlu0 %252, %v245
  %v254 = vpop.permute.xlu0 %253
  %v256 = vmul.f32 %v236, %v249
  %v257 = vmul.f32 %v241, %v254
  %v258 = vld [vmem:[#allocation2] sm:$0x1]
  %v259 = vld [vmem:[%s3] sm:$0x1]
  %261 = vset.pattern.permute.xlu0 0
  %262 = vperm.xlu0 %261, %v258
  %v263 = vpop.permute.xlu0 %262
  %v265 = vlaneseq
  %v266 = vshrl.u32 %v265, 7
  %v267 = vsub.s32 0, %v266
  %v268 = vrot.slane %v263, %v267
  %v269 = vmul.f32 %v268, %v259
  %v271 = vlaneseq
  %v272 = vshrl.u32 %v271, 7
  %v273 = vsub.s32 0, %v272
  %v274 = vrot.slane %v269, %v273
  %v276 = vadd.f32 %v256, %v274
  %v277 = vadd.f32 %v257, %v274
  %v278 = vmul.f32 %v276, %v276
  %v279 = vmul.f32 %v277, %v277
  %vm280 = vcmask 261120
  %v281 = vsel %vm280, %v278, 0.0
  %v282 = vsel %vm280, %v279, 0.0
  %v283 = vadd.f32 %v281, %v282
  %v284 = vrot.slane %v283, 4
  %v285 = vadd.f32 %v283, %v284
  %v286 = vrot.slane %v285, 2
  %v287 = vadd.f32 %v285, %v286
  %v288 = vrot.slane %v287, 1
  %v289 = vadd.f32 %v287, %v288
  %v290 = vrcp.pop 16.0
  %v291 = vmul.f32 %v289, %v290
  %v292 = vadd.f32 %v291, 1e-08
  %v293 = vrsqrt.pop %v292
  %v294 = vmul.f32 %v276, %v293
  %v295 = vmul.f32 %v277, %v293
  %296 = vst.msk [vmem:[%s5] sm:$0xff] %vm280, %v294
  %297 = vst.msk [vmem:[%s5 + $0x8] sm:$0xff] %vm280, %v295
  // Predicated region
  $region22: #{_lambda_.18} parent=0 // pred_check
    _
  $region23: #{_lambda_.18} parent=0 // pred_check_branch
    %299 = sbr.rel (0) target = $region25
  $region24: #{_lambda_.18} parent=0 // pred_region
    _
  $region25: #{_lambda_.18} parent=0 // pred_fallthru
    _
  // Predicated region
  $region26: #{_lambda_.18} parent=0 // pred_check
    _
  $region27: #{_lambda_.18} parent=0 // pred_check_branch
    %301 = sbr.rel (0) target = $region29
  $region28: #{_lambda_.18} parent=0 // pred_region
    _
  $region29: #{_lambda_.18} parent=0 // pred_fallthru
    _

// kernel: _lambda_.19
$region0: #{_lambda_.19}
  #allocation0 [shape = 'u32[]', space=smem, size = 0x4, offset = 0x4, fixed_abs, tag = 'smem constant byte address 0x4 - core index']
  #allocation1 [shape = 'u32[144,128]{1,0:T(1,128)}', space=vmem, size = 0x12000, scoped, tag = 'internal scratch']
  %s0 = inlined_call_operand.vmem [shape: f32[16,32], index: 0, kind: input, shape index: {}]
  %s1 = inlined_call_operand.vmem [shape: f32[9,16,32], index: 1, kind: input, shape index: {}]
  %s2 = inlined_call_operand.vmem [shape: f32[9,16,1], index: 2, kind: input, shape index: {}]
  %s3 = inlined_call_operand.vmem [shape: f32[16,32], index: 3, kind: output, shape index: {}]
  %s4 = sld [smem:[#allocation0]]
  $region22: #{_lambda_.19} parent=0
    _
  %s6 = ssub.s32 1, %s4
  %s7 = scalar_select 0, %s6, %s4
  // Predicated region
  $region2: #{_lambda_.19} parent=0 // pred_check
    _
  $region3: #{_lambda_.19} parent=0 // pred_check_branch
    %9 = sbr.rel (0) target = $region5
  $region4: #{_lambda_.19} parent=0 // pred_region
    _
  $region5: #{_lambda_.19} parent=0 // pred_fallthru
    _
  // Predicated region
  $region6: #{_lambda_.19} parent=0 // pred_check
    _
  $region7: #{_lambda_.19} parent=0 // pred_check_branch
    %11 = sbr.rel (0) target = $region9
  $region8: #{_lambda_.19} parent=0 // pred_region
    _
  $region9: #{_lambda_.19} parent=0 // pred_fallthru
    _
  // Predicated region
  $region10: #{_lambda_.19} parent=0 // pred_check
    _
  $region11: #{_lambda_.19} parent=0 // pred_check_branch
    %13 = sbr.rel (0) target = $region13
  $region12: #{_lambda_.19} parent=0 // pred_region
    _
  $region13: #{_lambda_.19} parent=0 // pred_fallthru
    _
  %v14 = vld [vmem:[%s0] sm:$0xff]
  %v15 = vld [vmem:[%s0 + $0x8] sm:$0xff]
  %v16 = vld [vmem:[%s1] sm:$0xff]
  %v17 = vld [vmem:[%s1 + $0x8] sm:$0xff]
  %v18 = vld [vmem:[%s2] sm:$0xff]
  %v19 = vld [vmem:[%s2 + $0x8] sm:$0xff]
  %21 = vset.pattern.permute.xlu0 0
  %22 = vperm.xlu0 %21, %v18
  %v23 = vpop.permute.xlu0 %22
  %26 = vset.pattern.permute.xlu0 0
  %27 = vperm.xlu0 %26, %v19
  %v28 = vpop.permute.xlu0 %27
  %v30 = vmul.f32 %v16, %v23
  %v31 = vmul.f32 %v17, %v28
  %s32 = scalar_lea.vmem %s1, 16
  %v33 = vld [vmem:[%s32] sm:$0xff]
  %v34 = vld [vmem:[%s32 + $0x8] sm:$0xff]
  %s35 = scalar_lea.vmem %s2, 16
  %v36 = vld [vmem:[%s35] sm:$0xff]
  %v37 = vld [vmem:[%s35 + $0x8] sm:$0xff]
  %39 = vset.pattern.permute.xlu0 0
  %40 = vperm.xlu0 %39, %v36
  %v41 = vpop.permute.xlu0 %40
  %44 = vset.pattern.permute.xlu0 0
  %45 = vperm.xlu0 %44, %v37
  %v46 = vpop.permute.xlu0 %45
  %v48 = vmul.f32 %v33, %v41
  %v49 = vmul.f32 %v34, %v46
  %v50 = vadd.f32 %v30, %v48
  %v51 = vadd.f32 %v31, %v49
  %s52 = scalar_lea.vmem %s1, 32
  %v53 = vld [vmem:[%s52] sm:$0xff]
  %v54 = vld [vmem:[%s52 + $0x8] sm:$0xff]
  %s55 = scalar_lea.vmem %s2, 32
  %v56 = vld [vmem:[%s55] sm:$0xff]
  %v57 = vld [vmem:[%s55 + $0x8] sm:$0xff]
  %59 = vset.pattern.permute.xlu0 0
  %60 = vperm.xlu0 %59, %v56
  %v61 = vpop.permute.xlu0 %60
  %64 = vset.pattern.permute.xlu0 0
  %65 = vperm.xlu0 %64, %v57
  %v66 = vpop.permute.xlu0 %65
  %v68 = vmul.f32 %v53, %v61
  %v69 = vmul.f32 %v54, %v66
  %v70 = vadd.f32 %v50, %v68
  %v71 = vadd.f32 %v51, %v69
  %s72 = scalar_lea.vmem %s1, 48
  %v73 = vld [vmem:[%s72] sm:$0xff]
  %v74 = vld [vmem:[%s72 + $0x8] sm:$0xff]
  %s75 = scalar_lea.vmem %s2, 48
  %v76 = vld [vmem:[%s75] sm:$0xff]
  %v77 = vld [vmem:[%s75 + $0x8] sm:$0xff]
  %79 = vset.pattern.permute.xlu0 0
  %80 = vperm.xlu0 %79, %v76
  %v81 = vpop.permute.xlu0 %80
  %84 = vset.pattern.permute.xlu0 0
  %85 = vperm.xlu0 %84, %v77
  %v86 = vpop.permute.xlu0 %85
  %v88 = vmul.f32 %v73, %v81
  %v89 = vmul.f32 %v74, %v86
  %v90 = vadd.f32 %v70, %v88
  %v91 = vadd.f32 %v71, %v89
  %s92 = scalar_lea.vmem %s1, 64
  %v93 = vld [vmem:[%s92] sm:$0xff]
  %v94 = vld [vmem:[%s92 + $0x8] sm:$0xff]
  %s95 = scalar_lea.vmem %s2, 64
  %v96 = vld [vmem:[%s95] sm:$0xff]
  %v97 = vld [vmem:[%s95 + $0x8] sm:$0xff]
  %99 = vset.pattern.permute.xlu0 0
  %100 = vperm.xlu0 %99, %v96
  %v101 = vpop.permute.xlu0 %100
  %104 = vset.pattern.permute.xlu0 0
  %105 = vperm.xlu0 %104, %v97
  %v106 = vpop.permute.xlu0 %105
  %v108 = vmul.f32 %v93, %v101
  %v109 = vmul.f32 %v94, %v106
  %v110 = vadd.f32 %v90, %v108
  %v111 = vadd.f32 %v91, %v109
  %s112 = scalar_lea.vmem %s1, 80
  %v113 = vld [vmem:[%s112] sm:$0xff]
  %v114 = vld [vmem:[%s112 + $0x8] sm:$0xff]
  %s115 = scalar_lea.vmem %s2, 80
  %v116 = vld [vmem:[%s115] sm:$0xff]
  %v117 = vld [vmem:[%s115 + $0x8] sm:$0xff]
  %119 = vset.pattern.permute.xlu0 0
  %120 = vperm.xlu0 %119, %v116
  %v121 = vpop.permute.xlu0 %120
  %124 = vset.pattern.permute.xlu0 0
  %125 = vperm.xlu0 %124, %v117
  %v126 = vpop.permute.xlu0 %125
  %v128 = vmul.f32 %v113, %v121
  %v129 = vmul.f32 %v114, %v126
  %v130 = vadd.f32 %v110, %v128
  %v131 = vadd.f32 %v111, %v129
  %s132 = scalar_lea.vmem %s1, 96
  %v133 = vld [vmem:[%s132] sm:$0xff]
  %v134 = vld [vmem:[%s132 + $0x8] sm:$0xff]
  %s135 = scalar_lea.vmem %s2, 96
  %v136 = vld [vmem:[%s135] sm:$0xff]
  %v137 = vld [vmem:[%s135 + $0x8] sm:$0xff]
  %139 = vset.pattern.permute.xlu0 0
  %140 = vperm.xlu0 %139, %v136
  %v141 = vpop.permute.xlu0 %140
  %144 = vset.pattern.permute.xlu0 0
  %145 = vperm.xlu0 %144, %v137
  %v146 = vpop.permute.xlu0 %145
  %v148 = vmul.f32 %v133, %v141
  %v149 = vmul.f32 %v134, %v146
  %v150 = vadd.f32 %v130, %v148
  %v151 = vadd.f32 %v131, %v149
  %s152 = scalar_lea.vmem %s1, 112
  %v153 = vld [vmem:[%s152] sm:$0xff]
  %v154 = vld [vmem:[%s152 + $0x8] sm:$0xff]
  %s155 = scalar_lea.vmem %s2, 112
  %v156 = vld [vmem:[%s155] sm:$0xff]
  %v157 = vld [vmem:[%s155 + $0x8] sm:$0xff]
  %159 = vset.pattern.permute.xlu0 0
  %160 = vperm.xlu0 %159, %v156
  %v161 = vpop.permute.xlu0 %160
  %164 = vset.pattern.permute.xlu0 0
  %165 = vperm.xlu0 %164, %v157
  %v166 = vpop.permute.xlu0 %165
  %v168 = vmul.f32 %v153, %v161
  %v169 = vmul.f32 %v154, %v166
  %v170 = vadd.f32 %v150, %v168
  %v171 = vadd.f32 %v151, %v169
  %s172 = scalar_lea.vmem %s1, 128
  %v173 = vld [vmem:[%s172] sm:$0xff]
  %v174 = vld [vmem:[%s172 + $0x8] sm:$0xff]
  %s175 = scalar_lea.vmem %s2, 128
  %v176 = vld [vmem:[%s175] sm:$0xff]
  %v177 = vld [vmem:[%s175 + $0x8] sm:$0xff]
  %179 = vset.pattern.permute.xlu0 0
  %180 = vperm.xlu0 %179, %v176
  %v181 = vpop.permute.xlu0 %180
  %184 = vset.pattern.permute.xlu0 0
  %185 = vperm.xlu0 %184, %v177
  %v186 = vpop.permute.xlu0 %185
  %v188 = vmul.f32 %v173, %v181
  %v189 = vmul.f32 %v174, %v186
  %v190 = vadd.f32 %v170, %v188
  %v191 = vadd.f32 %v171, %v189
  %vm192 = vcmask 261120
  %v193 = vsel %vm192, %v190, 0.0
  %194 = vadd.xlane.f32.xlu0 %v193
  %v195 = vpop.xlane.xlu0 %194
  %v196 = vsel %vm192, %v191, 0.0
  %197 = vadd.xlane.f32.xlu0 %v196
  %v198 = vpop.xlane.xlu0 %197
  %v199 = vrcp.pop 32.0
  %v200 = vmul.f32 %v195, %v199
  %v201 = vmul.f32 %v198, %v199
  %v202 = vsub.f32 %v190, %v200
  %v203 = vsub.f32 %v191, %v201
  %v204 = vmul.f32 %v202, %v202
  %v205 = vmul.f32 %v203, %v203
  %v206 = vsel %vm192, %v204, 0.0
  %207 = vadd.xlane.f32.xlu0 %v206
  %v208 = vpop.xlane.xlu0 %207
  %v209 = vsel %vm192, %v205, 0.0
  %210 = vadd.xlane.f32.xlu0 %v209
  %v211 = vpop.xlane.xlu0 %210
  %v212 = vmul.f32 %v208, %v199
  %v213 = vmul.f32 %v211, %v199
  %v214 = vadd.f32 %v212, 1e-05
  %v215 = vadd.f32 %v213, 1e-05
  %v216 = vrsqrt.pop %v214
  %v217 = vrsqrt.pop %v215
  %v218 = vmul.f32 %v202, %v216
  %v219 = vmul.f32 %v203, %v217
  %v220 = vmax.f32 %v14, %v218
  %v221 = vmax.f32 %v15, %v219
  %222 = vst.msk [vmem:[%s3] sm:$0xff] %vm192, %v220
  %223 = vst.msk [vmem:[%s3 + $0x8] sm:$0xff] %vm192, %v221
  // Predicated region
  $region14: #{_lambda_.19} parent=0 // pred_check
    _
  $region15: #{_lambda_.19} parent=0 // pred_check_branch
    %225 = sbr.rel (0) target = $region17
  $region16: #{_lambda_.19} parent=0 // pred_region
    _
  $region17: #{_lambda_.19} parent=0 // pred_fallthru
    _
  // Predicated region
  $region18: #{_lambda_.19} parent=0 // pred_check
    _
  $region19: #{_lambda_.19} parent=0 // pred_check_branch
    %227 = sbr.rel (0) target = $region21
  $region20: #{_lambda_.19} parent=0 // pred_region
    _
  $region21: #{_lambda_.19} parent=0 // pred_fallthru
    _

// kernel: _lambda_.20
$region0: #{_lambda_.20}
  #allocation0 [shape = 'u32[]', space=smem, size = 0x4, offset = 0x4, fixed_abs, tag = 'smem constant byte address 0x4 - core index']
  #allocation1 [shape = 'u32[144,128]{1,0:T(1,128)}', space=vmem, size = 0x12000, scoped, tag = 'internal scratch']
  #allocation2 [shape = 'f32[1,1]{1,0:T(1,128)S(1)}', space=vmem, size = 0x200, scoped, tag = 'scoped memory for _lambda_.20']
  %s0 = inlined_call_operand.vmem [shape: f32[144,32], index: 0, kind: input, shape index: {}]
  %s1 = inlined_call_operand.vmem [shape: f32[16,144], index: 1, kind: input, shape index: {}]
  %s2 = inlined_call_operand.vmem [shape: f32[16,1], index: 2, kind: input, shape index: {}]
  %s3 = inlined_call_operand.vmem [shape: f32[1,32], index: 3, kind: input, shape index: {}]
  %s4 = inlined_call_operand.<no memory space> [shape: f32[1,1], index: 4, kind: input, shape index: {}]
  %s5 = inlined_call_operand.vmem [shape: f32[16,32], index: 5, kind: output, shape index: {}]
  %s6 = sld [smem:[#allocation0]]
  $region30: #{_lambda_.20} parent=0
    _
  %s8 = ssub.s32 1, %s6
  %s9 = scalar_select 0, %s8, %s6
  %v10 = vstv %s4
  %11 = vst [vmem:[#allocation2] sm:$0x1] %v10
  // Predicated region
  $region2: #{_lambda_.20} parent=0 // pred_check
    _
  $region3: #{_lambda_.20} parent=0 // pred_check_branch
    %13 = sbr.rel (0) target = $region5
  $region4: #{_lambda_.20} parent=0 // pred_region
    _
  $region5: #{_lambda_.20} parent=0 // pred_fallthru
    _
  // Predicated region
  $region6: #{_lambda_.20} parent=0 // pred_check
    _
  $region7: #{_lambda_.20} parent=0 // pred_check_branch
    %15 = sbr.rel (0) target = $region9
  $region8: #{_lambda_.20} parent=0 // pred_region
    _
  $region9: #{_lambda_.20} parent=0 // pred_fallthru
    _
  // Predicated region
  $region10: #{_lambda_.20} parent=0 // pred_check
    _
  $region11: #{_lambda_.20} parent=0 // pred_check_branch
    %17 = sbr.rel (0) target = $region13
  $region12: #{_lambda_.20} parent=0 // pred_region
    _
  $region13: #{_lambda_.20} parent=0 // pred_fallthru
    _
  // Predicated region
  $region14: #{_lambda_.20} parent=0 // pred_check
    _
  $region15: #{_lambda_.20} parent=0 // pred_check_branch
    %19 = sbr.rel (0) target = $region17
  $region16: #{_lambda_.20} parent=0 // pred_region
    _
  $region17: #{_lambda_.20} parent=0 // pred_fallthru
    _
  // Predicated region
  $region18: #{_lambda_.20} parent=0 // pred_check
    _
  $region19: #{_lambda_.20} parent=0 // pred_check_branch
    %21 = sbr.rel (0) target = $region21
  $region20: #{_lambda_.20} parent=0 // pred_region
    _
  $region21: #{_lambda_.20} parent=0 // pred_fallthru
    _
  %v22 = vld [vmem:[%s1] sm:$0xff]
  %v23 = vld [vmem:[%s1 + $0x8] sm:$0xff]
  %v24 = vld [vmem:[%s1 + $0x10] sm:$0xff]
  %v25 = vld [vmem:[%s1 + $0x18] sm:$0xff]
  %v26 = vld [vmem:[%s0] sm:$0xff]
  %v27 = vld [vmem:[%s0 + $0x8] sm:$0xff]
  %v28 = vld [vmem:[%s0 + $0x10] sm:$0xff]
  %v29 = vld [vmem:[%s0 + $0x18] sm:$0xff]
  %v30 = vld [vmem:[%s0 + $0x20] sm:$0xff]
  %v31 = vld [vmem:[%s0 + $0x28] sm:$0xff]
  %v32 = vld [vmem:[%s0 + $0x30] sm:$0xff]
  %v33 = vld [vmem:[%s0 + $0x38] sm:$0xff]
  %v34 = vld [vmem:[%s0 + $0x40] sm:$0xff]
  %v35 = vld [vmem:[%s0 + $0x48] sm:$0xff]
  %v36 = vld [vmem:[%s0 + $0x50] sm:$0xff]
  %v37 = vld [vmem:[%s0 + $0x58] sm:$0xff]
  %v38 = vld [vmem:[%s0 + $0x60] sm:$0xff]
  %v39 = vld [vmem:[%s0 + $0x68] sm:$0xff]
  %v40 = vld [vmem:[%s0 + $0x70] sm:$0xff]
  %v41 = vld [vmem:[%s0 + $0x78] sm:$0xff]
  %v42 = vld [vmem:[%s0 + $0x80] sm:$0xff]
  %v43 = vld [vmem:[%s0 + $0x88] sm:$0xff]
  %vm44 = vcmask 130048
  %v46 = vsel %vm44, %v23, 0
  %v49 = vsel %vm44, %v25, 0
  %51 = vmatprep.subr.mxu0 0.0
  %52 = vmatpush1.msra.mxu0 %v41
  %53 = vmatprep.subr.mxu0 0.0
  %54 = vmatpush1.msra.mxu0 %v40
  %55 = vmatprep.subr.mxu0 0.0
  %56 = vmatpush1.msra.mxu0 %v39
  %57 = vmatprep.subr.mxu0 0.0
  %58 = vmatpush1.msra.mxu0 %v38
  %59 = vmatprep.subr.mxu0 0.0
  %60 = vmatpush1.msra.mxu0 %v37
  %61 = vmatprep.subr.mxu0 0.0
  %62 = vmatpush1.msra.mxu0 %v36
  %63 = vmatprep.subr.mxu0 0.0
  %64 = vmatpush1.msra.mxu0 %v35
  %65 = vmatprep.subr.mxu0 0.0
  %66 = vmatpush1.msra.mxu0 %v34
  %67 = vmatprep.subr.mxu0 0.0
  %68 = vmatpush1.msra.mxu0 %v33
  %69 = vmatprep.subr.mxu0 0.0
  %70 = vmatpush1.msra.mxu0 %v32
  %71 = vmatprep.subr.mxu0 0.0
  %72 = vmatpush1.msra.mxu0 %v31
  %73 = vmatprep.subr.mxu0 0.0
  %74 = vmatpush1.msra.mxu0 %v30
  %75 = vmatprep.subr.mxu0 0.0
  %76 = vmatpush1.msra.mxu0 %v29
  %77 = vmatprep.subr.mxu0 0.0
  %78 = vmatpush1.msra.mxu0 %v28
  %79 = vmatprep.subr.mxu0 0.0
  %80 = vmatpush1.msra.mxu0 %v27
  %81 = vmatprep.subr.mxu0 0.0
  %82 = vmatpush1.msra.mxu0 %v26
  %83 = vmatprep.subr.mxu0 0.0
  %84 = vmatpush2.msra.mxu0 0.0
  %85 = vmatprep.subr.mxu0 0.0
  %86 = vmatpush2.msra.mxu0 0.0
  %87 = vmatprep.subr.mxu0 0.0
  %88 = vmatpush2.msra.mxu0 0.0
  %89 = vmatprep.subr.mxu0 0.0
  %90 = vmatpush2.msra.mxu0 0.0
  %91 = vmatprep.subr.mxu0 0.0
  %92 = vmatpush2.msra.mxu0 0.0
  %93 = vmatprep.subr.mxu0 0.0
  %94 = vmatpush2.msra.mxu0 0.0
  %95 = vmatprep.subr.mxu0 0.0
  %96 = vmatpush2.msra.mxu0 0.0
  %97 = vmatprep.subr.mxu0 0.0
  %98 = vmatpush2.msra.mxu0 0.0
  %99 = vmatprep.subr.mxu0 0.0
  %100 = vmatpush2.msra.mxu0 0.0
  %101 = vmatprep.subr.mxu0 0.0
  %102 = vmatpush2.msra.mxu0 0.0
  %103 = vmatprep.subr.mxu0 0.0
  %104 = vmatpush2.msra.mxu0 0.0
  %105 = vmatprep.subr.mxu0 0.0
  %106 = vmatpush2.msra.mxu0 0.0
  %107 = vmatprep.subr.mxu0 0.0
  %108 = vmatpush2.msra.mxu0 0.0
  %109 = vmatprep.subr.mxu0 0.0
  %110 = vmatpush2.msra.mxu0 0.0
  %111 = vmatprep.subr.mxu0 0.0
  %112 = vmatpush2.msra.mxu0 %v43
  %113 = vmatprep.subr.mxu0 0.0
  %114 = vmatpush2.msra.mxu0 %v42
  %115 = vmatprep.mubr.f32.mxu0 %v46
  %116 = vmatmul.mubr.f32.gmra.mxu0 %v22
  %v117 = vpop.f32.mrf.mxu0
  %v118 = vadd.f32 0.0, %v117
  %v119 = vpop.f32.mrf.mxu0
  %120 = vmatprep.mubr.f32.mxu0 %v49
  %121 = vmatmul.mubr.f32.gmra.mxu0 %v24
  %v122 = vpop.f32.mrf.mxu0
  %v123 = vadd.f32 0.0, %v122
  %v124 = vpop.f32.mrf.mxu0
  %125 = vdwg.mxu0
  %v126 = vld [vmem:[%s2] sm:$0xff]
  %v127 = vld [vmem:[%s2 + $0x8] sm:$0xff]
  %129 = vset.pattern.permute.xlu0 0
  %130 = vperm.xlu0 %129, %v126
  %v131 = vpop.permute.xlu0 %130
  %134 = vset.pattern.permute.xlu0 0
  %135 = vperm.xlu0 %134, %v127
  %v136 = vpop.permute.xlu0 %135
  %v138 = vmul.f32 %v118, %v131
  %v139 = vmul.f32 %v123, %v136
  %v140 = vld [vmem:[#allocation2] sm:$0x1]
  %v141 = vld [vmem:[%s3] sm:$0x1]
  %143 = vset.pattern.permute.xlu0 0
  %144 = vperm.xlu0 %143, %v140
  %v145 = vpop.permute.xlu0 %144
  %v147 = vlaneseq
  %v148 = vshrl.u32 %v147, 7
  %v149 = vsub.s32 0, %v148
  %v150 = vrot.slane %v145, %v149
  %v151 = vmul.f32 %v150, %v141
  %v153 = vlaneseq
  %v154 = vshrl.u32 %v153, 7
  %v155 = vsub.s32 0, %v154
  %v156 = vrot.slane %v151, %v155
  %v158 = vadd.f32 %v138, %v156
  %v159 = vadd.f32 %v139, %v156
  %v160 = vmul.f32 %v158, %v158
  %v161 = vmul.f32 %v159, %v159
  %vm162 = vcmask 261120
  %v163 = vsel %vm162, %v160, 0.0
  %v164 = vsel %vm162, %v161, 0.0
  %v165 = vadd.f32 %v163, %v164
  %v166 = vrot.slane %v165, 4
  %v167 = vadd.f32 %v165, %v166
  %v168 = vrot.slane %v167, 2
  %v169 = vadd.f32 %v167, %v168
  %v170 = vrot.slane %v169, 1
  %v171 = vadd.f32 %v169, %v170
  %v172 = vrcp.pop 16.0
  %v173 = vmul.f32 %v171, %v172
  %v174 = vadd.f32 %v173, 1e-08
  %v175 = vrsqrt.pop %v174
  %v176 = vmul.f32 %v158, %v175
  %v177 = vmul.f32 %v159, %v175
  %178 = vst.msk [vmem:[%s5] sm:$0xff] %vm162, %v176
  %179 = vst.msk [vmem:[%s5 + $0x8] sm:$0xff] %vm162, %v177
  // Predicated region
  $region22: #{_lambda_.20} parent=0 // pred_check
    _
  $region23: #{_lambda_.20} parent=0 // pred_check_branch
    %181 = sbr.rel (0) target = $region25
  $region24: #{_lambda_.20} parent=0 // pred_region
    _
  $region25: #{_lambda_.20} parent=0 // pred_fallthru
    _
  // Predicated region
  $region26: #{_lambda_.20} parent=0 // pred_check
    _
  $region27: #{_lambda_.20} parent=0 // pred_check_branch
    %183 = sbr.rel (0) target = $region29
  $region28: #{_lambda_.20} parent=0 // pred_region
    _
  $region29: #{_lambda_.20} parent=0 // pred_fallthru
    _

// kernel: _lambda_.21
$region0: #{_lambda_.21}
  #allocation0 [shape = 'u32[]', space=smem, size = 0x4, offset = 0x4, fixed_abs, tag = 'smem constant byte address 0x4 - core index']
  #allocation1 [shape = 'u32[144,128]{1,0:T(1,128)}', space=vmem, size = 0x12000, scoped, tag = 'internal scratch']
  %s0 = inlined_call_operand.vmem [shape: f32[16,32], index: 0, kind: input, shape index: {}]
  %s1 = inlined_call_operand.vmem [shape: f32[9,16,32], index: 1, kind: input, shape index: {}]
  %s2 = inlined_call_operand.vmem [shape: f32[9,16,1], index: 2, kind: input, shape index: {}]
  %s3 = inlined_call_operand.vmem [shape: f32[3,16], index: 3, kind: input, shape index: {}]
  %s4 = inlined_call_operand.vmem [shape: f32[16,32], index: 4, kind: output, shape index: {0}]
  %s5 = inlined_call_operand.vmem [shape: f32[3,32], index: 5, kind: output, shape index: {1}]
  %6 = xla_tuple %s4, %s5
  %s7 = sld [smem:[#allocation0]]
  $region34: #{_lambda_.21} parent=0
    _
  %s9 = ssub.s32 1, %s7
  %s10 = scalar_select 0, %s9, %s7
  // Predicated region
  $region2: #{_lambda_.21} parent=0 // pred_check
    _
  $region3: #{_lambda_.21} parent=0 // pred_check_branch
    %12 = sbr.rel (0) target = $region5
  $region4: #{_lambda_.21} parent=0 // pred_region
    _
  $region5: #{_lambda_.21} parent=0 // pred_fallthru
    _
  // Predicated region
  $region6: #{_lambda_.21} parent=0 // pred_check
    _
  $region7: #{_lambda_.21} parent=0 // pred_check_branch
    %14 = sbr.rel (0) target = $region9
  $region8: #{_lambda_.21} parent=0 // pred_region
    _
  $region9: #{_lambda_.21} parent=0 // pred_fallthru
    _
  // Predicated region
  $region10: #{_lambda_.21} parent=0 // pred_check
    _
  $region11: #{_lambda_.21} parent=0 // pred_check_branch
    %16 = sbr.rel (0) target = $region13
  $region12: #{_lambda_.21} parent=0 // pred_region
    _
  $region13: #{_lambda_.21} parent=0 // pred_fallthru
    _
  // Predicated region
  $region14: #{_lambda_.21} parent=0 // pred_check
    _
  $region15: #{_lambda_.21} parent=0 // pred_check_branch
    %18 = sbr.rel (0) target = $region17
  $region16: #{_lambda_.21} parent=0 // pred_region
    _
  $region17: #{_lambda_.21} parent=0 // pred_fallthru
    _
  %v19 = vld [vmem:[%s0] sm:$0xff]
  %v20 = vld [vmem:[%s0 + $0x8] sm:$0xff]
  %v21 = vld [vmem:[%s1] sm:$0xff]
  %v22 = vld [vmem:[%s1 + $0x8] sm:$0xff]
  %v23 = vld [vmem:[%s2] sm:$0xff]
  %v24 = vld [vmem:[%s2 + $0x8] sm:$0xff]
  %26 = vset.pattern.permute.xlu0 0
  %27 = vperm.xlu0 %26, %v23
  %v28 = vpop.permute.xlu0 %27
  %31 = vset.pattern.permute.xlu0 0
  %32 = vperm.xlu0 %31, %v24
  %v33 = vpop.permute.xlu0 %32
  %v35 = vmul.f32 %v21, %v28
  %v36 = vmul.f32 %v22, %v33
  %s37 = scalar_lea.vmem %s1, 16
  %v38 = vld [vmem:[%s37] sm:$0xff]
  %v39 = vld [vmem:[%s37 + $0x8] sm:$0xff]
  %s40 = scalar_lea.vmem %s2, 16
  %v41 = vld [vmem:[%s40] sm:$0xff]
  %v42 = vld [vmem:[%s40 + $0x8] sm:$0xff]
  %44 = vset.pattern.permute.xlu0 0
  %45 = vperm.xlu0 %44, %v41
  %v46 = vpop.permute.xlu0 %45
  %49 = vset.pattern.permute.xlu0 0
  %50 = vperm.xlu0 %49, %v42
  %v51 = vpop.permute.xlu0 %50
  %v53 = vmul.f32 %v38, %v46
  %v54 = vmul.f32 %v39, %v51
  %v55 = vadd.f32 %v35, %v53
  %v56 = vadd.f32 %v36, %v54
  %s57 = scalar_lea.vmem %s1, 32
  %v58 = vld [vmem:[%s57] sm:$0xff]
  %v59 = vld [vmem:[%s57 + $0x8] sm:$0xff]
  %s60 = scalar_lea.vmem %s2, 32
  %v61 = vld [vmem:[%s60] sm:$0xff]
  %v62 = vld [vmem:[%s60 + $0x8] sm:$0xff]
  %64 = vset.pattern.permute.xlu0 0
  %65 = vperm.xlu0 %64, %v61
  %v66 = vpop.permute.xlu0 %65
  %69 = vset.pattern.permute.xlu0 0
  %70 = vperm.xlu0 %69, %v62
  %v71 = vpop.permute.xlu0 %70
  %v73 = vmul.f32 %v58, %v66
  %v74 = vmul.f32 %v59, %v71
  %v75 = vadd.f32 %v55, %v73
  %v76 = vadd.f32 %v56, %v74
  %s77 = scalar_lea.vmem %s1, 48
  %v78 = vld [vmem:[%s77] sm:$0xff]
  %v79 = vld [vmem:[%s77 + $0x8] sm:$0xff]
  %s80 = scalar_lea.vmem %s2, 48
  %v81 = vld [vmem:[%s80] sm:$0xff]
  %v82 = vld [vmem:[%s80 + $0x8] sm:$0xff]
  %84 = vset.pattern.permute.xlu0 0
  %85 = vperm.xlu0 %84, %v81
  %v86 = vpop.permute.xlu0 %85
  %89 = vset.pattern.permute.xlu0 0
  %90 = vperm.xlu0 %89, %v82
  %v91 = vpop.permute.xlu0 %90
  %v93 = vmul.f32 %v78, %v86
  %v94 = vmul.f32 %v79, %v91
  %v95 = vadd.f32 %v75, %v93
  %v96 = vadd.f32 %v76, %v94
  %s97 = scalar_lea.vmem %s1, 64
  %v98 = vld [vmem:[%s97] sm:$0xff]
  %v99 = vld [vmem:[%s97 + $0x8] sm:$0xff]
  %s100 = scalar_lea.vmem %s2, 64
  %v101 = vld [vmem:[%s100] sm:$0xff]
  %v102 = vld [vmem:[%s100 + $0x8] sm:$0xff]
  %104 = vset.pattern.permute.xlu0 0
  %105 = vperm.xlu0 %104, %v101
  %v106 = vpop.permute.xlu0 %105
  %109 = vset.pattern.permute.xlu0 0
  %110 = vperm.xlu0 %109, %v102
  %v111 = vpop.permute.xlu0 %110
  %v113 = vmul.f32 %v98, %v106
  %v114 = vmul.f32 %v99, %v111
  %v115 = vadd.f32 %v95, %v113
  %v116 = vadd.f32 %v96, %v114
  %s117 = scalar_lea.vmem %s1, 80
  %v118 = vld [vmem:[%s117] sm:$0xff]
  %v119 = vld [vmem:[%s117 + $0x8] sm:$0xff]
  %s120 = scalar_lea.vmem %s2, 80
  %v121 = vld [vmem:[%s120] sm:$0xff]
  %v122 = vld [vmem:[%s120 + $0x8] sm:$0xff]
  %124 = vset.pattern.permute.xlu0 0
  %125 = vperm.xlu0 %124, %v121
  %v126 = vpop.permute.xlu0 %125
  %129 = vset.pattern.permute.xlu0 0
  %130 = vperm.xlu0 %129, %v122
  %v131 = vpop.permute.xlu0 %130
  %v133 = vmul.f32 %v118, %v126
  %v134 = vmul.f32 %v119, %v131
  %v135 = vadd.f32 %v115, %v133
  %v136 = vadd.f32 %v116, %v134
  %s137 = scalar_lea.vmem %s1, 96
  %v138 = vld [vmem:[%s137] sm:$0xff]
  %v139 = vld [vmem:[%s137 + $0x8] sm:$0xff]
  %s140 = scalar_lea.vmem %s2, 96
  %v141 = vld [vmem:[%s140] sm:$0xff]
  %v142 = vld [vmem:[%s140 + $0x8] sm:$0xff]
  %144 = vset.pattern.permute.xlu0 0
  %145 = vperm.xlu0 %144, %v141
  %v146 = vpop.permute.xlu0 %145
  %149 = vset.pattern.permute.xlu0 0
  %150 = vperm.xlu0 %149, %v142
  %v151 = vpop.permute.xlu0 %150
  %v153 = vmul.f32 %v138, %v146
  %v154 = vmul.f32 %v139, %v151
  %v155 = vadd.f32 %v135, %v153
  %v156 = vadd.f32 %v136, %v154
  %s157 = scalar_lea.vmem %s1, 112
  %v158 = vld [vmem:[%s157] sm:$0xff]
  %v159 = vld [vmem:[%s157 + $0x8] sm:$0xff]
  %s160 = scalar_lea.vmem %s2, 112
  %v161 = vld [vmem:[%s160] sm:$0xff]
  %v162 = vld [vmem:[%s160 + $0x8] sm:$0xff]
  %164 = vset.pattern.permute.xlu0 0
  %165 = vperm.xlu0 %164, %v161
  %v166 = vpop.permute.xlu0 %165
  %169 = vset.pattern.permute.xlu0 0
  %170 = vperm.xlu0 %169, %v162
  %v171 = vpop.permute.xlu0 %170
  %v173 = vmul.f32 %v158, %v166
  %v174 = vmul.f32 %v159, %v171
  %v175 = vadd.f32 %v155, %v173
  %v176 = vadd.f32 %v156, %v174
  %s177 = scalar_lea.vmem %s1, 128
  %v178 = vld [vmem:[%s177] sm:$0xff]
  %v179 = vld [vmem:[%s177 + $0x8] sm:$0xff]
  %s180 = scalar_lea.vmem %s2, 128
  %v181 = vld [vmem:[%s180] sm:$0xff]
  %v182 = vld [vmem:[%s180 + $0x8] sm:$0xff]
  %184 = vset.pattern.permute.xlu0 0
  %185 = vperm.xlu0 %184, %v181
  %v186 = vpop.permute.xlu0 %185
  %189 = vset.pattern.permute.xlu0 0
  %190 = vperm.xlu0 %189, %v182
  %v191 = vpop.permute.xlu0 %190
  %v193 = vmul.f32 %v178, %v186
  %v194 = vmul.f32 %v179, %v191
  %v195 = vadd.f32 %v175, %v193
  %v196 = vadd.f32 %v176, %v194
  %vm197 = vcmask 261120
  %v198 = vsel %vm197, %v195, 0.0
  %199 = vadd.xlane.f32.xlu0 %v198
  %v200 = vpop.xlane.xlu0 %199
  %v201 = vsel %vm197, %v196, 0.0
  %202 = vadd.xlane.f32.xlu0 %v201
  %v203 = vpop.xlane.xlu0 %202
  %v204 = vrcp.pop 32.0
  %v205 = vmul.f32 %v200, %v204
  %v206 = vmul.f32 %v203, %v204
  %v207 = vsub.f32 %v195, %v205
  %v208 = vsub.f32 %v196, %v206
  %v209 = vmul.f32 %v207, %v207
  %v210 = vmul.f32 %v208, %v208
  %v211 = vsel %vm197, %v209, 0.0
  %212 = vadd.xlane.f32.xlu0 %v211
  %v213 = vpop.xlane.xlu0 %212
  %v214 = vsel %vm197, %v210, 0.0
  %215 = vadd.xlane.f32.xlu0 %v214
  %v216 = vpop.xlane.xlu0 %215
  %v217 = vmul.f32 %v213, %v204
  %v218 = vmul.f32 %v216, %v204
  %v219 = vadd.f32 %v217, 1e-05
  %v220 = vadd.f32 %v218, 1e-05
  %v221 = vrsqrt.pop %v219
  %v222 = vrsqrt.pop %v220
  %v223 = vmul.f32 %v207, %v221
  %v224 = vmul.f32 %v208, %v222
  %v225 = vmax.f32 %v19, %v223
  %v226 = vmax.f32 %v20, %v224
  %227 = vst.msk [vmem:[%s4] sm:$0xff] %vm197, %v225
  %228 = vst.msk [vmem:[%s4 + $0x8] sm:$0xff] %vm197, %v226
  %v229 = vld [vmem:[%s3] sm:$0x7]
  %vm230 = vcmask 130048
  %v232 = vsel %vm230, %v229, 0
  %234 = vmatprep.subr.mxu0 0.0
  %235 = vmatpush1.msra.mxu0 0.0
  %236 = vmatprep.subr.mxu0 0.0
  %237 = vmatpush1.msra.mxu0 0.0
  %238 = vmatprep.subr.mxu0 0.0
  %239 = vmatpush1.msra.mxu0 0.0
  %240 = vmatprep.subr.mxu0 0.0
  %241 = vmatpush1.msra.mxu0 0.0
  %242 = vmatprep.subr.mxu0 0.0
  %243 = vmatpush1.msra.mxu0 0.0
  %244 = vmatprep.subr.mxu0 0.0
  %245 = vmatpush1.msra.mxu0 0.0
  %246 = vmatprep.subr.mxu0 0.0
  %247 = vmatpush1.msra.mxu0 0.0
  %248 = vmatprep.subr.mxu0 0.0
  %249 = vmatpush1.msra.mxu0 0.0
  %250 = vmatprep.subr.mxu0 0.0
  %251 = vmatpush1.msra.mxu0 0.0
  %252 = vmatprep.subr.mxu0 0.0
  %253 = vmatpush1.msra.mxu0 0.0
  %254 = vmatprep.subr.mxu0 0.0
  %255 = vmatpush1.msra.mxu0 0.0
  %256 = vmatprep.subr.mxu0 0.0
  %257 = vmatpush1.msra.mxu0 0.0
  %258 = vmatprep.subr.mxu0 0.0
  %259 = vmatpush1.msra.mxu0 0.0
  %260 = vmatprep.subr.mxu0 0.0
  %261 = vmatpush1.msra.mxu0 0.0
  %262 = vmatprep.subr.mxu0 0.0
  %263 = vmatpush1.msra.mxu0 %v226
  %264 = vmatprep.subr.mxu0 0.0
  %265 = vmatpush1.msra.mxu0 %v225
  %266 = vmatprep.subr.mxu0 0.0
  %267 = vmatpush2.msra.mxu0 0.0
  %268 = vmatprep.subr.mxu0 0.0
  %269 = vmatpush2.msra.mxu0 0.0
  %270 = vmatprep.subr.mxu0 0.0
  %271 = vmatpush2.msra.mxu0 0.0
  %272 = vmatprep.subr.mxu0 0.0
  %273 = vmatpush2.msra.mxu0 0.0
  %274 = vmatprep.subr.mxu0 0.0
  %275 = vmatpush2.msra.mxu0 0.0
  %276 = vmatprep.subr.mxu0 0.0
  %277 = vmatpush2.msra.mxu0 0.0
  %278 = vmatprep.subr.mxu0 0.0
  %279 = vmatpush2.msra.mxu0 0.0
  %280 = vmatprep.subr.mxu0 0.0
  %281 = vmatpush2.msra.mxu0 0.0
  %282 = vmatprep.subr.mxu0 0.0
  %283 = vmatpush2.msra.mxu0 0.0
  %284 = vmatprep.subr.mxu0 0.0
  %285 = vmatpush2.msra.mxu0 0.0
  %286 = vmatprep.subr.mxu0 0.0
  %287 = vmatpush2.msra.mxu0 0.0
  %288 = vmatprep.subr.mxu0 0.0
  %289 = vmatpush2.msra.mxu0 0.0
  %290 = vmatprep.subr.mxu0 0.0
  %291 = vmatpush2.msra.mxu0 0.0
  %292 = vmatprep.subr.mxu0 0.0
  %293 = vmatpush2.msra.mxu0 0.0
  %294 = vmatprep.subr.mxu0 0.0
  %295 = vmatpush2.msra.mxu0 0.0
  %296 = vmatprep.subr.mxu0 0.0
  %297 = vmatpush2.msra.mxu0 0.0
  %298 = vmatprep.mubr.f32.mxu0 0.0
  %299 = vmatmul.mubr.f32.gmra.mxu0 %v232
  %v300 = vpop.f32.mrf.mxu0
  %v301 = vadd.f32 0.0, %v300
  %v302 = vpop.f32.mrf.mxu0
  %303 = vdwg.mxu0
  %vm304 = vcmask 256000
  %305 = vst.msk [vmem:[%s5] sm:$0x7] %vm304, %v301
  // Predicated region
  $region18: #{_lambda_.21} parent=0 // pred_check
    _
  $region19: #{_lambda_.21} parent=0 // pred_check_branch
    %307 = sbr.rel (0) target = $region21
  $region20: #{_lambda_.21} parent=0 // pred_region
    _
  $region21: #{_lambda_.21} parent=0 // pred_fallthru
    _
  // Predicated region
  $region22: #{_lambda_.21} parent=0 // pred_check
    _
  $region23: #{_lambda_.21} parent=0 // pred_check_branch
    %309 = sbr.rel (0) target = $region25
  $region24: #{_lambda_.21} parent=0 // pred_region
    _
  $region25: #{_lambda_.21} parent=0 // pred_fallthru
    _
  // Predicated region
  $region26: #{_lambda_.21} parent=0 // pred_check
    _
  $region27: #{_lambda_.21} parent=0 // pred_check_branch
    %311 = sbr.rel (0) target = $region29
  $region28: #{_lambda_.21} parent=0 // pred_region
    _
  $region29: #{_lambda_.21} parent=0 // pred_fallthru
    _
  // Predicated region
  $region30: #{_lambda_.21} parent=0 // pred_check
    _
  $region31: #{_lambda_.21} parent=0 // pred_check_branch
    %313 = sbr.rel (0) target = $region33
  $region32: #{_lambda_.21} parent=0 // pred_region
    _
  $region33: #{_lambda_.21} parent=0 // pred_fallthru
    _

// kernel: _lambda_.22
$region0: #{_lambda_.22}
  #allocation0 [shape = 'u32[]', space=smem, size = 0x4, offset = 0x4, fixed_abs, tag = 'smem constant byte address 0x4 - core index']
  #allocation1 [shape = 'u32[144,128]{1,0:T(1,128)}', space=vmem, size = 0x12000, scoped, tag = 'internal scratch']
  #allocation2 [shape = 'f32[1,1]{1,0:T(1,128)S(1)}', space=vmem, size = 0x200, scoped, tag = 'scoped memory for _lambda_.22']
  %s0 = inlined_call_operand.vmem [shape: f32[256,128], index: 0, kind: input, shape index: {}]
  %s1 = inlined_call_operand.vmem [shape: f32[8,256], index: 1, kind: input, shape index: {}]
  %s2 = inlined_call_operand.vmem [shape: f32[8,1], index: 2, kind: input, shape index: {}]
  %s3 = inlined_call_operand.vmem [shape: f32[1,128], index: 3, kind: input, shape index: {}]
  %s4 = inlined_call_operand.<no memory space> [shape: f32[1,1], index: 4, kind: input, shape index: {}]
  %s5 = inlined_call_operand.vmem [shape: f32[8,128], index: 5, kind: output, shape index: {}]
  %s6 = sld [smem:[#allocation0]]
  $region30: #{_lambda_.22} parent=0
    _
  %s8 = ssub.s32 1, %s6
  %s9 = scalar_select 0, %s8, %s6
  %v10 = vstv %s4
  %11 = vst [vmem:[#allocation2] sm:$0x1] %v10
  // Predicated region
  $region2: #{_lambda_.22} parent=0 // pred_check
    _
  $region3: #{_lambda_.22} parent=0 // pred_check_branch
    %13 = sbr.rel (0) target = $region5
  $region4: #{_lambda_.22} parent=0 // pred_region
    _
  $region5: #{_lambda_.22} parent=0 // pred_fallthru
    _
  // Predicated region
  $region6: #{_lambda_.22} parent=0 // pred_check
    _
  $region7: #{_lambda_.22} parent=0 // pred_check_branch
    %15 = sbr.rel (0) target = $region9
  $region8: #{_lambda_.22} parent=0 // pred_region
    _
  $region9: #{_lambda_.22} parent=0 // pred_fallthru
    _
  // Predicated region
  $region10: #{_lambda_.22} parent=0 // pred_check
    _
  $region11: #{_lambda_.22} parent=0 // pred_check_branch
    %17 = sbr.rel (0) target = $region13
  $region12: #{_lambda_.22} parent=0 // pred_region
    _
  $region13: #{_lambda_.22} parent=0 // pred_fallthru
    _
  // Predicated region
  $region14: #{_lambda_.22} parent=0 // pred_check
    _
  $region15: #{_lambda_.22} parent=0 // pred_check_branch
    %19 = sbr.rel (0) target = $region17
  $region16: #{_lambda_.22} parent=0 // pred_region
    _
  $region17: #{_lambda_.22} parent=0 // pred_fallthru
    _
  // Predicated region
  $region18: #{_lambda_.22} parent=0 // pred_check
    _
  $region19: #{_lambda_.22} parent=0 // pred_check_branch
    %21 = sbr.rel (0) target = $region21
  $region20: #{_lambda_.22} parent=0 // pred_region
    _
  $region21: #{_lambda_.22} parent=0 // pred_fallthru
    _
  %v22 = vld [vmem:[%s1] sm:$0xff]
  %v23 = vld [vmem:[%s1 + $0x8] sm:$0xff]
  %v24 = vld [vmem:[%s0] sm:$0xff]
  %v25 = vld [vmem:[%s0 + $0x8] sm:$0xff]
  %v26 = vld [vmem:[%s0 + $0x10] sm:$0xff]
  %v27 = vld [vmem:[%s0 + $0x18] sm:$0xff]
  %v28 = vld [vmem:[%s0 + $0x20] sm:$0xff]
  %v29 = vld [vmem:[%s0 + $0x28] sm:$0xff]
  %v30 = vld [vmem:[%s0 + $0x30] sm:$0xff]
  %v31 = vld [vmem:[%s0 + $0x38] sm:$0xff]
  %v32 = vld [vmem:[%s0 + $0x40] sm:$0xff]
  %v33 = vld [vmem:[%s0 + $0x48] sm:$0xff]
  %v34 = vld [vmem:[%s0 + $0x50] sm:$0xff]
  %v35 = vld [vmem:[%s0 + $0x58] sm:$0xff]
  %v36 = vld [vmem:[%s0 + $0x60] sm:$0xff]
  %v37 = vld [vmem:[%s0 + $0x68] sm:$0xff]
  %v38 = vld [vmem:[%s0 + $0x70] sm:$0xff]
  %v39 = vld [vmem:[%s0 + $0x78] sm:$0xff]
  %v40 = vld [vmem:[%s0 + $0x80] sm:$0xff]
  %v41 = vld [vmem:[%s0 + $0x88] sm:$0xff]
  %v42 = vld [vmem:[%s0 + $0x90] sm:$0xff]
  %v43 = vld [vmem:[%s0 + $0x98] sm:$0xff]
  %v44 = vld [vmem:[%s0 + $0xa0] sm:$0xff]
  %v45 = vld [vmem:[%s0 + $0xa8] sm:$0xff]
  %v46 = vld [vmem:[%s0 + $0xb0] sm:$0xff]
  %v47 = vld [vmem:[%s0 + $0xb8] sm:$0xff]
  %v48 = vld [vmem:[%s0 + $0xc0] sm:$0xff]
  %v49 = vld [vmem:[%s0 + $0xc8] sm:$0xff]
  %v50 = vld [vmem:[%s0 + $0xd0] sm:$0xff]
  %v51 = vld [vmem:[%s0 + $0xd8] sm:$0xff]
  %v52 = vld [vmem:[%s0 + $0xe0] sm:$0xff]
  %v53 = vld [vmem:[%s0 + $0xe8] sm:$0xff]
  %v54 = vld [vmem:[%s0 + $0xf0] sm:$0xff]
  %v55 = vld [vmem:[%s0 + $0xf8] sm:$0xff]
  %56 = vmatprep.subr.mxu0 0.0
  %57 = vmatpush1.msra.mxu0 %v39
  %58 = vmatprep.subr.mxu0 0.0
  %59 = vmatpush1.msra.mxu0 %v38
  %60 = vmatprep.subr.mxu0 0.0
  %61 = vmatpush1.msra.mxu0 %v37
  %62 = vmatprep.subr.mxu0 0.0
  %63 = vmatpush1.msra.mxu0 %v36
  %64 = vmatprep.subr.mxu0 0.0
  %65 = vmatpush1.msra.mxu0 %v35
  %66 = vmatprep.subr.mxu0 0.0
  %67 = vmatpush1.msra.mxu0 %v34
  %68 = vmatprep.subr.mxu0 0.0
  %69 = vmatpush1.msra.mxu0 %v33
  %70 = vmatprep.subr.mxu0 0.0
  %71 = vmatpush1.msra.mxu0 %v32
  %72 = vmatprep.subr.mxu0 0.0
  %73 = vmatpush1.msra.mxu0 %v31
  %74 = vmatprep.subr.mxu0 0.0
  %75 = vmatpush1.msra.mxu0 %v30
  %76 = vmatprep.subr.mxu0 0.0
  %77 = vmatpush1.msra.mxu0 %v29
  %78 = vmatprep.subr.mxu0 0.0
  %79 = vmatpush1.msra.mxu0 %v28
  %80 = vmatprep.subr.mxu0 0.0
  %81 = vmatpush1.msra.mxu0 %v27
  %82 = vmatprep.subr.mxu0 0.0
  %83 = vmatpush1.msra.mxu0 %v26
  %84 = vmatprep.subr.mxu0 0.0
  %85 = vmatpush1.msra.mxu0 %v25
  %86 = vmatprep.subr.mxu0 0.0
  %87 = vmatpush1.msra.mxu0 %v24
  %88 = vmatprep.subr.mxu0 0.0
  %89 = vmatpush2.msra.mxu0 %v55
  %90 = vmatprep.subr.mxu0 0.0
  %91 = vmatpush2.msra.mxu0 %v54
  %92 = vmatprep.subr.mxu0 0.0
  %93 = vmatpush2.msra.mxu0 %v53
  %94 = vmatprep.subr.mxu0 0.0
  %95 = vmatpush2.msra.mxu0 %v52
  %96 = vmatprep.subr.mxu0 0.0
  %97 = vmatpush2.msra.mxu0 %v51
  %98 = vmatprep.subr.mxu0 0.0
  %99 = vmatpush2.msra.mxu0 %v50
  %100 = vmatprep.subr.mxu0 0.0
  %101 = vmatpush2.msra.mxu0 %v49
  %102 = vmatprep.subr.mxu0 0.0
  %103 = vmatpush2.msra.mxu0 %v48
  %104 = vmatprep.subr.mxu0 0.0
  %105 = vmatpush2.msra.mxu0 %v47
  %106 = vmatprep.subr.mxu0 0.0
  %107 = vmatpush2.msra.mxu0 %v46
  %108 = vmatprep.subr.mxu0 0.0
  %109 = vmatpush2.msra.mxu0 %v45
  %110 = vmatprep.subr.mxu0 0.0
  %111 = vmatpush2.msra.mxu0 %v44
  %112 = vmatprep.subr.mxu0 0.0
  %113 = vmatpush2.msra.mxu0 %v43
  %114 = vmatprep.subr.mxu0 0.0
  %115 = vmatpush2.msra.mxu0 %v42
  %116 = vmatprep.subr.mxu0 0.0
  %117 = vmatpush2.msra.mxu0 %v41
  %118 = vmatprep.subr.mxu0 0.0
  %119 = vmatpush2.msra.mxu0 %v40
  %120 = vmatprep.mubr.f32.mxu0 %v23
  %121 = vmatmul.mubr.f32.gmra.mxu0 %v22
  %v122 = vpop.f32.mrf.mxu0
  %v123 = vadd.f32 0.0, %v122
  %v124 = vpop.f32.mrf.mxu0
  %125 = vdwg.mxu0
  %v126 = vld [vmem:[%s2] sm:$0xff]
  %128 = vset.pattern.permute.xlu0 0
  %129 = vperm.xlu0 %128, %v126
  %v130 = vpop.permute.xlu0 %129
  %v132 = vmul.f32 %v123, %v130
  %v133 = vld [vmem:[#allocation2] sm:$0x1]
  %v134 = vld [vmem:[%s3] sm:$0x1]
  %136 = vset.pattern.permute.xlu0 0
  %137 = vperm.xlu0 %136, %v133
  %v138 = vpop.permute.xlu0 %137
  %v140 = vlaneseq
  %v141 = vshrl.u32 %v140, 7
  %v142 = vsub.s32 0, %v141
  %v143 = vrot.slane %v138, %v142
  %v144 = vmul.f32 %v143, %v134
  %v146 = vlaneseq
  %v147 = vshrl.u32 %v146, 7
  %v148 = vsub.s32 0, %v147
  %v149 = vrot.slane %v144, %v148
  %v151 = vadd.f32 %v132, %v149
  %v152 = vmul.f32 %v151, %v151
  %v153 = vrot.slane %v152, 4
  %v154 = vadd.f32 %v152, %v153
  %v155 = vrot.slane %v154, 2
  %v156 = vadd.f32 %v154, %v155
  %v157 = vrot.slane %v156, 1
  %v158 = vadd.f32 %v156, %v157
  %v159 = vrcp.pop 8.0
  %v160 = vmul.f32 %v158, %v159
  %v161 = vadd.f32 %v160, 1e-08
  %v162 = vrsqrt.pop %v161
  %v163 = vmul.f32 %v151, %v162
  %164 = vst [vmem:[%s5] sm:$0xff] %v163
  // Predicated region
  $region22: #{_lambda_.22} parent=0 // pred_check
    _
  $region23: #{_lambda_.22} parent=0 // pred_check_branch
    %166 = sbr.rel (0) target = $region25
  $region24: #{_lambda_.22} parent=0 // pred_region
    _
  $region25: #{_lambda_.22} parent=0 // pred_fallthru
    _
  // Predicated region
  $region26: #{_lambda_.22} parent=0 // pred_check
    _
  $region27: #{_lambda_.22} parent=0 // pred_check_branch
    %168 = sbr.rel (0) target = $region29
  $region28: #{_lambda_.22} parent=0 // pred_region
    _
  $region29: #{_lambda_.22} parent=0 // pred_fallthru
    _

// kernel: mul.82
$region0: #{mul.82}
  #allocation0 [shape = 's32[1]{0}', space=sflag, size = 0x4, scoped, tag = 'scoped memory for mul.82']
  %s0 = inlined_call_operand.vmem [shape: f32[8,2], index: 0, kind: input, shape index: {}]
  %s1 = inlined_call_operand.vmem [shape: f32[8,2,8,8], index: 1, kind: output, shape index: {}]
  // Predicated region
  $region2: #{mul.82} parent=0 // pred_check
    _
  $region3: #{mul.82} parent=0 // pred_check_branch
    %3 = sbr.rel (0) target = $region5
  $region4: #{mul.82} parent=0 // pred_region
    _
  $region5: #{mul.82} parent=0 // pred_fallthru
    _
  %v4 = vld [vmem:[%s0] ss:$0 sm:$0xff]
  %5 = vbcast.lane.b32.xlu0 %v4, 0
  %v6 = vpop.permute.xlu0 %5
  %7 = vst [vmem:[%s1] sm:$0xff] %v6
  %s8 = scalar_lea.vmem %s0, 1
  %v9 = vld [vmem:[%s8] ss:$0 sm:$0xff]
  %10 = vbcast.lane.b32.xlu0 %v9, 0
  %v11 = vpop.permute.xlu0 %10
  %s12 = scalar_lea.vmem %s1, 16
  %13 = vst [vmem:[%s12] sm:$0xff] %v11
  %s14 = scalar_lea.vmem %s0, 2
  %v15 = vld [vmem:[%s14] ss:$0 sm:$0xff]
  %16 = vbcast.lane.b32.xlu0 %v15, 0
  %v17 = vpop.permute.xlu0 %16
  %s18 = scalar_lea.vmem %s1, 32
  %19 = vst [vmem:[%s18] sm:$0xff] %v17
  %s20 = scalar_lea.vmem %s0, 3
  %v21 = vld [vmem:[%s20] ss:$0 sm:$0xff]
  %22 = vbcast.lane.b32.xlu0 %v21, 0
  %v23 = vpop.permute.xlu0 %22
  %s24 = scalar_lea.vmem %s1, 48
  %25 = vst [vmem:[%s24] sm:$0xff] %v23
  %s26 = scalar_lea.vmem %s0, 4
  %v27 = vld [vmem:[%s26] ss:$0 sm:$0xff]
  %28 = vbcast.lane.b32.xlu0 %v27, 0
  %v29 = vpop.permute.xlu0 %28
  %s30 = scalar_lea.vmem %s1, 64
  %31 = vst [vmem:[%s30] sm:$0xff] %v29
  %s32 = scalar_lea.vmem %s0, 5
  %v33 = vld [vmem:[%s32] ss:$0 sm:$0xff]
  %34 = vbcast.lane.b32.xlu0 %v33, 0
  %v35 = vpop.permute.xlu0 %34
  %s36 = scalar_lea.vmem %s1, 80
  %37 = vst [vmem:[%s36] sm:$0xff] %v35
  %s38 = scalar_lea.vmem %s0, 6
  %v39 = vld [vmem:[%s38] ss:$0 sm:$0xff]
  %40 = vbcast.lane.b32.xlu0 %v39, 0
  %v41 = vpop.permute.xlu0 %40
  %s42 = scalar_lea.vmem %s1, 96
  %43 = vst [vmem:[%s42] sm:$0xff] %v41
  %s44 = scalar_lea.vmem %s0, 7
  %v45 = vld [vmem:[%s44] ss:$0 sm:$0xff]
  %46 = vbcast.lane.b32.xlu0 %v45, 0
  %v47 = vpop.permute.xlu0 %46
  %s48 = scalar_lea.vmem %s1, 112
  %49 = vst [vmem:[%s48] sm:$0xff] %v47
  %v50 = vld [vmem:[%s0] ss:$0 sm:$0xff]
  %51 = vbcast.lane.b32.xlu0 %v50, 1
  %v52 = vpop.permute.xlu0 %51
  %s53 = scalar_lea.vmem %s1, 8
  %54 = vst [vmem:[%s53] sm:$0xff] %v52
  %s55 = scalar_lea.vmem %s0, 1
  %v56 = vld [vmem:[%s55] ss:$0 sm:$0xff]
  %57 = vbcast.lane.b32.xlu0 %v56, 1
  %v58 = vpop.permute.xlu0 %57
  %s59 = scalar_lea.vmem %s1, 24
  %60 = vst [vmem:[%s59] sm:$0xff] %v58
  %s61 = scalar_lea.vmem %s0, 2
  %v62 = vld [vmem:[%s61] ss:$0 sm:$0xff]
  %63 = vbcast.lane.b32.xlu0 %v62, 1
  %v64 = vpop.permute.xlu0 %63
  %s65 = scalar_lea.vmem %s1, 40
  %66 = vst [vmem:[%s65] sm:$0xff] %v64
  %s67 = scalar_lea.vmem %s0, 3
  %v68 = vld [vmem:[%s67] ss:$0 sm:$0xff]
  %69 = vbcast.lane.b32.xlu0 %v68, 1
  %v70 = vpop.permute.xlu0 %69
  %s71 = scalar_lea.vmem %s1, 56
  %72 = vst [vmem:[%s71] sm:$0xff] %v70
  %s73 = scalar_lea.vmem %s0, 4
  %v74 = vld [vmem:[%s73] ss:$0 sm:$0xff]
  %75 = vbcast.lane.b32.xlu0 %v74, 1
  %v76 = vpop.permute.xlu0 %75
  %s77 = scalar_lea.vmem %s1, 72
  %78 = vst [vmem:[%s77] sm:$0xff] %v76
  %s79 = scalar_lea.vmem %s0, 5
  %v80 = vld [vmem:[%s79] ss:$0 sm:$0xff]
  %81 = vbcast.lane.b32.xlu0 %v80, 1
  %v82 = vpop.permute.xlu0 %81
  %s83 = scalar_lea.vmem %s1, 88
  %84 = vst [vmem:[%s83] sm:$0xff] %v82
  %s85 = scalar_lea.vmem %s0, 6
  %v86 = vld [vmem:[%s85] ss:$0 sm:$0xff]
  %87 = vbcast.lane.b32.xlu0 %v86, 1
  %v88 = vpop.permute.xlu0 %87
  %s89 = scalar_lea.vmem %s1, 104
  %90 = vst [vmem:[%s89] sm:$0xff] %v88
  %s91 = scalar_lea.vmem %s0, 7
  %v92 = vld [vmem:[%s91] ss:$0 sm:$0xff]
  %93 = vbcast.lane.b32.xlu0 %v92, 1
  %v94 = vpop.permute.xlu0 %93
  %s95 = scalar_lea.vmem %s1, 120
  %96 = vst [vmem:[%s95] sm:$0xff] %v94

// kernel: _lambda_.23
$region0: #{_lambda_.23}
  #allocation0 [shape = 'u32[]', space=smem, size = 0x4, offset = 0x4, fixed_abs, tag = 'smem constant byte address 0x4 - core index']
  #allocation1 [shape = 'u32[144,128]{1,0:T(1,128)}', space=vmem, size = 0x12000, scoped, tag = 'internal scratch']
  %s0 = inlined_call_operand.vmem [shape: f32[8,128], index: 0, kind: input, shape index: {}]
  %s1 = inlined_call_operand.vmem [shape: f32[9,8,128], index: 1, kind: input, shape index: {}]
  %s2 = inlined_call_operand.vmem [shape: f32[9,8,1], index: 2, kind: input, shape index: {}]
  %s3 = inlined_call_operand.vmem [shape: f32[8,128], index: 3, kind: output, shape index: {}]
  %s4 = sld [smem:[#allocation0]]
  $region22: #{_lambda_.23} parent=0
    _
  %s6 = ssub.s32 1, %s4
  %s7 = scalar_select 0, %s6, %s4
  // Predicated region
  $region2: #{_lambda_.23} parent=0 // pred_check
    _
  $region3: #{_lambda_.23} parent=0 // pred_check_branch
    %9 = sbr.rel (0) target = $region5
  $region4: #{_lambda_.23} parent=0 // pred_region
    _
  $region5: #{_lambda_.23} parent=0 // pred_fallthru
    _
  // Predicated region
  $region6: #{_lambda_.23} parent=0 // pred_check
    _
  $region7: #{_lambda_.23} parent=0 // pred_check_branch
    %11 = sbr.rel (0) target = $region9
  $region8: #{_lambda_.23} parent=0 // pred_region
    _
  $region9: #{_lambda_.23} parent=0 // pred_fallthru
    _
  // Predicated region
  $region10: #{_lambda_.23} parent=0 // pred_check
    _
  $region11: #{_lambda_.23} parent=0 // pred_check_branch
    %13 = sbr.rel (0) target = $region13
  $region12: #{_lambda_.23} parent=0 // pred_region
    _
  $region13: #{_lambda_.23} parent=0 // pred_fallthru
    _
  %v14 = vld [vmem:[%s0] sm:$0xff]
  %v15 = vld [vmem:[%s1] sm:$0xff]
  %v16 = vld [vmem:[%s2] sm:$0xff]
  %18 = vset.pattern.permute.xlu0 0
  %19 = vperm.xlu0 %18, %v16
  %v20 = vpop.permute.xlu0 %19
  %v22 = vmul.f32 %v15, %v20
  %s23 = scalar_lea.vmem %s1, 8
  %v24 = vld [vmem:[%s23] sm:$0xff]
  %s25 = scalar_lea.vmem %s2, 8
  %v26 = vld [vmem:[%s25] sm:$0xff]
  %28 = vset.pattern.permute.xlu0 0
  %29 = vperm.xlu0 %28, %v26
  %v30 = vpop.permute.xlu0 %29
  %v32 = vmul.f32 %v24, %v30
  %v33 = vadd.f32 %v22, %v32
  %s34 = scalar_lea.vmem %s1, 16
  %v35 = vld [vmem:[%s34] sm:$0xff]
  %s36 = scalar_lea.vmem %s2, 16
  %v37 = vld [vmem:[%s36] sm:$0xff]
  %39 = vset.pattern.permute.xlu0 0
  %40 = vperm.xlu0 %39, %v37
  %v41 = vpop.permute.xlu0 %40
  %v43 = vmul.f32 %v35, %v41
  %v44 = vadd.f32 %v33, %v43
  %s45 = scalar_lea.vmem %s1, 24
  %v46 = vld [vmem:[%s45] sm:$0xff]
  %s47 = scalar_lea.vmem %s2, 24
  %v48 = vld [vmem:[%s47] sm:$0xff]
  %50 = vset.pattern.permute.xlu0 0
  %51 = vperm.xlu0 %50, %v48
  %v52 = vpop.permute.xlu0 %51
  %v54 = vmul.f32 %v46, %v52
  %v55 = vadd.f32 %v44, %v54
  %s56 = scalar_lea.vmem %s1, 32
  %v57 = vld [vmem:[%s56] sm:$0xff]
  %s58 = scalar_lea.vmem %s2, 32
  %v59 = vld [vmem:[%s58] sm:$0xff]
  %61 = vset.pattern.permute.xlu0 0
  %62 = vperm.xlu0 %61, %v59
  %v63 = vpop.permute.xlu0 %62
  %v65 = vmul.f32 %v57, %v63
  %v66 = vadd.f32 %v55, %v65
  %s67 = scalar_lea.vmem %s1, 40
  %v68 = vld [vmem:[%s67] sm:$0xff]
  %s69 = scalar_lea.vmem %s2, 40
  %v70 = vld [vmem:[%s69] sm:$0xff]
  %72 = vset.pattern.permute.xlu0 0
  %73 = vperm.xlu0 %72, %v70
  %v74 = vpop.permute.xlu0 %73
  %v76 = vmul.f32 %v68, %v74
  %v77 = vadd.f32 %v66, %v76
  %s78 = scalar_lea.vmem %s1, 48
  %v79 = vld [vmem:[%s78] sm:$0xff]
  %s80 = scalar_lea.vmem %s2, 48
  %v81 = vld [vmem:[%s80] sm:$0xff]
  %83 = vset.pattern.permute.xlu0 0
  %84 = vperm.xlu0 %83, %v81
  %v85 = vpop.permute.xlu0 %84
  %v87 = vmul.f32 %v79, %v85
  %v88 = vadd.f32 %v77, %v87
  %s89 = scalar_lea.vmem %s1, 56
  %v90 = vld [vmem:[%s89] sm:$0xff]
  %s91 = scalar_lea.vmem %s2, 56
  %v92 = vld [vmem:[%s91] sm:$0xff]
  %94 = vset.pattern.permute.xlu0 0
  %95 = vperm.xlu0 %94, %v92
  %v96 = vpop.permute.xlu0 %95
  %v98 = vmul.f32 %v90, %v96
  %v99 = vadd.f32 %v88, %v98
  %s100 = scalar_lea.vmem %s1, 64
  %v101 = vld [vmem:[%s100] sm:$0xff]
  %s102 = scalar_lea.vmem %s2, 64
  %v103 = vld [vmem:[%s102] sm:$0xff]
  %105 = vset.pattern.permute.xlu0 0
  %106 = vperm.xlu0 %105, %v103
  %v107 = vpop.permute.xlu0 %106
  %v109 = vmul.f32 %v101, %v107
  %v110 = vadd.f32 %v99, %v109
  %111 = vadd.xlane.f32.xlu0 %v110
  %v112 = vpop.xlane.xlu0 %111
  %v113 = vrcp.pop 128.0
  %v114 = vmul.f32 %v112, %v113
  %v115 = vsub.f32 %v110, %v114
  %v116 = vmul.f32 %v115, %v115
  %117 = vadd.xlane.f32.xlu0 %v116
  %v118 = vpop.xlane.xlu0 %117
  %v119 = vmul.f32 %v118, %v113
  %v120 = vadd.f32 %v119, 1e-05
  %v121 = vrsqrt.pop %v120
  %v122 = vmul.f32 %v115, %v121
  %v123 = vmax.f32 %v14, %v122
  %124 = vst [vmem:[%s3] sm:$0xff] %v123
  // Predicated region
  $region14: #{_lambda_.23} parent=0 // pred_check
    _
  $region15: #{_lambda_.23} parent=0 // pred_check_branch
    %126 = sbr.rel (0) target = $region17
  $region16: #{_lambda_.23} parent=0 // pred_region
    _
  $region17: #{_lambda_.23} parent=0 // pred_fallthru
    _
  // Predicated region
  $region18: #{_lambda_.23} parent=0 // pred_check
    _
  $region19: #{_lambda_.23} parent=0 // pred_check_branch
    %128 = sbr.rel (0) target = $region21
  $region20: #{_lambda_.23} parent=0 // pred_region
    _
  $region21: #{_lambda_.23} parent=0 // pred_fallthru
    _

// kernel: _lambda_.24
$region0: #{_lambda_.24}
  #allocation0 [shape = 'u32[]', space=smem, size = 0x4, offset = 0x4, fixed_abs, tag = 'smem constant byte address 0x4 - core index']
  #allocation1 [shape = 'u32[144,128]{1,0:T(1,128)}', space=vmem, size = 0x12000, scoped, tag = 'internal scratch']
  #allocation2 [shape = 'f32[1,1]{1,0:T(1,128)S(1)}', space=vmem, size = 0x200, scoped, tag = 'scoped memory for _lambda_.24']
  %s0 = inlined_call_operand.vmem [shape: f32[72,128], index: 0, kind: input, shape index: {}]
  %s1 = inlined_call_operand.vmem [shape: f32[8,72], index: 1, kind: input, shape index: {}]
  %s2 = inlined_call_operand.vmem [shape: f32[8,1], index: 2, kind: input, shape index: {}]
  %s3 = inlined_call_operand.vmem [shape: f32[1,128], index: 3, kind: input, shape index: {}]
  %s4 = inlined_call_operand.<no memory space> [shape: f32[1,1], index: 4, kind: input, shape index: {}]
  %s5 = inlined_call_operand.vmem [shape: f32[8,128], index: 5, kind: output, shape index: {}]
  %s6 = sld [smem:[#allocation0]]
  $region30: #{_lambda_.24} parent=0
    _
  %s8 = ssub.s32 1, %s6
  %s9 = scalar_select 0, %s8, %s6
  %v10 = vstv %s4
  %11 = vst [vmem:[#allocation2] sm:$0x1] %v10
  // Predicated region
  $region2: #{_lambda_.24} parent=0 // pred_check
    _
  $region3: #{_lambda_.24} parent=0 // pred_check_branch
    %13 = sbr.rel (0) target = $region5
  $region4: #{_lambda_.24} parent=0 // pred_region
    _
  $region5: #{_lambda_.24} parent=0 // pred_fallthru
    _
  // Predicated region
  $region6: #{_lambda_.24} parent=0 // pred_check
    _
  $region7: #{_lambda_.24} parent=0 // pred_check_branch
    %15 = sbr.rel (0) target = $region9
  $region8: #{_lambda_.24} parent=0 // pred_region
    _
  $region9: #{_lambda_.24} parent=0 // pred_fallthru
    _
  // Predicated region
  $region10: #{_lambda_.24} parent=0 // pred_check
    _
  $region11: #{_lambda_.24} parent=0 // pred_check_branch
    %17 = sbr.rel (0) target = $region13
  $region12: #{_lambda_.24} parent=0 // pred_region
    _
  $region13: #{_lambda_.24} parent=0 // pred_fallthru
    _
  // Predicated region
  $region14: #{_lambda_.24} parent=0 // pred_check
    _
  $region15: #{_lambda_.24} parent=0 // pred_check_branch
    %19 = sbr.rel (0) target = $region17
  $region16: #{_lambda_.24} parent=0 // pred_region
    _
  $region17: #{_lambda_.24} parent=0 // pred_fallthru
    _
  // Predicated region
  $region18: #{_lambda_.24} parent=0 // pred_check
    _
  $region19: #{_lambda_.24} parent=0 // pred_check_branch
    %21 = sbr.rel (0) target = $region21
  $region20: #{_lambda_.24} parent=0 // pred_region
    _
  $region21: #{_lambda_.24} parent=0 // pred_fallthru
    _
  %v22 = vld [vmem:[%s1] sm:$0xff]
  %v23 = vld [vmem:[%s0] sm:$0xff]
  %v24 = vld [vmem:[%s0 + $0x8] sm:$0xff]
  %v25 = vld [vmem:[%s0 + $0x10] sm:$0xff]
  %v26 = vld [vmem:[%s0 + $0x18] sm:$0xff]
  %v27 = vld [vmem:[%s0 + $0x20] sm:$0xff]
  %v28 = vld [vmem:[%s0 + $0x28] sm:$0xff]
  %v29 = vld [vmem:[%s0 + $0x30] sm:$0xff]
  %v30 = vld [vmem:[%s0 + $0x38] sm:$0xff]
  %v31 = vld [vmem:[%s0 + $0x40] sm:$0xff]
  %vm32 = vcmask 588800
  %v34 = vsel %vm32, %v22, 0
  %36 = vmatprep.subr.mxu0 0.0
  %37 = vmatpush1.msra.mxu0 0.0
  %38 = vmatprep.subr.mxu0 0.0
  %39 = vmatpush1.msra.mxu0 0.0
  %40 = vmatprep.subr.mxu0 0.0
  %41 = vmatpush1.msra.mxu0 0.0
  %42 = vmatprep.subr.mxu0 0.0
  %43 = vmatpush1.msra.mxu0 0.0
  %44 = vmatprep.subr.mxu0 0.0
  %45 = vmatpush1.msra.mxu0 0.0
  %46 = vmatprep.subr.mxu0 0.0
  %47 = vmatpush1.msra.mxu0 0.0
  %48 = vmatprep.subr.mxu0 0.0
  %49 = vmatpush1.msra.mxu0 0.0
  %50 = vmatprep.subr.mxu0 0.0
  %51 = vmatpush1.msra.mxu0 %v31
  %52 = vmatprep.subr.mxu0 0.0
  %53 = vmatpush1.msra.mxu0 %v30
  %54 = vmatprep.subr.mxu0 0.0
  %55 = vmatpush1.msra.mxu0 %v29
  %56 = vmatprep.subr.mxu0 0.0
  %57 = vmatpush1.msra.mxu0 %v28
  %58 = vmatprep.subr.mxu0 0.0
  %59 = vmatpush1.msra.mxu0 %v27
  %60 = vmatprep.subr.mxu0 0.0
  %61 = vmatpush1.msra.mxu0 %v26
  %62 = vmatprep.subr.mxu0 0.0
  %63 = vmatpush1.msra.mxu0 %v25
  %64 = vmatprep.subr.mxu0 0.0
  %65 = vmatpush1.msra.mxu0 %v24
  %66 = vmatprep.subr.mxu0 0.0
  %67 = vmatpush1.msra.mxu0 %v23
  %68 = vmatprep.subr.mxu0 0.0
  %69 = vmatpush2.msra.mxu0 0.0
  %70 = vmatprep.subr.mxu0 0.0
  %71 = vmatpush2.msra.mxu0 0.0
  %72 = vmatprep.subr.mxu0 0.0
  %73 = vmatpush2.msra.mxu0 0.0
  %74 = vmatprep.subr.mxu0 0.0
  %75 = vmatpush2.msra.mxu0 0.0
  %76 = vmatprep.subr.mxu0 0.0
  %77 = vmatpush2.msra.mxu0 0.0
  %78 = vmatprep.subr.mxu0 0.0
  %79 = vmatpush2.msra.mxu0 0.0
  %80 = vmatprep.subr.mxu0 0.0
  %81 = vmatpush2.msra.mxu0 0.0
  %82 = vmatprep.subr.mxu0 0.0
  %83 = vmatpush2.msra.mxu0 0.0
  %84 = vmatprep.subr.mxu0 0.0
  %85 = vmatpush2.msra.mxu0 0.0
  %86 = vmatprep.subr.mxu0 0.0
  %87 = vmatpush2.msra.mxu0 0.0
  %88 = vmatprep.subr.mxu0 0.0
  %89 = vmatpush2.msra.mxu0 0.0
  %90 = vmatprep.subr.mxu0 0.0
  %91 = vmatpush2.msra.mxu0 0.0
  %92 = vmatprep.subr.mxu0 0.0
  %93 = vmatpush2.msra.mxu0 0.0
  %94 = vmatprep.subr.mxu0 0.0
  %95 = vmatpush2.msra.mxu0 0.0
  %96 = vmatprep.subr.mxu0 0.0
  %97 = vmatpush2.msra.mxu0 0.0
  %98 = vmatprep.subr.mxu0 0.0
  %99 = vmatpush2.msra.mxu0 0.0
  %100 = vmatprep.mubr.f32.mxu0 0.0
  %101 = vmatmul.mubr.f32.gmra.mxu0 %v34
  %v102 = vpop.f32.mrf.mxu0
  %v103 = vadd.f32 0.0, %v102
  %v104 = vpop.f32.mrf.mxu0
  %105 = vdwg.mxu0
  %v106 = vld [vmem:[%s2] sm:$0xff]
  %108 = vset.pattern.permute.xlu0 0
  %109 = vperm.xlu0 %108, %v106
  %v110 = vpop.permute.xlu0 %109
  %v112 = vmul.f32 %v103, %v110
  %v113 = vld [vmem:[#allocation2] sm:$0x1]
  %v114 = vld [vmem:[%s3] sm:$0x1]
  %116 = vset.pattern.permute.xlu0 0
  %117 = vperm.xlu0 %116, %v113
  %v118 = vpop.permute.xlu0 %117
  %v120 = vlaneseq
  %v121 = vshrl.u32 %v120, 7
  %v122 = vsub.s32 0, %v121
  %v123 = vrot.slane %v118, %v122
  %v124 = vmul.f32 %v123, %v114
  %v126 = vlaneseq
  %v127 = vshrl.u32 %v126, 7
  %v128 = vsub.s32 0, %v127
  %v129 = vrot.slane %v124, %v128
  %v131 = vadd.f32 %v112, %v129
  %v132 = vmul.f32 %v131, %v131
  %v133 = vrot.slane %v132, 4
  %v134 = vadd.f32 %v132, %v133
  %v135 = vrot.slane %v134, 2
  %v136 = vadd.f32 %v134, %v135
  %v137 = vrot.slane %v136, 1
  %v138 = vadd.f32 %v136, %v137
  %v139 = vrcp.pop 8.0
  %v140 = vmul.f32 %v138, %v139
  %v141 = vadd.f32 %v140, 1e-08
  %v142 = vrsqrt.pop %v141
  %v143 = vmul.f32 %v131, %v142
  %144 = vst [vmem:[%s5] sm:$0xff] %v143
  // Predicated region
  $region22: #{_lambda_.24} parent=0 // pred_check
    _
  $region23: #{_lambda_.24} parent=0 // pred_check_branch
    %146 = sbr.rel (0) target = $region25
  $region24: #{_lambda_.24} parent=0 // pred_region
    _
  $region25: #{_lambda_.24} parent=0 // pred_fallthru
    _
  // Predicated region
  $region26: #{_lambda_.24} parent=0 // pred_check
    _
  $region27: #{_lambda_.24} parent=0 // pred_check_branch
    %148 = sbr.rel (0) target = $region29
  $region28: #{_lambda_.24} parent=0 // pred_region
    _
  $region29: #{_lambda_.24} parent=0 // pred_fallthru
    _

// kernel: _lambda_.25
$region0: #{_lambda_.25}
  #allocation0 [shape = 'u32[]', space=smem, size = 0x4, offset = 0x4, fixed_abs, tag = 'smem constant byte address 0x4 - core index']
  #allocation1 [shape = 'u32[144,128]{1,0:T(1,128)}', space=vmem, size = 0x12000, scoped, tag = 'internal scratch']
  %s0 = inlined_call_operand.vmem [shape: f32[8,128], index: 0, kind: input, shape index: {}]
  %s1 = inlined_call_operand.vmem [shape: f32[9,8,128], index: 1, kind: input, shape index: {}]
  %s2 = inlined_call_operand.vmem [shape: f32[9,8,1], index: 2, kind: input, shape index: {}]
  %s3 = inlined_call_operand.vmem [shape: f32[3,8], index: 3, kind: input, shape index: {}]
  %s4 = inlined_call_operand.vmem [shape: f32[8,128], index: 4, kind: output, shape index: {0}]
  %s5 = inlined_call_operand.vmem [shape: f32[3,128], index: 5, kind: output, shape index: {1}]
  %6 = xla_tuple %s4, %s5
  %s7 = sld [smem:[#allocation0]]
  $region34: #{_lambda_.25} parent=0
    _
  %s9 = ssub.s32 1, %s7
  %s10 = scalar_select 0, %s9, %s7
  // Predicated region
  $region2: #{_lambda_.25} parent=0 // pred_check
    _
  $region3: #{_lambda_.25} parent=0 // pred_check_branch
    %12 = sbr.rel (0) target = $region5
  $region4: #{_lambda_.25} parent=0 // pred_region
    _
  $region5: #{_lambda_.25} parent=0 // pred_fallthru
    _
  // Predicated region
  $region6: #{_lambda_.25} parent=0 // pred_check
    _
  $region7: #{_lambda_.25} parent=0 // pred_check_branch
    %14 = sbr.rel (0) target = $region9
  $region8: #{_lambda_.25} parent=0 // pred_region
    _
  $region9: #{_lambda_.25} parent=0 // pred_fallthru
    _
  // Predicated region
  $region10: #{_lambda_.25} parent=0 // pred_check
    _
  $region11: #{_lambda_.25} parent=0 // pred_check_branch
    %16 = sbr.rel (0) target = $region13
  $region12: #{_lambda_.25} parent=0 // pred_region
    _
  $region13: #{_lambda_.25} parent=0 // pred_fallthru
    _
  // Predicated region
  $region14: #{_lambda_.25} parent=0 // pred_check
    _
  $region15: #{_lambda_.25} parent=0 // pred_check_branch
    %18 = sbr.rel (0) target = $region17
  $region16: #{_lambda_.25} parent=0 // pred_region
    _
  $region17: #{_lambda_.25} parent=0 // pred_fallthru
    _
  %v19 = vld [vmem:[%s0] sm:$0xff]
  %v20 = vld [vmem:[%s1] sm:$0xff]
  %v21 = vld [vmem:[%s2] sm:$0xff]
  %23 = vset.pattern.permute.xlu0 0
  %24 = vperm.xlu0 %23, %v21
  %v25 = vpop.permute.xlu0 %24
  %v27 = vmul.f32 %v20, %v25
  %s28 = scalar_lea.vmem %s1, 8
  %v29 = vld [vmem:[%s28] sm:$0xff]
  %s30 = scalar_lea.vmem %s2, 8
  %v31 = vld [vmem:[%s30] sm:$0xff]
  %33 = vset.pattern.permute.xlu0 0
  %34 = vperm.xlu0 %33, %v31
  %v35 = vpop.permute.xlu0 %34
  %v37 = vmul.f32 %v29, %v35
  %v38 = vadd.f32 %v27, %v37
  %s39 = scalar_lea.vmem %s1, 16
  %v40 = vld [vmem:[%s39] sm:$0xff]
  %s41 = scalar_lea.vmem %s2, 16
  %v42 = vld [vmem:[%s41] sm:$0xff]
  %44 = vset.pattern.permute.xlu0 0
  %45 = vperm.xlu0 %44, %v42
  %v46 = vpop.permute.xlu0 %45
  %v48 = vmul.f32 %v40, %v46
  %v49 = vadd.f32 %v38, %v48
  %s50 = scalar_lea.vmem %s1, 24
  %v51 = vld [vmem:[%s50] sm:$0xff]
  %s52 = scalar_lea.vmem %s2, 24
  %v53 = vld [vmem:[%s52] sm:$0xff]
  %55 = vset.pattern.permute.xlu0 0
  %56 = vperm.xlu0 %55, %v53
  %v57 = vpop.permute.xlu0 %56
  %v59 = vmul.f32 %v51, %v57
  %v60 = vadd.f32 %v49, %v59
  %s61 = scalar_lea.vmem %s1, 32
  %v62 = vld [vmem:[%s61] sm:$0xff]
  %s63 = scalar_lea.vmem %s2, 32
  %v64 = vld [vmem:[%s63] sm:$0xff]
  %66 = vset.pattern.permute.xlu0 0
  %67 = vperm.xlu0 %66, %v64
  %v68 = vpop.permute.xlu0 %67
  %v70 = vmul.f32 %v62, %v68
  %v71 = vadd.f32 %v60, %v70
  %s72 = scalar_lea.vmem %s1, 40
  %v73 = vld [vmem:[%s72] sm:$0xff]
  %s74 = scalar_lea.vmem %s2, 40
  %v75 = vld [vmem:[%s74] sm:$0xff]
  %77 = vset.pattern.permute.xlu0 0
  %78 = vperm.xlu0 %77, %v75
  %v79 = vpop.permute.xlu0 %78
  %v81 = vmul.f32 %v73, %v79
  %v82 = vadd.f32 %v71, %v81
  %s83 = scalar_lea.vmem %s1, 48
  %v84 = vld [vmem:[%s83] sm:$0xff]
  %s85 = scalar_lea.vmem %s2, 48
  %v86 = vld [vmem:[%s85] sm:$0xff]
  %88 = vset.pattern.permute.xlu0 0
  %89 = vperm.xlu0 %88, %v86
  %v90 = vpop.permute.xlu0 %89
  %v92 = vmul.f32 %v84, %v90
  %v93 = vadd.f32 %v82, %v92
  %s94 = scalar_lea.vmem %s1, 56
  %v95 = vld [vmem:[%s94] sm:$0xff]
  %s96 = scalar_lea.vmem %s2, 56
  %v97 = vld [vmem:[%s96] sm:$0xff]
  %99 = vset.pattern.permute.xlu0 0
  %100 = vperm.xlu0 %99, %v97
  %v101 = vpop.permute.xlu0 %100
  %v103 = vmul.f32 %v95, %v101
  %v104 = vadd.f32 %v93, %v103
  %s105 = scalar_lea.vmem %s1, 64
  %v106 = vld [vmem:[%s105] sm:$0xff]
  %s107 = scalar_lea.vmem %s2, 64
  %v108 = vld [vmem:[%s107] sm:$0xff]
  %110 = vset.pattern.permute.xlu0 0
  %111 = vperm.xlu0 %110, %v108
  %v112 = vpop.permute.xlu0 %111
  %v114 = vmul.f32 %v106, %v112
  %v115 = vadd.f32 %v104, %v114
  %116 = vadd.xlane.f32.xlu0 %v115
  %v117 = vpop.xlane.xlu0 %116
  %v118 = vrcp.pop 128.0
  %v119 = vmul.f32 %v117, %v118
  %v120 = vsub.f32 %v115, %v119
  %v121 = vmul.f32 %v120, %v120
  %122 = vadd.xlane.f32.xlu0 %v121
  %v123 = vpop.xlane.xlu0 %122
  %v124 = vmul.f32 %v123, %v118
  %v125 = vadd.f32 %v124, 1e-05
  %v126 = vrsqrt.pop %v125
  %v127 = vmul.f32 %v120, %v126
  %v128 = vmax.f32 %v19, %v127
  %129 = vst [vmem:[%s4] sm:$0xff] %v128
  %v130 = vld [vmem:[%s3] sm:$0x7]
  %vm131 = vcmask 64512
  %v133 = vsel %vm131, %v130, 0
  %135 = vmatprep.subr.mxu0 0.0
  %136 = vmatpush1.msra.mxu0 0.0
  %137 = vmatprep.subr.mxu0 0.0
  %138 = vmatpush1.msra.mxu0 0.0
  %139 = vmatprep.subr.mxu0 0.0
  %140 = vmatpush1.msra.mxu0 0.0
  %141 = vmatprep.subr.mxu0 0.0
  %142 = vmatpush1.msra.mxu0 0.0
  %143 = vmatprep.subr.mxu0 0.0
  %144 = vmatpush1.msra.mxu0 0.0
  %145 = vmatprep.subr.mxu0 0.0
  %146 = vmatpush1.msra.mxu0 0.0
  %147 = vmatprep.subr.mxu0 0.0
  %148 = vmatpush1.msra.mxu0 0.0
  %149 = vmatprep.subr.mxu0 0.0
  %150 = vmatpush1.msra.mxu0 0.0
  %151 = vmatprep.subr.mxu0 0.0
  %152 = vmatpush1.msra.mxu0 0.0
  %153 = vmatprep.subr.mxu0 0.0
  %154 = vmatpush1.msra.mxu0 0.0
  %155 = vmatprep.subr.mxu0 0.0
  %156 = vmatpush1.msra.mxu0 0.0
  %157 = vmatprep.subr.mxu0 0.0
  %158 = vmatpush1.msra.mxu0 0.0
  %159 = vmatprep.subr.mxu0 0.0
  %160 = vmatpush1.msra.mxu0 0.0
  %161 = vmatprep.subr.mxu0 0.0
  %162 = vmatpush1.msra.mxu0 0.0
  %163 = vmatprep.subr.mxu0 0.0
  %164 = vmatpush1.msra.mxu0 0.0
  %165 = vmatprep.subr.mxu0 0.0
  %166 = vmatpush1.msra.mxu0 %v128
  %167 = vmatprep.subr.mxu0 0.0
  %168 = vmatpush2.msra.mxu0 0.0
  %169 = vmatprep.subr.mxu0 0.0
  %170 = vmatpush2.msra.mxu0 0.0
  %171 = vmatprep.subr.mxu0 0.0
  %172 = vmatpush2.msra.mxu0 0.0
  %173 = vmatprep.subr.mxu0 0.0
  %174 = vmatpush2.msra.mxu0 0.0
  %175 = vmatprep.subr.mxu0 0.0
  %176 = vmatpush2.msra.mxu0 0.0
  %177 = vmatprep.subr.mxu0 0.0
  %178 = vmatpush2.msra.mxu0 0.0
  %179 = vmatprep.subr.mxu0 0.0
  %180 = vmatpush2.msra.mxu0 0.0
  %181 = vmatprep.subr.mxu0 0.0
  %182 = vmatpush2.msra.mxu0 0.0
  %183 = vmatprep.subr.mxu0 0.0
  %184 = vmatpush2.msra.mxu0 0.0
  %185 = vmatprep.subr.mxu0 0.0
  %186 = vmatpush2.msra.mxu0 0.0
  %187 = vmatprep.subr.mxu0 0.0
  %188 = vmatpush2.msra.mxu0 0.0
  %189 = vmatprep.subr.mxu0 0.0
  %190 = vmatpush2.msra.mxu0 0.0
  %191 = vmatprep.subr.mxu0 0.0
  %192 = vmatpush2.msra.mxu0 0.0
  %193 = vmatprep.subr.mxu0 0.0
  %194 = vmatpush2.msra.mxu0 0.0
  %195 = vmatprep.subr.mxu0 0.0
  %196 = vmatpush2.msra.mxu0 0.0
  %197 = vmatprep.subr.mxu0 0.0
  %198 = vmatpush2.msra.mxu0 0.0
  %199 = vmatprep.mubr.f32.mxu0 0.0
  %200 = vmatmul.mubr.f32.gmra.mxu0 %v133
  %v201 = vpop.f32.mrf.mxu0
  %v202 = vadd.f32 0.0, %v201
  %v203 = vpop.f32.mrf.mxu0
  %204 = vdwg.mxu0
  %205 = vst [vmem:[%s5] sm:$0x7] %v202
  // Predicated region
  $region18: #{_lambda_.25} parent=0 // pred_check
    _
  $region19: #{_lambda_.25} parent=0 // pred_check_branch
    %207 = sbr.rel (0) target = $region21
  $region20: #{_lambda_.25} parent=0 // pred_region
    _
  $region21: #{_lambda_.25} parent=0 // pred_fallthru
    _
  // Predicated region
  $region22: #{_lambda_.25} parent=0 // pred_check
    _
  $region23: #{_lambda_.25} parent=0 // pred_check_branch
    %209 = sbr.rel (0) target = $region25
  $region24: #{_lambda_.25} parent=0 // pred_region
    _
  $region25: #{_lambda_.25} parent=0 // pred_fallthru
    _
  // Predicated region
  $region26: #{_lambda_.25} parent=0 // pred_check
    _
  $region27: #{_lambda_.25} parent=0 // pred_check_branch
    %211 = sbr.rel (0) target = $region29
  $region28: #{_lambda_.25} parent=0 // pred_region
    _
  $region29: #{_lambda_.25} parent=0 // pred_fallthru
    _
  // Predicated region
  $region30: #{_lambda_.25} parent=0 // pred_check
    _
  $region31: #{_lambda_.25} parent=0 // pred_check_branch
    %213 = sbr.rel (0) target = $region33
  $region32: #{_lambda_.25} parent=0 // pred_region
    _
  $region33: #{_lambda_.25} parent=0 // pred_fallthru
    _

// kernel: _lambda_.27
$region0: #{_lambda_.27}
  #allocation0 [shape = 'u32[]', space=smem, size = 0x4, offset = 0x4, fixed_abs, tag = 'smem constant byte address 0x4 - core index']
  #allocation1 [shape = 'u32[144,128]{1,0:T(1,128)}', space=vmem, size = 0x12000, scoped, tag = 'internal scratch']
  #allocation2 [shape = 'f32[1,1]{1,0:T(1,128)S(1)}', space=vmem, size = 0x200, scoped, tag = 'scoped memory for _lambda_.27']
  %s0 = inlined_call_operand.vmem [shape: f32[128,512], index: 0, kind: input, shape index: {}]
  %s1 = inlined_call_operand.vmem [shape: f32[4,128], index: 1, kind: input, shape index: {}]
  %s2 = inlined_call_operand.vmem [shape: f32[4,1], index: 2, kind: input, shape index: {}]
  %s3 = inlined_call_operand.vmem [shape: f32[1,512], index: 3, kind: input, shape index: {}]
  %s4 = inlined_call_operand.<no memory space> [shape: f32[1,1], index: 4, kind: input, shape index: {}]
  %s5 = inlined_call_operand.vmem [shape: f32[4,512], index: 5, kind: output, shape index: {}]
  %s6 = sld [smem:[#allocation0]]
  $region30: #{_lambda_.27} parent=0
    _
  %s8 = ssub.s32 1, %s6
  %s9 = scalar_select 0, %s8, %s6
  %v10 = vstv %s4
  %11 = vst [vmem:[#allocation2] sm:$0x1] %v10
  // Predicated region
  $region2: #{_lambda_.27} parent=0 // pred_check
    _
  $region3: #{_lambda_.27} parent=0 // pred_check_branch
    %13 = sbr.rel (0) target = $region5
  $region4: #{_lambda_.27} parent=0 // pred_region
    _
  $region5: #{_lambda_.27} parent=0 // pred_fallthru
    _
  // Predicated region
  $region6: #{_lambda_.27} parent=0 // pred_check
    _
  $region7: #{_lambda_.27} parent=0 // pred_check_branch
    %15 = sbr.rel (0) target = $region9
  $region8: #{_lambda_.27} parent=0 // pred_region
    _
  $region9: #{_lambda_.27} parent=0 // pred_fallthru
    _
  // Predicated region
  $region10: #{_lambda_.27} parent=0 // pred_check
    _
  $region11: #{_lambda_.27} parent=0 // pred_check_branch
    %17 = sbr.rel (0) target = $region13
  $region12: #{_lambda_.27} parent=0 // pred_region
    _
  $region13: #{_lambda_.27} parent=0 // pred_fallthru
    _
  // Predicated region
  $region14: #{_lambda_.27} parent=0 // pred_check
    _
  $region15: #{_lambda_.27} parent=0 // pred_check_branch
    %19 = sbr.rel (0) target = $region17
  $region16: #{_lambda_.27} parent=0 // pred_region
    _
  $region17: #{_lambda_.27} parent=0 // pred_fallthru
    _
  // Predicated region
  $region18: #{_lambda_.27} parent=0 // pred_check
    _
  $region19: #{_lambda_.27} parent=0 // pred_check_branch
    %21 = sbr.rel (0) target = $region21
  $region20: #{_lambda_.27} parent=0 // pred_region
    _
  $region21: #{_lambda_.27} parent=0 // pred_fallthru
    _
  %v22 = vld [vmem:[%s1] sm:$0xf]
  %v23 = vld [vmem:[%s0] sm:$0xff]
  %v24 = vld [vmem:[%s0 + $0x8] sm:$0xff]
  %v25 = vld [vmem:[%s0 + $0x10] sm:$0xff]
  %v26 = vld [vmem:[%s0 + $0x18] sm:$0xff]
  %v27 = vld [vmem:[%s0 + $0x20] sm:$0xff]
  %v28 = vld [vmem:[%s0 + $0x28] sm:$0xff]
  %v29 = vld [vmem:[%s0 + $0x30] sm:$0xff]
  %v30 = vld [vmem:[%s0 + $0x38] sm:$0xff]
  %v31 = vld [vmem:[%s0 + $0x40] sm:$0xff]
  %v32 = vld [vmem:[%s0 + $0x48] sm:$0xff]
  %v33 = vld [vmem:[%s0 + $0x50] sm:$0xff]
  %v34 = vld [vmem:[%s0 + $0x58] sm:$0xff]
  %v35 = vld [vmem:[%s0 + $0x60] sm:$0xff]
  %v36 = vld [vmem:[%s0 + $0x68] sm:$0xff]
  %v37 = vld [vmem:[%s0 + $0x70] sm:$0xff]
  %v38 = vld [vmem:[%s0 + $0x78] sm:$0xff]
  %v39 = vld [vmem:[%s0 + $0x80] sm:$0xff]
  %v40 = vld [vmem:[%s0 + $0x88] sm:$0xff]
  %v41 = vld [vmem:[%s0 + $0x90] sm:$0xff]
  %v42 = vld [vmem:[%s0 + $0x98] sm:$0xff]
  %v43 = vld [vmem:[%s0 + $0xa0] sm:$0xff]
  %v44 = vld [vmem:[%s0 + $0xa8] sm:$0xff]
  %v45 = vld [vmem:[%s0 + $0xb0] sm:$0xff]
  %v46 = vld [vmem:[%s0 + $0xb8] sm:$0xff]
  %v47 = vld [vmem:[%s0 + $0xc0] sm:$0xff]
  %v48 = vld [vmem:[%s0 + $0xc8] sm:$0xff]
  %v49 = vld [vmem:[%s0 + $0xd0] sm:$0xff]
  %v50 = vld [vmem:[%s0 + $0xd8] sm:$0xff]
  %v51 = vld [vmem:[%s0 + $0xe0] sm:$0xff]
  %v52 = vld [vmem:[%s0 + $0xe8] sm:$0xff]
  %v53 = vld [vmem:[%s0 + $0xf0] sm:$0xff]
  %v54 = vld [vmem:[%s0 + $0xf8] sm:$0xff]
  %v55 = vld [vmem:[%s0 + $0x100] sm:$0xff]
  %v56 = vld [vmem:[%s0 + $0x108] sm:$0xff]
  %v57 = vld [vmem:[%s0 + $0x110] sm:$0xff]
  %v58 = vld [vmem:[%s0 + $0x118] sm:$0xff]
  %v59 = vld [vmem:[%s0 + $0x120] sm:$0xff]
  %v60 = vld [vmem:[%s0 + $0x128] sm:$0xff]
  %v61 = vld [vmem:[%s0 + $0x130] sm:$0xff]
  %v62 = vld [vmem:[%s0 + $0x138] sm:$0xff]
  %v63 = vld [vmem:[%s0 + $0x140] sm:$0xff]
  %v64 = vld [vmem:[%s0 + $0x148] sm:$0xff]
  %v65 = vld [vmem:[%s0 + $0x150] sm:$0xff]
  %v66 = vld [vmem:[%s0 + $0x158] sm:$0xff]
  %v67 = vld [vmem:[%s0 + $0x160] sm:$0xff]
  %v68 = vld [vmem:[%s0 + $0x168] sm:$0xff]
  %v69 = vld [vmem:[%s0 + $0x170] sm:$0xff]
  %v70 = vld [vmem:[%s0 + $0x178] sm:$0xff]
  %v71 = vld [vmem:[%s0 + $0x180] sm:$0xff]
  %v72 = vld [vmem:[%s0 + $0x188] sm:$0xff]
  %v73 = vld [vmem:[%s0 + $0x190] sm:$0xff]
  %v74 = vld [vmem:[%s0 + $0x198] sm:$0xff]
  %v75 = vld [vmem:[%s0 + $0x1a0] sm:$0xff]
  %v76 = vld [vmem:[%s0 + $0x1a8] sm:$0xff]
  %v77 = vld [vmem:[%s0 + $0x1b0] sm:$0xff]
  %v78 = vld [vmem:[%s0 + $0x1b8] sm:$0xff]
  %v79 = vld [vmem:[%s0 + $0x1c0] sm:$0xff]
  %v80 = vld [vmem:[%s0 + $0x1c8] sm:$0xff]
  %v81 = vld [vmem:[%s0 + $0x1d0] sm:$0xff]
  %v82 = vld [vmem:[%s0 + $0x1d8] sm:$0xff]
  %v83 = vld [vmem:[%s0 + $0x1e0] sm:$0xff]
  %v84 = vld [vmem:[%s0 + $0x1e8] sm:$0xff]
  %v85 = vld [vmem:[%s0 + $0x1f0] sm:$0xff]
  %v86 = vld [vmem:[%s0 + $0x1f8] sm:$0xff]
  %87 = vmatprep.subr.mxu0 %v84
  %88 = vmatpush1.msra.mxu0 %v83
  %89 = vmatprep.subr.mxu0 %v80
  %90 = vmatpush1.msra.mxu0 %v79
  %91 = vmatprep.subr.mxu0 %v76
  %92 = vmatpush1.msra.mxu0 %v75
  %93 = vmatprep.subr.mxu0 %v72
  %94 = vmatpush1.msra.mxu0 %v71
  %95 = vmatprep.subr.mxu0 %v68
  %96 = vmatpush1.msra.mxu0 %v67
  %97 = vmatprep.subr.mxu0 %v64
  %98 = vmatpush1.msra.mxu0 %v63
  %99 = vmatprep.subr.mxu0 %v60
  %100 = vmatpush1.msra.mxu0 %v59
  %101 = vmatprep.subr.mxu0 %v56
  %102 = vmatpush1.msra.mxu0 %v55
  %103 = vmatprep.subr.mxu0 %v52
  %104 = vmatpush1.msra.mxu0 %v51
  %105 = vmatprep.subr.mxu0 %v48
  %106 = vmatpush1.msra.mxu0 %v47
  %107 = vmatprep.subr.mxu0 %v44
  %108 = vmatpush1.msra.mxu0 %v43
  %109 = vmatprep.subr.mxu0 %v40
  %110 = vmatpush1.msra.mxu0 %v39
  %111 = vmatprep.subr.mxu0 %v36
  %112 = vmatpush1.msra.mxu0 %v35
  %113 = vmatprep.subr.mxu0 %v32
  %114 = vmatpush1.msra.mxu0 %v31
  %115 = vmatprep.subr.mxu0 %v28
  %116 = vmatpush1.msra.mxu0 %v27
  %117 = vmatprep.subr.mxu0 %v24
  %118 = vmatpush1.msra.mxu0 %v23
  %119 = vmatprep.subr.mxu0 0.0
  %120 = vmatpush2.msra.mxu0 0.0
  %121 = vmatprep.subr.mxu0 0.0
  %122 = vmatpush2.msra.mxu0 0.0
  %123 = vmatprep.subr.mxu0 0.0
  %124 = vmatpush2.msra.mxu0 0.0
  %125 = vmatprep.subr.mxu0 0.0
  %126 = vmatpush2.msra.mxu0 0.0
  %127 = vmatprep.subr.mxu0 0.0
  %128 = vmatpush2.msra.mxu0 0.0
  %129 = vmatprep.subr.mxu0 0.0
  %130 = vmatpush2.msra.mxu0 0.0
  %131 = vmatprep.subr.mxu0 0.0
  %132 = vmatpush2.msra.mxu0 0.0
  %133 = vmatprep.subr.mxu0 0.0
  %134 = vmatpush2.msra.mxu0 0.0
  %135 = vmatprep.subr.mxu0 0.0
  %136 = vmatpush2.msra.mxu0 0.0
  %137 = vmatprep.subr.mxu0 0.0
  %138 = vmatpush2.msra.mxu0 0.0
  %139 = vmatprep.subr.mxu0 0.0
  %140 = vmatpush2.msra.mxu0 0.0
  %141 = vmatprep.subr.mxu0 0.0
  %142 = vmatpush2.msra.mxu0 0.0
  %143 = vmatprep.subr.mxu0 0.0
  %144 = vmatpush2.msra.mxu0 0.0
  %145 = vmatprep.subr.mxu0 0.0
  %146 = vmatpush2.msra.mxu0 0.0
  %147 = vmatprep.subr.mxu0 0.0
  %148 = vmatpush2.msra.mxu0 0.0
  %149 = vmatprep.subr.mxu0 0.0
  %150 = vmatpush2.msra.mxu0 0.0
  %151 = vmatprep.mubr.f32.mxu0 0.0
  %152 = vmatmul.mubr.f32.gmra.mxu0 %v22
  %v153 = vpop.f32.mrf.mxu0
  %v154 = vadd.f32 0.0, %v153
  %v155 = vpop.f32.mrf.mxu0
  %v156 = vadd.f32 0.0, %v155
  %157 = vdwg.mxu0
  %158 = vmatprep.subr.mxu0 %v86
  %159 = vmatpush1.msra.mxu0 %v85
  %160 = vmatprep.subr.mxu0 %v82
  %161 = vmatpush1.msra.mxu0 %v81
  %162 = vmatprep.subr.mxu0 %v78
  %163 = vmatpush1.msra.mxu0 %v77
  %164 = vmatprep.subr.mxu0 %v74
  %165 = vmatpush1.msra.mxu0 %v73
  %166 = vmatprep.subr.mxu0 %v70
  %167 = vmatpush1.msra.mxu0 %v69
  %168 = vmatprep.subr.mxu0 %v66
  %169 = vmatpush1.msra.mxu0 %v65
  %170 = vmatprep.subr.mxu0 %v62
  %171 = vmatpush1.msra.mxu0 %v61
  %172 = vmatprep.subr.mxu0 %v58
  %173 = vmatpush1.msra.mxu0 %v57
  %174 = vmatprep.subr.mxu0 %v54
  %175 = vmatpush1.msra.mxu0 %v53
  %176 = vmatprep.subr.mxu0 %v50
  %177 = vmatpush1.msra.mxu0 %v49
  %178 = vmatprep.subr.mxu0 %v46
  %179 = vmatpush1.msra.mxu0 %v45
  %180 = vmatprep.subr.mxu0 %v42
  %181 = vmatpush1.msra.mxu0 %v41
  %182 = vmatprep.subr.mxu0 %v38
  %183 = vmatpush1.msra.mxu0 %v37
  %184 = vmatprep.subr.mxu0 %v34
  %185 = vmatpush1.msra.mxu0 %v33
  %186 = vmatprep.subr.mxu0 %v30
  %187 = vmatpush1.msra.mxu0 %v29
  %188 = vmatprep.subr.mxu0 %v26
  %189 = vmatpush1.msra.mxu0 %v25
  %190 = vmatprep.subr.mxu0 0.0
  %191 = vmatpush2.msra.mxu0 0.0
  %192 = vmatprep.subr.mxu0 0.0
  %193 = vmatpush2.msra.mxu0 0.0
  %194 = vmatprep.subr.mxu0 0.0
  %195 = vmatpush2.msra.mxu0 0.0
  %196 = vmatprep.subr.mxu0 0.0
  %197 = vmatpush2.msra.mxu0 0.0
  %198 = vmatprep.subr.mxu0 0.0
  %199 = vmatpush2.msra.mxu0 0.0
  %200 = vmatprep.subr.mxu0 0.0
  %201 = vmatpush2.msra.mxu0 0.0
  %202 = vmatprep.subr.mxu0 0.0
  %203 = vmatpush2.msra.mxu0 0.0
  %204 = vmatprep.subr.mxu0 0.0
  %205 = vmatpush2.msra.mxu0 0.0
  %206 = vmatprep.subr.mxu0 0.0
  %207 = vmatpush2.msra.mxu0 0.0
  %208 = vmatprep.subr.mxu0 0.0
  %209 = vmatpush2.msra.mxu0 0.0
  %210 = vmatprep.subr.mxu0 0.0
  %211 = vmatpush2.msra.mxu0 0.0
  %212 = vmatprep.subr.mxu0 0.0
  %213 = vmatpush2.msra.mxu0 0.0
  %214 = vmatprep.subr.mxu0 0.0
  %215 = vmatpush2.msra.mxu0 0.0
  %216 = vmatprep.subr.mxu0 0.0
  %217 = vmatpush2.msra.mxu0 0.0
  %218 = vmatprep.subr.mxu0 0.0
  %219 = vmatpush2.msra.mxu0 0.0
  %220 = vmatprep.subr.mxu0 0.0
  %221 = vmatpush2.msra.mxu0 0.0
  %222 = vmatprep.mubr.f32.mxu0 0.0
  %223 = vmatmul.mubr.f32.gmra.mxu0 %v22
  %v224 = vpop.f32.mrf.mxu0
  %v225 = vadd.f32 0.0, %v224
  %v226 = vpop.f32.mrf.mxu0
  %v227 = vadd.f32 0.0, %v226
  %228 = vdwg.mxu0
  %v229 = vld [vmem:[%s2] sm:$0xf]
  %231 = vset.pattern.permute.xlu0 0
  %232 = vperm.xlu0 %231, %v229
  %v233 = vpop.permute.xlu0 %232
  %v235 = vmul.f32 %v154, %v233
  %v236 = vmul.f32 %v156, %v233
  %v237 = vmul.f32 %v225, %v233
  %v238 = vmul.f32 %v227, %v233
  %v239 = vld [vmem:[#allocation2] sm:$0x1]
  %v240 = vld [vmem:[%s3] sm:$0xf]
  %242 = vset.pattern.permute.xlu0 0
  %243 = vperm.xlu0 %242, %v239
  %v244 = vpop.permute.xlu0 %243
  %v246 = vlaneseq
  %v247 = vshrl.u32 %v246, 7
  %v248 = vsub.s32 0, %v247
  %v249 = vrot.slane %v244, %v248
  %v250 = vmul.f32 %v249, %v240
  %v252 = vlaneseq
  %v253 = vshrl.u32 %v252, 7
  %v254 = vsub.s32 0, %v253
  %v255 = vrot.slane %v250, %v254
  %v256 = vlaneseq
  %v257 = vshrl.u32 %v256, 7
  %v258 = vsub.s32 1, %v257
  %v259 = vrot.slane %v250, %v258
  %v260 = vlaneseq
  %v261 = vshrl.u32 %v260, 7
  %v262 = vsub.s32 2, %v261
  %v263 = vrot.slane %v250, %v262
  %v264 = vlaneseq
  %v265 = vshrl.u32 %v264, 7
  %v266 = vsub.s32 3, %v265
  %v267 = vrot.slane %v250, %v266
  %v272 = vadd.f32 %v235, %v255
  %v273 = vadd.f32 %v236, %v259
  %v274 = vadd.f32 %v237, %v263
  %v275 = vadd.f32 %v238, %v267
  %v276 = vmul.f32 %v272, %v272
  %v277 = vmul.f32 %v273, %v273
  %v278 = vmul.f32 %v274, %v274
  %v279 = vmul.f32 %v275, %v275
  %vm280 = vcmask 1043456
  %v281 = vsel %vm280, %v276, 0.0
  %v282 = vrot.slane %v281, 4
  %v283 = vadd.f32 %v281, %v282
  %v284 = vrot.slane %v283, 2
  %v285 = vadd.f32 %v283, %v284
  %v286 = vrot.slane %v285, 1
  %v287 = vadd.f32 %v285, %v286
  %v288 = vsel %vm280, %v277, 0.0
  %v289 = vrot.slane %v288, 4
  %v290 = vadd.f32 %v288, %v289
  %v291 = vrot.slane %v290, 2
  %v292 = vadd.f32 %v290, %v291
  %v293 = vrot.slane %v292, 1
  %v294 = vadd.f32 %v292, %v293
  %v295 = vsel %vm280, %v278, 0.0
  %v296 = vrot.slane %v295, 4
  %v297 = vadd.f32 %v295, %v296
  %v298 = vrot.slane %v297, 2
  %v299 = vadd.f32 %v297, %v298
  %v300 = vrot.slane %v299, 1
  %v301 = vadd.f32 %v299, %v300
  %v302 = vsel %vm280, %v279, 0.0
  %v303 = vrot.slane %v302, 4
  %v304 = vadd.f32 %v302, %v303
  %v305 = vrot.slane %v304, 2
  %v306 = vadd.f32 %v304, %v305
  %v307 = vrot.slane %v306, 1
  %v308 = vadd.f32 %v306, %v307
  %v309 = vrcp.pop 4.0
  %v310 = vmul.f32 %v287, %v309
  %v311 = vmul.f32 %v294, %v309
  %v312 = vmul.f32 %v301, %v309
  %v313 = vmul.f32 %v308, %v309
  %v314 = vadd.f32 %v310, 1e-08
  %v315 = vadd.f32 %v311, 1e-08
  %v316 = vadd.f32 %v312, 1e-08
  %v317 = vadd.f32 %v313, 1e-08
  %v318 = vrsqrt.pop %v314
  %v319 = vrsqrt.pop %v315
  %v320 = vrsqrt.pop %v316
  %v321 = vrsqrt.pop %v317
  %v322 = vmul.f32 %v272, %v318
  %v323 = vmul.f32 %v273, %v319
  %v324 = vmul.f32 %v274, %v320
  %v325 = vmul.f32 %v275, %v321
  %v330 = vcombine.low %v322, %v323
  %v331 = vcombine.low %v324, %v325
  %334 = vst [vmem:[%s5] sm:$0xff] %v330
  %335 = vst [vmem:[%s5 + $0x8] sm:$0xff] %v331
  // Predicated region
  $region22: #{_lambda_.27} parent=0 // pred_check
    _
  $region23: #{_lambda_.27} parent=0 // pred_check_branch
    %337 = sbr.rel (0) target = $region25
  $region24: #{_lambda_.27} parent=0 // pred_region
    _
  $region25: #{_lambda_.27} parent=0 // pred_fallthru
    _
  // Predicated region
  $region26: #{_lambda_.27} parent=0 // pred_check
    _
  $region27: #{_lambda_.27} parent=0 // pred_check_branch
    %339 = sbr.rel (0) target = $region29
  $region28: #{_lambda_.27} parent=0 // pred_region
    _
  $region29: #{_lambda_.27} parent=0 // pred_fallthru
    _

// kernel: mul.92
$region0: #{mul.92}
  #allocation0 [shape = 's32[1]{0}', space=sflag, size = 0x4, scoped, tag = 'scoped memory for mul.92']
  %s0 = inlined_call_operand.vmem [shape: f32[4,2], index: 0, kind: input, shape index: {}]
  %s1 = inlined_call_operand.vmem [shape: f32[4,2,16,16], index: 1, kind: output, shape index: {}]
  // Predicated region
  $region2: #{mul.92} parent=0 // pred_check
    _
  $region3: #{mul.92} parent=0 // pred_check_branch
    %3 = sbr.rel (0) target = $region5
  $region4: #{mul.92} parent=0 // pred_region
    _
  $region5: #{mul.92} parent=0 // pred_fallthru
    _
  %v4 = vld [vmem:[%s0] ss:$0 sm:$0xff]
  %5 = vbcast.lane.b32.xlu0 %v4, 0
  %v6 = vpop.permute.xlu0 %5
  %7 = vst [vmem:[%s1] sm:$0xff] %v6
  %s8 = scalar_lea.vmem %s0, 1
  %v9 = vld [vmem:[%s8] ss:$0 sm:$0xff]
  %10 = vbcast.lane.b32.xlu0 %v9, 0
  %v11 = vpop.permute.xlu0 %10
  %s12 = scalar_lea.vmem %s1, 32
  %13 = vst [vmem:[%s12] sm:$0xff] %v11
  %s14 = scalar_lea.vmem %s0, 2
  %v15 = vld [vmem:[%s14] ss:$0 sm:$0xff]
  %16 = vbcast.lane.b32.xlu0 %v15, 0
  %v17 = vpop.permute.xlu0 %16
  %s18 = scalar_lea.vmem %s1, 64
  %19 = vst [vmem:[%s18] sm:$0xff] %v17
  %s20 = scalar_lea.vmem %s0, 3
  %v21 = vld [vmem:[%s20] ss:$0 sm:$0xff]
  %22 = vbcast.lane.b32.xlu0 %v21, 0
  %v23 = vpop.permute.xlu0 %22
  %s24 = scalar_lea.vmem %s1, 96
  %25 = vst [vmem:[%s24] sm:$0xff] %v23
  %v26 = vld [vmem:[%s0] ss:$0 sm:$0xff]
  %27 = vbcast.lane.b32.xlu0 %v26, 1
  %v28 = vpop.permute.xlu0 %27
  %s29 = scalar_lea.vmem %s1, 16
  %30 = vst [vmem:[%s29] sm:$0xff] %v28
  %s31 = scalar_lea.vmem %s0, 1
  %v32 = vld [vmem:[%s31] ss:$0 sm:$0xff]
  %33 = vbcast.lane.b32.xlu0 %v32, 1
  %v34 = vpop.permute.xlu0 %33
  %s35 = scalar_lea.vmem %s1, 48
  %36 = vst [vmem:[%s35] sm:$0xff] %v34
  %s37 = scalar_lea.vmem %s0, 2
  %v38 = vld [vmem:[%s37] ss:$0 sm:$0xff]
  %39 = vbcast.lane.b32.xlu0 %v38, 1
  %v40 = vpop.permute.xlu0 %39
  %s41 = scalar_lea.vmem %s1, 80
  %42 = vst [vmem:[%s41] sm:$0xff] %v40
  %s43 = scalar_lea.vmem %s0, 3
  %v44 = vld [vmem:[%s43] ss:$0 sm:$0xff]
  %45 = vbcast.lane.b32.xlu0 %v44, 1
  %v46 = vpop.permute.xlu0 %45
  %s47 = scalar_lea.vmem %s1, 112
  %48 = vst [vmem:[%s47] sm:$0xff] %v46
  %s49 = scalar_lea.vmem %s1, 8
  %50 = vst [vmem:[%s49] sm:$0xff] %v6
  %s51 = scalar_lea.vmem %s1, 40
  %52 = vst [vmem:[%s51] sm:$0xff] %v11
  %s53 = scalar_lea.vmem %s1, 72
  %54 = vst [vmem:[%s53] sm:$0xff] %v17
  %s55 = scalar_lea.vmem %s1, 104
  %56 = vst [vmem:[%s55] sm:$0xff] %v23
  %s57 = scalar_lea.vmem %s1, 24
  %58 = vst [vmem:[%s57] sm:$0xff] %v28
  %s59 = scalar_lea.vmem %s1, 56
  %60 = vst [vmem:[%s59] sm:$0xff] %v34
  %s61 = scalar_lea.vmem %s1, 88
  %62 = vst [vmem:[%s61] sm:$0xff] %v40
  %s63 = scalar_lea.vmem %s1, 120
  %64 = vst [vmem:[%s63] sm:$0xff] %v46

// kernel: _lambda_.28
$region0: #{_lambda_.28}
  #allocation0 [shape = 'u32[]', space=smem, size = 0x4, offset = 0x4, fixed_abs, tag = 'smem constant byte address 0x4 - core index']
  #allocation1 [shape = 'u32[144,128]{1,0:T(1,128)}', space=vmem, size = 0x12000, scoped, tag = 'internal scratch']
  %s0 = inlined_call_operand.vmem [shape: f32[4,512], index: 0, kind: input, shape index: {}]
  %s1 = inlined_call_operand.vmem [shape: f32[9,4,512], index: 1, kind: input, shape index: {}]
  %s2 = inlined_call_operand.vmem [shape: f32[9,4,1], index: 2, kind: input, shape index: {}]
  %s3 = inlined_call_operand.vmem [shape: f32[4,512], index: 3, kind: output, shape index: {}]
  %s4 = sld [smem:[#allocation0]]
  $region22: #{_lambda_.28} parent=0
    _
  %s6 = ssub.s32 1, %s4
  %s7 = scalar_select 0, %s6, %s4
  // Predicated region
  $region2: #{_lambda_.28} parent=0 // pred_check
    _
  $region3: #{_lambda_.28} parent=0 // pred_check_branch
    %9 = sbr.rel (0) target = $region5
  $region4: #{_lambda_.28} parent=0 // pred_region
    _
  $region5: #{_lambda_.28} parent=0 // pred_fallthru
    _
  // Predicated region
  $region6: #{_lambda_.28} parent=0 // pred_check
    _
  $region7: #{_lambda_.28} parent=0 // pred_check_branch
    %11 = sbr.rel (0) target = $region9
  $region8: #{_lambda_.28} parent=0 // pred_region
    _
  $region9: #{_lambda_.28} parent=0 // pred_fallthru
    _
  // Predicated region
  $region10: #{_lambda_.28} parent=0 // pred_check
    _
  $region11: #{_lambda_.28} parent=0 // pred_check_branch
    %13 = sbr.rel (0) target = $region13
  $region12: #{_lambda_.28} parent=0 // pred_region
    _
  $region13: #{_lambda_.28} parent=0 // pred_fallthru
    _
  %v14 = vld [vmem:[%s0] sm:$0xff]
  %v15 = vld [vmem:[%s0 + $0x8] sm:$0xff]
  %v16 = vld [vmem:[%s1] sm:$0xff]
  %v17 = vld [vmem:[%s1 + $0x8] sm:$0xff]
  %v18 = vld [vmem:[%s2] sm:$0xf]
  %20 = vset.pattern.permute.xlu0 0
  %21 = vperm.xlu0 %20, %v18
  %v22 = vpop.permute.xlu0 %21
  %v24 = vunpack.c.l.s4 839922192
  %v25 = vunpack.c.0.s8 %v24
  %v26 = vlaneseq
  %v27 = vshrl.u32 %v26, 7
  %v28 = vsub.s32 %v25, %v27
  %v29 = vrot.slane %v22, %v28
  %v31 = vmul.f32 %v16, %v29
  %v32 = vmul.f32 %v17, %v29
  %s33 = scalar_lea.vmem %s1, 16
  %v34 = vld [vmem:[%s33] sm:$0xff]
  %v35 = vld [vmem:[%s33 + $0x8] sm:$0xff]
  %s36 = scalar_lea.vmem %s2, 4
  %v37 = vld [vmem:[%s36] sm:$0xf]
  %39 = vset.pattern.permute.xlu0 0
  %40 = vperm.xlu0 %39, %v37
  %v41 = vpop.permute.xlu0 %40
  %v43 = vunpack.c.l.s4 839922192
  %v44 = vunpack.c.0.s8 %v43
  %v45 = vlaneseq
  %v46 = vshrl.u32 %v45, 7
  %v47 = vsub.s32 %v44, %v46
  %v48 = vrot.slane %v41, %v47
  %v50 = vmul.f32 %v34, %v48
  %v51 = vmul.f32 %v35, %v48
  %v52 = vadd.f32 %v31, %v50
  %v53 = vadd.f32 %v32, %v51
  %s54 = scalar_lea.vmem %s1, 32
  %v55 = vld [vmem:[%s54] sm:$0xff]
  %v56 = vld [vmem:[%s54 + $0x8] sm:$0xff]
  %s57 = scalar_lea.vmem %s2, 8
  %v58 = vld [vmem:[%s57] sm:$0xf]
  %60 = vset.pattern.permute.xlu0 0
  %61 = vperm.xlu0 %60, %v58
  %v62 = vpop.permute.xlu0 %61
  %v64 = vunpack.c.l.s4 839922192
  %v65 = vunpack.c.0.s8 %v64
  %v66 = vlaneseq
  %v67 = vshrl.u32 %v66, 7
  %v68 = vsub.s32 %v65, %v67
  %v69 = vrot.slane %v62, %v68
  %v71 = vmul.f32 %v55, %v69
  %v72 = vmul.f32 %v56, %v69
  %v73 = vadd.f32 %v52, %v71
  %v74 = vadd.f32 %v53, %v72
  %s75 = scalar_lea.vmem %s1, 48
  %v76 = vld [vmem:[%s75] sm:$0xff]
  %v77 = vld [vmem:[%s75 + $0x8] sm:$0xff]
  %s78 = scalar_lea.vmem %s2, 12
  %v79 = vld [vmem:[%s78] sm:$0xf]
  %81 = vset.pattern.permute.xlu0 0
  %82 = vperm.xlu0 %81, %v79
  %v83 = vpop.permute.xlu0 %82
  %v85 = vunpack.c.l.s4 839922192
  %v86 = vunpack.c.0.s8 %v85
  %v87 = vlaneseq
  %v88 = vshrl.u32 %v87, 7
  %v89 = vsub.s32 %v86, %v88
  %v90 = vrot.slane %v83, %v89
  %v92 = vmul.f32 %v76, %v90
  %v93 = vmul.f32 %v77, %v90
  %v94 = vadd.f32 %v73, %v92
  %v95 = vadd.f32 %v74, %v93
  %s96 = scalar_lea.vmem %s1, 64
  %v97 = vld [vmem:[%s96] sm:$0xff]
  %v98 = vld [vmem:[%s96 + $0x8] sm:$0xff]
  %s99 = scalar_lea.vmem %s2, 16
  %v100 = vld [vmem:[%s99] sm:$0xf]
  %102 = vset.pattern.permute.xlu0 0
  %103 = vperm.xlu0 %102, %v100
  %v104 = vpop.permute.xlu0 %103
  %v106 = vunpack.c.l.s4 839922192
  %v107 = vunpack.c.0.s8 %v106
  %v108 = vlaneseq
  %v109 = vshrl.u32 %v108, 7
  %v110 = vsub.s32 %v107, %v109
  %v111 = vrot.slane %v104, %v110
  %v113 = vmul.f32 %v97, %v111
  %v114 = vmul.f32 %v98, %v111
  %v115 = vadd.f32 %v94, %v113
  %v116 = vadd.f32 %v95, %v114
  %s117 = scalar_lea.vmem %s1, 80
  %v118 = vld [vmem:[%s117] sm:$0xff]
  %v119 = vld [vmem:[%s117 + $0x8] sm:$0xff]
  %s120 = scalar_lea.vmem %s2, 20
  %v121 = vld [vmem:[%s120] sm:$0xf]
  %123 = vset.pattern.permute.xlu0 0
  %124 = vperm.xlu0 %123, %v121
  %v125 = vpop.permute.xlu0 %124
  %v127 = vunpack.c.l.s4 839922192
  %v128 = vunpack.c.0.s8 %v127
  %v129 = vlaneseq
  %v130 = vshrl.u32 %v129, 7
  %v131 = vsub.s32 %v128, %v130
  %v132 = vrot.slane %v125, %v131
  %v134 = vmul.f32 %v118, %v132
  %v135 = vmul.f32 %v119, %v132
  %v136 = vadd.f32 %v115, %v134
  %v137 = vadd.f32 %v116, %v135
  %s138 = scalar_lea.vmem %s1, 96
  %v139 = vld [vmem:[%s138] sm:$0xff]
  %v140 = vld [vmem:[%s138 + $0x8] sm:$0xff]
  %s141 = scalar_lea.vmem %s2, 24
  %v142 = vld [vmem:[%s141] sm:$0xf]
  %144 = vset.pattern.permute.xlu0 0
  %145 = vperm.xlu0 %144, %v142
  %v146 = vpop.permute.xlu0 %145
  %v148 = vunpack.c.l.s4 839922192
  %v149 = vunpack.c.0.s8 %v148
  %v150 = vlaneseq
  %v151 = vshrl.u32 %v150, 7
  %v152 = vsub.s32 %v149, %v151
  %v153 = vrot.slane %v146, %v152
  %v155 = vmul.f32 %v139, %v153
  %v156 = vmul.f32 %v140, %v153
  %v157 = vadd.f32 %v136, %v155
  %v158 = vadd.f32 %v137, %v156
  %s159 = scalar_lea.vmem %s1, 112
  %v160 = vld [vmem:[%s159] sm:$0xff]
  %v161 = vld [vmem:[%s159 + $0x8] sm:$0xff]
  %s162 = scalar_lea.vmem %s2, 28
  %v163 = vld [vmem:[%s162] sm:$0xf]
  %165 = vset.pattern.permute.xlu0 0
  %166 = vperm.xlu0 %165, %v163
  %v167 = vpop.permute.xlu0 %166
  %v169 = vunpack.c.l.s4 839922192
  %v170 = vunpack.c.0.s8 %v169
  %v171 = vlaneseq
  %v172 = vshrl.u32 %v171, 7
  %v173 = vsub.s32 %v170, %v172
  %v174 = vrot.slane %v167, %v173
  %v176 = vmul.f32 %v160, %v174
  %v177 = vmul.f32 %v161, %v174
  %v178 = vadd.f32 %v157, %v176
  %v179 = vadd.f32 %v158, %v177
  %s180 = scalar_lea.vmem %s1, 128
  %v181 = vld [vmem:[%s180] sm:$0xff]
  %v182 = vld [vmem:[%s180 + $0x8] sm:$0xff]
  %s183 = scalar_lea.vmem %s2, 32
  %v184 = vld [vmem:[%s183] sm:$0xf]
  %186 = vset.pattern.permute.xlu0 0
  %187 = vperm.xlu0 %186, %v184
  %v188 = vpop.permute.xlu0 %187
  %v190 = vunpack.c.l.s4 839922192
  %v191 = vunpack.c.0.s8 %v190
  %v192 = vlaneseq
  %v193 = vshrl.u32 %v192, 7
  %v194 = vsub.s32 %v191, %v193
  %v195 = vrot.slane %v188, %v194
  %v197 = vmul.f32 %v181, %v195
  %v198 = vmul.f32 %v182, %v195
  %v199 = vadd.f32 %v178, %v197
  %v200 = vadd.f32 %v179, %v198
  %v203 = vcombine.high %v199, %v199
  %v204 = vcombine.high %v200, %v200
  %vm207 = vcmask 1043456
  %v208 = vsel %vm207, %v199, 0.0
  %v209 = vsel %vm207, %v203, 0.0
  %v210 = vadd.f32 %v208, %v209
  %v211 = vsel %vm207, %v200, 0.0
  %v212 = vadd.f32 %v210, %v211
  %v213 = vsel %vm207, %v204, 0.0
  %v214 = vadd.f32 %v212, %v213
  %215 = vadd.xlane.f32.xlu0 %v214
  %v216 = vpop.xlane.xlu0 %215
  %v217 = vrcp.pop 512.0
  %v218 = vmul.f32 %v216, %v217
  %v221 = vunpack.c.l.s4 839922192
  %v222 = vunpack.c.0.s8 %v221
  %v223 = vlaneseq
  %v224 = vshrl.u32 %v223, 7
  %v225 = vsub.s32 %v222, %v224
  %v226 = vrot.slane %v218, %v225
  %v228 = vsub.f32 %v199, %v226
  %v229 = vsub.f32 %v200, %v226
  %v230 = vmul.f32 %v228, %v228
  %v231 = vmul.f32 %v229, %v229
  %v234 = vcombine.high %v230, %v230
  %v235 = vcombine.high %v231, %v231
  %v238 = vsel %vm207, %v230, 0.0
  %v239 = vsel %vm207, %v234, 0.0
  %v240 = vadd.f32 %v238, %v239
  %v241 = vsel %vm207, %v231, 0.0
  %v242 = vadd.f32 %v240, %v241
  %v243 = vsel %vm207, %v235, 0.0
  %v244 = vadd.f32 %v242, %v243
  %245 = vadd.xlane.f32.xlu0 %v244
  %v246 = vpop.xlane.xlu0 %245
  %v247 = vmul.f32 %v246, %v217
  %v248 = vadd.f32 %v247, 1e-05
  %v249 = vrsqrt.pop %v248
  %v252 = vunpack.c.l.s4 839922192
  %v253 = vunpack.c.0.s8 %v252
  %v254 = vlaneseq
  %v255 = vshrl.u32 %v254, 7
  %v256 = vsub.s32 %v253, %v255
  %v257 = vrot.slane %v249, %v256
  %v259 = vmul.f32 %v228, %v257
  %v260 = vmul.f32 %v229, %v257
  %v261 = vmax.f32 %v14, %v259
  %v262 = vmax.f32 %v15, %v260
  %263 = vst [vmem:[%s3] sm:$0xff] %v261
  %264 = vst [vmem:[%s3 + $0x8] sm:$0xff] %v262
  // Predicated region
  $region14: #{_lambda_.28} parent=0 // pred_check
    _
  $region15: #{_lambda_.28} parent=0 // pred_check_branch
    %266 = sbr.rel (0) target = $region17
  $region16: #{_lambda_.28} parent=0 // pred_region
    _
  $region17: #{_lambda_.28} parent=0 // pred_fallthru
    _
  // Predicated region
  $region18: #{_lambda_.28} parent=0 // pred_check
    _
  $region19: #{_lambda_.28} parent=0 // pred_check_branch
    %268 = sbr.rel (0) target = $region21
  $region20: #{_lambda_.28} parent=0 // pred_region
    _
  $region21: #{_lambda_.28} parent=0 // pred_fallthru
    _

// kernel: _lambda_.30
$region0: #{_lambda_.30}
  #allocation0 [shape = 'u32[]', space=smem, size = 0x4, offset = 0x4, fixed_abs, tag = 'smem constant byte address 0x4 - core index']
  #allocation1 [shape = 'u32[144,128]{1,0:T(1,128)}', space=vmem, size = 0x12000, scoped, tag = 'internal scratch']
  %s0 = inlined_call_operand.vmem [shape: f32[4,512], index: 0, kind: input, shape index: {}]
  %s1 = inlined_call_operand.vmem [shape: f32[9,4,512], index: 1, kind: input, shape index: {}]
  %s2 = inlined_call_operand.vmem [shape: f32[9,4,1], index: 2, kind: input, shape index: {}]
  %s3 = inlined_call_operand.vmem [shape: f32[3,4], index: 3, kind: input, shape index: {}]
  %s4 = inlined_call_operand.hbm [shape: f32[4,512], index: 4, kind: output, shape index: {0}]
  %s5 = inlined_call_operand.vmem [shape: f32[3,512], index: 5, kind: output, shape index: {1}]
  %6 = xla_tuple %s4, %s5
  %s7 = sld [smem:[#allocation0]]
  $region34: #{_lambda_.30} parent=0
    _
  %s9 = ssub.s32 1, %s7
  %s10 = scalar_select 0, %s9, %s7
  $region1: #{_lambda_.30} parent=0
    #allocation2 [shape = 'u8[8192]{0}', space=vmem, size = 0x2000, scoped, tag = 'output window, operand 0, single buffered']
    #allocation3 [shape = 's32[1]{0}', space=sflag, size = 0x4, scoped, tag = 'scoped memory for _lambda_.30']
    %11 = vsyncpa [#allocation3], 0
    // Predicated region
    $region2: #{_lambda_.30} parent=1 // pred_check
      _
    $region3: #{_lambda_.30} parent=1 // pred_check_branch
      %13 = sbr.rel (0) target = $region5
    $region4: #{_lambda_.30} parent=1 // pred_region
      _
    $region5: #{_lambda_.30} parent=1 // pred_fallthru
      _
    // Predicated region
    $region6: #{_lambda_.30} parent=1 // pred_check
      _
    $region7: #{_lambda_.30} parent=1 // pred_check_branch
      %15 = sbr.rel (0) target = $region9
    $region8: #{_lambda_.30} parent=1 // pred_region
      _
    $region9: #{_lambda_.30} parent=1 // pred_fallthru
      _
    // Predicated region
    $region10: #{_lambda_.30} parent=1 // pred_check
      _
    $region11: #{_lambda_.30} parent=1 // pred_check_branch
      %17 = sbr.rel (0) target = $region13
    $region12: #{_lambda_.30} parent=1 // pred_region
      _
    $region13: #{_lambda_.30} parent=1 // pred_fallthru
      _
    // Predicated region
    $region14: #{_lambda_.30} parent=1 // pred_check
      _
    $region15: #{_lambda_.30} parent=1 // pred_check_branch
      %19 = sbr.rel (0) target = $region17
    $region16: #{_lambda_.30} parent=1 // pred_region
      _
    $region17: #{_lambda_.30} parent=1 // pred_fallthru
      _
    %v20 = vld [vmem:[%s0] sm:$0xff]
    %v21 = vld [vmem:[%s0 + $0x8] sm:$0xff]
    %v22 = vld [vmem:[%s1] sm:$0xff]
    %v23 = vld [vmem:[%s1 + $0x8] sm:$0xff]
    %v24 = vld [vmem:[%s2] sm:$0xf]
    %26 = vset.pattern.permute.xlu0 0
    %27 = vperm.xlu0 %26, %v24
    %v28 = vpop.permute.xlu0 %27
    %v30 = vunpack.c.l.s4 839922192
    %v31 = vunpack.c.0.s8 %v30
    %v32 = vlaneseq
    %v33 = vshrl.u32 %v32, 7
    %v34 = vsub.s32 %v31, %v33
    %v35 = vrot.slane %v28, %v34
    %v37 = vmul.f32 %v22, %v35
    %v38 = vmul.f32 %v23, %v35
    %s39 = scalar_lea.vmem %s1, 16
    %v40 = vld [vmem:[%s39] sm:$0xff]
    %v41 = vld [vmem:[%s39 + $0x8] sm:$0xff]
    %s42 = scalar_lea.vmem %s2, 4
    %v43 = vld [vmem:[%s42] sm:$0xf]
    %45 = vset.pattern.permute.xlu0 0
    %46 = vperm.xlu0 %45, %v43
    %v47 = vpop.permute.xlu0 %46
    %v49 = vunpack.c.l.s4 839922192
    %v50 = vunpack.c.0.s8 %v49
    %v51 = vlaneseq
    %v52 = vshrl.u32 %v51, 7
    %v53 = vsub.s32 %v50, %v52
    %v54 = vrot.slane %v47, %v53
    %v56 = vmul.f32 %v40, %v54
    %v57 = vmul.f32 %v41, %v54
    %v58 = vadd.f32 %v37, %v56
    %v59 = vadd.f32 %v38, %v57
    %s60 = scalar_lea.vmem %s1, 32
    %v61 = vld [vmem:[%s60] sm:$0xff]
    %v62 = vld [vmem:[%s60 + $0x8] sm:$0xff]
    %s63 = scalar_lea.vmem %s2, 8
    %v64 = vld [vmem:[%s63] sm:$0xf]
    %66 = vset.pattern.permute.xlu0 0
    %67 = vperm.xlu0 %66, %v64
    %v68 = vpop.permute.xlu0 %67
    %v70 = vunpack.c.l.s4 839922192
    %v71 = vunpack.c.0.s8 %v70
    %v72 = vlaneseq
    %v73 = vshrl.u32 %v72, 7
    %v74 = vsub.s32 %v71, %v73
    %v75 = vrot.slane %v68, %v74
    %v77 = vmul.f32 %v61, %v75
    %v78 = vmul.f32 %v62, %v75
    %v79 = vadd.f32 %v58, %v77
    %v80 = vadd.f32 %v59, %v78
    %s81 = scalar_lea.vmem %s1, 48
    %v82 = vld [vmem:[%s81] sm:$0xff]
    %v83 = vld [vmem:[%s81 + $0x8] sm:$0xff]
    %s84 = scalar_lea.vmem %s2, 12
    %v85 = vld [vmem:[%s84] sm:$0xf]
    %87 = vset.pattern.permute.xlu0 0
    %88 = vperm.xlu0 %87, %v85
    %v89 = vpop.permute.xlu0 %88
    %v91 = vunpack.c.l.s4 839922192
    %v92 = vunpack.c.0.s8 %v91
    %v93 = vlaneseq
    %v94 = vshrl.u32 %v93, 7
    %v95 = vsub.s32 %v92, %v94
    %v96 = vrot.slane %v89, %v95
    %v98 = vmul.f32 %v82, %v96
    %v99 = vmul.f32 %v83, %v96
    %v100 = vadd.f32 %v79, %v98
    %v101 = vadd.f32 %v80, %v99
    %s102 = scalar_lea.vmem %s1, 64
    %v103 = vld [vmem:[%s102] sm:$0xff]
    %v104 = vld [vmem:[%s102 + $0x8] sm:$0xff]
    %s105 = scalar_lea.vmem %s2, 16
    %v106 = vld [vmem:[%s105] sm:$0xf]
    %108 = vset.pattern.permute.xlu0 0
    %109 = vperm.xlu0 %108, %v106
    %v110 = vpop.permute.xlu0 %109
    %v112 = vunpack.c.l.s4 839922192
    %v113 = vunpack.c.0.s8 %v112
    %v114 = vlaneseq
    %v115 = vshrl.u32 %v114, 7
    %v116 = vsub.s32 %v113, %v115
    %v117 = vrot.slane %v110, %v116
    %v119 = vmul.f32 %v103, %v117
    %v120 = vmul.f32 %v104, %v117
    %v121 = vadd.f32 %v100, %v119
    %v122 = vadd.f32 %v101, %v120
    %s123 = scalar_lea.vmem %s1, 80
    %v124 = vld [vmem:[%s123] sm:$0xff]
    %v125 = vld [vmem:[%s123 + $0x8] sm:$0xff]
    %s126 = scalar_lea.vmem %s2, 20
    %v127 = vld [vmem:[%s126] sm:$0xf]
    %129 = vset.pattern.permute.xlu0 0
    %130 = vperm.xlu0 %129, %v127
    %v131 = vpop.permute.xlu0 %130
    %v133 = vunpack.c.l.s4 839922192
    %v134 = vunpack.c.0.s8 %v133
    %v135 = vlaneseq
    %v136 = vshrl.u32 %v135, 7
    %v137 = vsub.s32 %v134, %v136
    %v138 = vrot.slane %v131, %v137
    %v140 = vmul.f32 %v124, %v138
    %v141 = vmul.f32 %v125, %v138
    %v142 = vadd.f32 %v121, %v140
    %v143 = vadd.f32 %v122, %v141
    %s144 = scalar_lea.vmem %s1, 96
    %v145 = vld [vmem:[%s144] sm:$0xff]
    %v146 = vld [vmem:[%s144 + $0x8] sm:$0xff]
    %s147 = scalar_lea.vmem %s2, 24
    %v148 = vld [vmem:[%s147] sm:$0xf]
    %150 = vset.pattern.permute.xlu0 0
    %151 = vperm.xlu0 %150, %v148
    %v152 = vpop.permute.xlu0 %151
    %v154 = vunpack.c.l.s4 839922192
    %v155 = vunpack.c.0.s8 %v154
    %v156 = vlaneseq
    %v157 = vshrl.u32 %v156, 7
    %v158 = vsub.s32 %v155, %v157
    %v159 = vrot.slane %v152, %v158
    %v161 = vmul.f32 %v145, %v159
    %v162 = vmul.f32 %v146, %v159
    %v163 = vadd.f32 %v142, %v161
    %v164 = vadd.f32 %v143, %v162
    %s165 = scalar_lea.vmem %s1, 112
    %v166 = vld [vmem:[%s165] sm:$0xff]
    %v167 = vld [vmem:[%s165 + $0x8] sm:$0xff]
    %s168 = scalar_lea.vmem %s2, 28
    %v169 = vld [vmem:[%s168] sm:$0xf]
    %171 = vset.pattern.permute.xlu0 0
    %172 = vperm.xlu0 %171, %v169
    %v173 = vpop.permute.xlu0 %172
    %v175 = vunpack.c.l.s4 839922192
    %v176 = vunpack.c.0.s8 %v175
    %v177 = vlaneseq
    %v178 = vshrl.u32 %v177, 7
    %v179 = vsub.s32 %v176, %v178
    %v180 = vrot.slane %v173, %v179
    %v182 = vmul.f32 %v166, %v180
    %v183 = vmul.f32 %v167, %v180
    %v184 = vadd.f32 %v163, %v182
    %v185 = vadd.f32 %v164, %v183
    %s186 = scalar_lea.vmem %s1, 128
    %v187 = vld [vmem:[%s186] sm:$0xff]
    %v188 = vld [vmem:[%s186 + $0x8] sm:$0xff]
    %s189 = scalar_lea.vmem %s2, 32
    %v190 = vld [vmem:[%s189] sm:$0xf]
    %192 = vset.pattern.permute.xlu0 0
    %193 = vperm.xlu0 %192, %v190
    %v194 = vpop.permute.xlu0 %193
    %v196 = vunpack.c.l.s4 839922192
    %v197 = vunpack.c.0.s8 %v196
    %v198 = vlaneseq
    %v199 = vshrl.u32 %v198, 7
    %v200 = vsub.s32 %v197, %v199
    %v201 = vrot.slane %v194, %v200
    %v203 = vmul.f32 %v187, %v201
    %v204 = vmul.f32 %v188, %v201
    %v205 = vadd.f32 %v184, %v203
    %v206 = vadd.f32 %v185, %v204
    %v209 = vcombine.high %v205, %v205
    %v210 = vcombine.high %v206, %v206
    %vm213 = vcmask 1043456
    %v214 = vsel %vm213, %v205, 0.0
    %v215 = vsel %vm213, %v209, 0.0
    %v216 = vadd.f32 %v214, %v215
    %v217 = vsel %vm213, %v206, 0.0
    %v218 = vadd.f32 %v216, %v217
    %v219 = vsel %vm213, %v210, 0.0
    %v220 = vadd.f32 %v218, %v219
    %221 = vadd.xlane.f32.xlu0 %v220
    %v222 = vpop.xlane.xlu0 %221
    %v223 = vrcp.pop 512.0
    %v224 = vmul.f32 %v222, %v223
    %v227 = vunpack.c.l.s4 839922192
    %v228 = vunpack.c.0.s8 %v227
    %v229 = vlaneseq
    %v230 = vshrl.u32 %v229, 7
    %v231 = vsub.s32 %v228, %v230
    %v232 = vrot.slane %v224, %v231
    %v234 = vsub.f32 %v205, %v232
    %v235 = vsub.f32 %v206, %v232
    %v236 = vmul.f32 %v234, %v234
    %v237 = vmul.f32 %v235, %v235
    %v240 = vcombine.high %v236, %v236
    %v241 = vcombine.high %v237, %v237
    %v244 = vsel %vm213, %v236, 0.0
    %v245 = vsel %vm213, %v240, 0.0
    %v246 = vadd.f32 %v244, %v245
    %v247 = vsel %vm213, %v237, 0.0
    %v248 = vadd.f32 %v246, %v247
    %v249 = vsel %vm213, %v241, 0.0
    %v250 = vadd.f32 %v248, %v249
    %251 = vadd.xlane.f32.xlu0 %v250
    %v252 = vpop.xlane.xlu0 %251
    %v253 = vmul.f32 %v252, %v223
    %v254 = vadd.f32 %v253, 1e-05
    %v255 = vrsqrt.pop %v254
    %v258 = vunpack.c.l.s4 839922192
    %v259 = vunpack.c.0.s8 %v258
    %v260 = vlaneseq
    %v261 = vshrl.u32 %v260, 7
    %v262 = vsub.s32 %v259, %v261
    %v263 = vrot.slane %v255, %v262
    %v265 = vmul.f32 %v234, %v263
    %v266 = vmul.f32 %v235, %v263
    %v267 = vmax.f32 %v20, %v265
    %v268 = vmax.f32 %v21, %v266
    %269 = vst [vmem:[#allocation2] sm:$0xff] %v267
    %270 = vst [vmem:[#allocation2 + $0x8] sm:$0xff] %v268
    %v271 = vld [vmem:[%s3] sm:$0x7]
    %v274 = vcombine.high %v267, %v267
    %v275 = vcombine.high %v268, %v268
    %vm276 = vcmask 31744
    %v278 = vsel %vm276, %v271, 0
    %v280 = vsel %vm213, %v267, 0
    %v282 = vsel %vm213, %v274, 0
    %v284 = vsel %vm213, %v268, 0
    %v286 = vsel %vm213, %v275, 0
    %288 = vmatprep.subr.mxu0 0.0
    %289 = vmatpush1.msra.mxu0 0.0
    %290 = vmatprep.subr.mxu0 0.0
    %291 = vmatpush1.msra.mxu0 0.0
    %292 = vmatprep.subr.mxu0 0.0
    %293 = vmatpush1.msra.mxu0 0.0
    %294 = vmatprep.subr.mxu0 0.0
    %295 = vmatpush1.msra.mxu0 0.0
    %296 = vmatprep.subr.mxu0 0.0
    %297 = vmatpush1.msra.mxu0 0.0
    %298 = vmatprep.subr.mxu0 0.0
    %299 = vmatpush1.msra.mxu0 0.0
    %300 = vmatprep.subr.mxu0 0.0
    %301 = vmatpush1.msra.mxu0 0.0
    %302 = vmatprep.subr.mxu0 0.0
    %303 = vmatpush1.msra.mxu0 0.0
    %304 = vmatprep.subr.mxu0 0.0
    %305 = vmatpush1.msra.mxu0 0.0
    %306 = vmatprep.subr.mxu0 0.0
    %307 = vmatpush1.msra.mxu0 0.0
    %308 = vmatprep.subr.mxu0 0.0
    %309 = vmatpush1.msra.mxu0 0.0
    %310 = vmatprep.subr.mxu0 0.0
    %311 = vmatpush1.msra.mxu0 0.0
    %312 = vmatprep.subr.mxu0 0.0
    %313 = vmatpush1.msra.mxu0 0.0
    %314 = vmatprep.subr.mxu0 0.0
    %315 = vmatpush1.msra.mxu0 0.0
    %316 = vmatprep.subr.mxu0 0.0
    %317 = vmatpush1.msra.mxu0 0.0
    %318 = vmatprep.subr.mxu0 %v282
    %319 = vmatpush1.msra.mxu0 %v280
    %320 = vmatprep.subr.mxu0 0.0
    %321 = vmatpush2.msra.mxu0 0.0
    %322 = vmatprep.subr.mxu0 0.0
    %323 = vmatpush2.msra.mxu0 0.0
    %324 = vmatprep.subr.mxu0 0.0
    %325 = vmatpush2.msra.mxu0 0.0
    %326 = vmatprep.subr.mxu0 0.0
    %327 = vmatpush2.msra.mxu0 0.0
    %328 = vmatprep.subr.mxu0 0.0
    %329 = vmatpush2.msra.mxu0 0.0
    %330 = vmatprep.subr.mxu0 0.0
    %331 = vmatpush2.msra.mxu0 0.0
    %332 = vmatprep.subr.mxu0 0.0
    %333 = vmatpush2.msra.mxu0 0.0
    %334 = vmatprep.subr.mxu0 0.0
    %335 = vmatpush2.msra.mxu0 0.0
    %336 = vmatprep.subr.mxu0 0.0
    %337 = vmatpush2.msra.mxu0 0.0
    %338 = vmatprep.subr.mxu0 0.0
    %339 = vmatpush2.msra.mxu0 0.0
    %340 = vmatprep.subr.mxu0 0.0
    %341 = vmatpush2.msra.mxu0 0.0
    %342 = vmatprep.subr.mxu0 0.0
    %343 = vmatpush2.msra.mxu0 0.0
    %344 = vmatprep.subr.mxu0 0.0
    %345 = vmatpush2.msra.mxu0 0.0
    %346 = vmatprep.subr.mxu0 0.0
    %347 = vmatpush2.msra.mxu0 0.0
    %348 = vmatprep.subr.mxu0 0.0
    %349 = vmatpush2.msra.mxu0 0.0
    %350 = vmatprep.subr.mxu0 0.0
    %351 = vmatpush2.msra.mxu0 0.0
    %352 = vmatprep.mubr.f32.mxu0 0.0
    %353 = vmatmul.mubr.f32.gmra.mxu0 %v278
    %v354 = vpop.f32.mrf.mxu0
    %v355 = vadd.f32 0.0, %v354
    %v356 = vpop.f32.mrf.mxu0
    %v357 = vadd.f32 0.0, %v356
    %358 = vdwg.mxu0
    %359 = vmatprep.subr.mxu0 0.0
    %360 = vmatpush1.msra.mxu0 0.0
    %361 = vmatprep.subr.mxu0 0.0
    %362 = vmatpush1.msra.mxu0 0.0
    %363 = vmatprep.subr.mxu0 0.0
    %364 = vmatpush1.msra.mxu0 0.0
    %365 = vmatprep.subr.mxu0 0.0
    %366 = vmatpush1.msra.mxu0 0.0
    %367 = vmatprep.subr.mxu0 0.0
    %368 = vmatpush1.msra.mxu0 0.0
    %369 = vmatprep.subr.mxu0 0.0
    %370 = vmatpush1.msra.mxu0 0.0
    %371 = vmatprep.subr.mxu0 0.0
    %372 = vmatpush1.msra.mxu0 0.0
    %373 = vmatprep.subr.mxu0 0.0
    %374 = vmatpush1.msra.mxu0 0.0
    %375 = vmatprep.subr.mxu0 0.0
    %376 = vmatpush1.msra.mxu0 0.0
    %377 = vmatprep.subr.mxu0 0.0
    %378 = vmatpush1.msra.mxu0 0.0
    %379 = vmatprep.subr.mxu0 0.0
    %380 = vmatpush1.msra.mxu0 0.0
    %381 = vmatprep.subr.mxu0 0.0
    %382 = vmatpush1.msra.mxu0 0.0
    %383 = vmatprep.subr.mxu0 0.0
    %384 = vmatpush1.msra.mxu0 0.0
    %385 = vmatprep.subr.mxu0 0.0
    %386 = vmatpush1.msra.mxu0 0.0
    %387 = vmatprep.subr.mxu0 0.0
    %388 = vmatpush1.msra.mxu0 0.0
    %389 = vmatprep.subr.mxu0 %v286
    %390 = vmatpush1.msra.mxu0 %v284
    %391 = vmatprep.subr.mxu0 0.0
    %392 = vmatpush2.msra.mxu0 0.0
    %393 = vmatprep.subr.mxu0 0.0
    %394 = vmatpush2.msra.mxu0 0.0
    %395 = vmatprep.subr.mxu0 0.0
    %396 = vmatpush2.msra.mxu0 0.0
    %397 = vmatprep.subr.mxu0 0.0
    %398 = vmatpush2.msra.mxu0 0.0
    %399 = vmatprep.subr.mxu0 0.0
    %400 = vmatpush2.msra.mxu0 0.0
    %401 = vmatprep.subr.mxu0 0.0
    %402 = vmatpush2.msra.mxu0 0.0
    %403 = vmatprep.subr.mxu0 0.0
    %404 = vmatpush2.msra.mxu0 0.0
    %405 = vmatprep.subr.mxu0 0.0
    %406 = vmatpush2.msra.mxu0 0.0
    %407 = vmatprep.subr.mxu0 0.0
    %408 = vmatpush2.msra.mxu0 0.0
    %409 = vmatprep.subr.mxu0 0.0
    %410 = vmatpush2.msra.mxu0 0.0
    %411 = vmatprep.subr.mxu0 0.0
    %412 = vmatpush2.msra.mxu0 0.0
    %413 = vmatprep.subr.mxu0 0.0
    %414 = vmatpush2.msra.mxu0 0.0
    %415 = vmatprep.subr.mxu0 0.0
    %416 = vmatpush2.msra.mxu0 0.0
    %417 = vmatprep.subr.mxu0 0.0
    %418 = vmatpush2.msra.mxu0 0.0
    %419 = vmatprep.subr.mxu0 0.0
    %420 = vmatpush2.msra.mxu0 0.0
    %421 = vmatprep.subr.mxu0 0.0
    %422 = vmatpush2.msra.mxu0 0.0
    %423 = vmatprep.mubr.f32.mxu0 0.0
    %424 = vmatmul.mubr.f32.gmra.mxu0 %v278
    %v425 = vpop.f32.mrf.mxu0
    %v426 = vadd.f32 0.0, %v425
    %v427 = vpop.f32.mrf.mxu0
    %v428 = vadd.f32 0.0, %v427
    %429 = vdwg.mxu0
    %v434 = vcombine.low %v355, %v357
    %v435 = vcombine.low %v426, %v428
    %438 = vst [vmem:[%s5] sm:$0x77] %v434
    %439 = vst [vmem:[%s5 + $0x8] sm:$0x77] %v435
    // Predicated region
    $region18: #{_lambda_.30} parent=1 // pred_check
      _
    $region19: #{_lambda_.30} parent=1 // pred_check_branch
      %441 = sbr.rel (0) target = $region21
    $region20: #{_lambda_.30} parent=1 // pred_region
      %s443 = ssub.s32 256, 256
      %444 = vsyncadd [#allocation3], %s443
      %s446 = sshll.u32 [#allocation2], 4
      %s447 = int_to_ptr.vmem [resolvable:$true] %s446
      %449 = dma.vmem_to_hbm [thread:$0]  %s447, 256, %s4, [#allocation3]
    $region21: #{_lambda_.30} parent=1 // pred_fallthru
      _
    // Predicated region
    $region22: #{_lambda_.30} parent=1 // pred_check
      _
    $region23: #{_lambda_.30} parent=1 // pred_check_branch
      %451 = sbr.rel (0) target = $region25
    $region24: #{_lambda_.30} parent=1 // pred_region
      _
    $region25: #{_lambda_.30} parent=1 // pred_fallthru
      _
    // Predicated region
    $region26: #{_lambda_.30} parent=1 // pred_check
      _
    $region27: #{_lambda_.30} parent=1 // pred_check_branch
      %453 = sbr.rel (0) target = $region29
    $region28: #{_lambda_.30} parent=1 // pred_region
      %454 = dma.done [#allocation3], 256
    $region29: #{_lambda_.30} parent=1 // pred_fallthru
      _
    // Predicated region
    $region30: #{_lambda_.30} parent=1 // pred_check
      _
    $region31: #{_lambda_.30} parent=1 // pred_check_branch
      %456 = sbr.rel (0) target = $region33
    $region32: #{_lambda_.30} parent=1 // pred_region
      _
    $region33: #{_lambda_.30} parent=1 // pred_fallthru
      _
    %457 = vsyncpa [#allocation3], 1

// kernel: _lambda_.29
$region0: #{_lambda_.29}
  #allocation0 [shape = 'u32[]', space=smem, size = 0x4, offset = 0x4, fixed_abs, tag = 'smem constant byte address 0x4 - core index']
  #allocation1 [shape = 'u32[144,128]{1,0:T(1,128)}', space=vmem, size = 0x12000, scoped, tag = 'internal scratch']
  #allocation2 [shape = 'f32[1,1]{1,0:T(1,128)S(1)}', space=vmem, size = 0x200, scoped, tag = 'scoped memory for _lambda_.29']
  %s0 = inlined_call_operand.vmem [shape: f32[36,512], index: 0, kind: input, shape index: {}]
  %s1 = inlined_call_operand.vmem [shape: f32[4,36], index: 1, kind: input, shape index: {}]
  %s2 = inlined_call_operand.vmem [shape: f32[4,1], index: 2, kind: input, shape index: {}]
  %s3 = inlined_call_operand.vmem [shape: f32[1,512], index: 3, kind: input, shape index: {}]
  %s4 = inlined_call_operand.<no memory space> [shape: f32[1,1], index: 4, kind: input, shape index: {}]
  %s5 = inlined_call_operand.vmem [shape: f32[4,512], index: 5, kind: output, shape index: {}]
  %s6 = sld [smem:[#allocation0]]
  $region30: #{_lambda_.29} parent=0
    _
  %s8 = ssub.s32 1, %s6
  %s9 = scalar_select 0, %s8, %s6
  %v10 = vstv %s4
  %11 = vst [vmem:[#allocation2] sm:$0x1] %v10
  // Predicated region
  $region2: #{_lambda_.29} parent=0 // pred_check
    _
  $region3: #{_lambda_.29} parent=0 // pred_check_branch
    %13 = sbr.rel (0) target = $region5
  $region4: #{_lambda_.29} parent=0 // pred_region
    _
  $region5: #{_lambda_.29} parent=0 // pred_fallthru
    _
  // Predicated region
  $region6: #{_lambda_.29} parent=0 // pred_check
    _
  $region7: #{_lambda_.29} parent=0 // pred_check_branch
    %15 = sbr.rel (0) target = $region9
  $region8: #{_lambda_.29} parent=0 // pred_region
    _
  $region9: #{_lambda_.29} parent=0 // pred_fallthru
    _
  // Predicated region
  $region10: #{_lambda_.29} parent=0 // pred_check
    _
  $region11: #{_lambda_.29} parent=0 // pred_check_branch
    %17 = sbr.rel (0) target = $region13
  $region12: #{_lambda_.29} parent=0 // pred_region
    _
  $region13: #{_lambda_.29} parent=0 // pred_fallthru
    _
  // Predicated region
  $region14: #{_lambda_.29} parent=0 // pred_check
    _
  $region15: #{_lambda_.29} parent=0 // pred_check_branch
    %19 = sbr.rel (0) target = $region17
  $region16: #{_lambda_.29} parent=0 // pred_region
    _
  $region17: #{_lambda_.29} parent=0 // pred_fallthru
    _
  // Predicated region
  $region18: #{_lambda_.29} parent=0 // pred_check
    _
  $region19: #{_lambda_.29} parent=0 // pred_check_branch
    %21 = sbr.rel (0) target = $region21
  $region20: #{_lambda_.29} parent=0 // pred_region
    _
  $region21: #{_lambda_.29} parent=0 // pred_fallthru
    _
  %v22 = vld [vmem:[%s1] sm:$0xf]
  %v23 = vld [vmem:[%s0] sm:$0xff]
  %v24 = vld [vmem:[%s0 + $0x8] sm:$0xff]
  %v25 = vld [vmem:[%s0 + $0x10] sm:$0xff]
  %v26 = vld [vmem:[%s0 + $0x18] sm:$0xff]
  %v27 = vld [vmem:[%s0 + $0x20] sm:$0xff]
  %v28 = vld [vmem:[%s0 + $0x28] sm:$0xff]
  %v29 = vld [vmem:[%s0 + $0x30] sm:$0xff]
  %v30 = vld [vmem:[%s0 + $0x38] sm:$0xff]
  %v31 = vld [vmem:[%s0 + $0x40] sm:$0xff]
  %v32 = vld [vmem:[%s0 + $0x48] sm:$0xff]
  %v33 = vld [vmem:[%s0 + $0x50] sm:$0xff]
  %v34 = vld [vmem:[%s0 + $0x58] sm:$0xff]
  %v35 = vld [vmem:[%s0 + $0x60] sm:$0xff]
  %v36 = vld [vmem:[%s0 + $0x68] sm:$0xff]
  %v37 = vld [vmem:[%s0 + $0x70] sm:$0xff]
  %v38 = vld [vmem:[%s0 + $0x78] sm:$0xff]
  %v39 = vld [vmem:[%s0 + $0x80] sm:$0xf]
  %v40 = vld [vmem:[%s0 + $0x88] sm:$0xf]
  %v41 = vld [vmem:[%s0 + $0x90] sm:$0xf]
  %v42 = vld [vmem:[%s0 + $0x98] sm:$0xf]
  %vm43 = vcmask 293888
  %v45 = vsel %vm43, %v22, 0
  %vm47 = vcmask 1043456
  %v49 = vsel %vm47, %v39, 0
  %v52 = vsel %vm47, %v40, 0
  %v55 = vsel %vm47, %v41, 0
  %v58 = vsel %vm47, %v42, 0
  %60 = vmatprep.subr.mxu0 0.0
  %61 = vmatpush1.msra.mxu0 0.0
  %62 = vmatprep.subr.mxu0 0.0
  %63 = vmatpush1.msra.mxu0 0.0
  %64 = vmatprep.subr.mxu0 0.0
  %65 = vmatpush1.msra.mxu0 0.0
  %66 = vmatprep.subr.mxu0 0.0
  %67 = vmatpush1.msra.mxu0 0.0
  %68 = vmatprep.subr.mxu0 0.0
  %69 = vmatpush1.msra.mxu0 0.0
  %70 = vmatprep.subr.mxu0 0.0
  %71 = vmatpush1.msra.mxu0 0.0
  %72 = vmatprep.subr.mxu0 0.0
  %73 = vmatpush1.msra.mxu0 0.0
  %74 = vmatprep.subr.mxu0 0.0
  %75 = vmatpush1.msra.mxu0 0.0
  %76 = vmatprep.subr.mxu0 0.0
  %77 = vmatpush1.msra.mxu0 0.0
  %78 = vmatprep.subr.mxu0 0.0
  %79 = vmatpush1.msra.mxu0 0.0
  %80 = vmatprep.subr.mxu0 0.0
  %81 = vmatpush1.msra.mxu0 0.0
  %82 = vmatprep.subr.mxu0 %v52
  %83 = vmatpush1.msra.mxu0 %v49
  %84 = vmatprep.subr.mxu0 %v36
  %85 = vmatpush1.msra.mxu0 %v35
  %86 = vmatprep.subr.mxu0 %v32
  %87 = vmatpush1.msra.mxu0 %v31
  %88 = vmatprep.subr.mxu0 %v28
  %89 = vmatpush1.msra.mxu0 %v27
  %90 = vmatprep.subr.mxu0 %v24
  %91 = vmatpush1.msra.mxu0 %v23
  %92 = vmatprep.subr.mxu0 0.0
  %93 = vmatpush2.msra.mxu0 0.0
  %94 = vmatprep.subr.mxu0 0.0
  %95 = vmatpush2.msra.mxu0 0.0
  %96 = vmatprep.subr.mxu0 0.0
  %97 = vmatpush2.msra.mxu0 0.0
  %98 = vmatprep.subr.mxu0 0.0
  %99 = vmatpush2.msra.mxu0 0.0
  %100 = vmatprep.subr.mxu0 0.0
  %101 = vmatpush2.msra.mxu0 0.0
  %102 = vmatprep.subr.mxu0 0.0
  %103 = vmatpush2.msra.mxu0 0.0
  %104 = vmatprep.subr.mxu0 0.0
  %105 = vmatpush2.msra.mxu0 0.0
  %106 = vmatprep.subr.mxu0 0.0
  %107 = vmatpush2.msra.mxu0 0.0
  %108 = vmatprep.subr.mxu0 0.0
  %109 = vmatpush2.msra.mxu0 0.0
  %110 = vmatprep.subr.mxu0 0.0
  %111 = vmatpush2.msra.mxu0 0.0
  %112 = vmatprep.subr.mxu0 0.0
  %113 = vmatpush2.msra.mxu0 0.0
  %114 = vmatprep.subr.mxu0 0.0
  %115 = vmatpush2.msra.mxu0 0.0
  %116 = vmatprep.subr.mxu0 0.0
  %117 = vmatpush2.msra.mxu0 0.0
  %118 = vmatprep.subr.mxu0 0.0
  %119 = vmatpush2.msra.mxu0 0.0
  %120 = vmatprep.subr.mxu0 0.0
  %121 = vmatpush2.msra.mxu0 0.0
  %122 = vmatprep.subr.mxu0 0.0
  %123 = vmatpush2.msra.mxu0 0.0
  %124 = vmatprep.mubr.f32.mxu0 0.0
  %125 = vmatmul.mubr.f32.gmra.mxu0 %v45
  %v126 = vpop.f32.mrf.mxu0
  %v127 = vadd.f32 0.0, %v126
  %v128 = vpop.f32.mrf.mxu0
  %v129 = vadd.f32 0.0, %v128
  %130 = vdwg.mxu0
  %131 = vmatprep.subr.mxu0 0.0
  %132 = vmatpush1.msra.mxu0 0.0
  %133 = vmatprep.subr.mxu0 0.0
  %134 = vmatpush1.msra.mxu0 0.0
  %135 = vmatprep.subr.mxu0 0.0
  %136 = vmatpush1.msra.mxu0 0.0
  %137 = vmatprep.subr.mxu0 0.0
  %138 = vmatpush1.msra.mxu0 0.0
  %139 = vmatprep.subr.mxu0 0.0
  %140 = vmatpush1.msra.mxu0 0.0
  %141 = vmatprep.subr.mxu0 0.0
  %142 = vmatpush1.msra.mxu0 0.0
  %143 = vmatprep.subr.mxu0 0.0
  %144 = vmatpush1.msra.mxu0 0.0
  %145 = vmatprep.subr.mxu0 0.0
  %146 = vmatpush1.msra.mxu0 0.0
  %147 = vmatprep.subr.mxu0 0.0
  %148 = vmatpush1.msra.mxu0 0.0
  %149 = vmatprep.subr.mxu0 0.0
  %150 = vmatpush1.msra.mxu0 0.0
  %151 = vmatprep.subr.mxu0 0.0
  %152 = vmatpush1.msra.mxu0 0.0
  %153 = vmatprep.subr.mxu0 %v58
  %154 = vmatpush1.msra.mxu0 %v55
  %155 = vmatprep.subr.mxu0 %v38
  %156 = vmatpush1.msra.mxu0 %v37
  %157 = vmatprep.subr.mxu0 %v34
  %158 = vmatpush1.msra.mxu0 %v33
  %159 = vmatprep.subr.mxu0 %v30
  %160 = vmatpush1.msra.mxu0 %v29
  %161 = vmatprep.subr.mxu0 %v26
  %162 = vmatpush1.msra.mxu0 %v25
  %163 = vmatprep.subr.mxu0 0.0
  %164 = vmatpush2.msra.mxu0 0.0
  %165 = vmatprep.subr.mxu0 0.0
  %166 = vmatpush2.msra.mxu0 0.0
  %167 = vmatprep.subr.mxu0 0.0
  %168 = vmatpush2.msra.mxu0 0.0
  %169 = vmatprep.subr.mxu0 0.0
  %170 = vmatpush2.msra.mxu0 0.0
  %171 = vmatprep.subr.mxu0 0.0
  %172 = vmatpush2.msra.mxu0 0.0
  %173 = vmatprep.subr.mxu0 0.0
  %174 = vmatpush2.msra.mxu0 0.0
  %175 = vmatprep.subr.mxu0 0.0
  %176 = vmatpush2.msra.mxu0 0.0
  %177 = vmatprep.subr.mxu0 0.0
  %178 = vmatpush2.msra.mxu0 0.0
  %179 = vmatprep.subr.mxu0 0.0
  %180 = vmatpush2.msra.mxu0 0.0
  %181 = vmatprep.subr.mxu0 0.0
  %182 = vmatpush2.msra.mxu0 0.0
  %183 = vmatprep.subr.mxu0 0.0
  %184 = vmatpush2.msra.mxu0 0.0
  %185 = vmatprep.subr.mxu0 0.0
  %186 = vmatpush2.msra.mxu0 0.0
  %187 = vmatprep.subr.mxu0 0.0
  %188 = vmatpush2.msra.mxu0 0.0
  %189 = vmatprep.subr.mxu0 0.0
  %190 = vmatpush2.msra.mxu0 0.0
  %191 = vmatprep.subr.mxu0 0.0
  %192 = vmatpush2.msra.mxu0 0.0
  %193 = vmatprep.subr.mxu0 0.0
  %194 = vmatpush2.msra.mxu0 0.0
  %195 = vmatprep.mubr.f32.mxu0 0.0
  %196 = vmatmul.mubr.f32.gmra.mxu0 %v45
  %v197 = vpop.f32.mrf.mxu0
  %v198 = vadd.f32 0.0, %v197
  %v199 = vpop.f32.mrf.mxu0
  %v200 = vadd.f32 0.0, %v199
  %201 = vdwg.mxu0
  %v202 = vld [vmem:[%s2] sm:$0xf]
  %204 = vset.pattern.permute.xlu0 0
  %205 = vperm.xlu0 %204, %v202
  %v206 = vpop.permute.xlu0 %205
  %v208 = vmul.f32 %v127, %v206
  %v209 = vmul.f32 %v129, %v206
  %v210 = vmul.f32 %v198, %v206
  %v211 = vmul.f32 %v200, %v206
  %v212 = vld [vmem:[#allocation2] sm:$0x1]
  %v213 = vld [vmem:[%s3] sm:$0xf]
  %215 = vset.pattern.permute.xlu0 0
  %216 = vperm.xlu0 %215, %v212
  %v217 = vpop.permute.xlu0 %216
  %v219 = vlaneseq
  %v220 = vshrl.u32 %v219, 7
  %v221 = vsub.s32 0, %v220
  %v222 = vrot.slane %v217, %v221
  %v223 = vmul.f32 %v222, %v213
  %v225 = vlaneseq
  %v226 = vshrl.u32 %v225, 7
  %v227 = vsub.s32 0, %v226
  %v228 = vrot.slane %v223, %v227
  %v229 = vlaneseq
  %v230 = vshrl.u32 %v229, 7
  %v231 = vsub.s32 1, %v230
  %v232 = vrot.slane %v223, %v231
  %v233 = vlaneseq
  %v234 = vshrl.u32 %v233, 7
  %v235 = vsub.s32 2, %v234
  %v236 = vrot.slane %v223, %v235
  %v237 = vlaneseq
  %v238 = vshrl.u32 %v237, 7
  %v239 = vsub.s32 3, %v238
  %v240 = vrot.slane %v223, %v239
  %v245 = vadd.f32 %v208, %v228
  %v246 = vadd.f32 %v209, %v232
  %v247 = vadd.f32 %v210, %v236
  %v248 = vadd.f32 %v211, %v240
  %v249 = vmul.f32 %v245, %v245
  %v250 = vmul.f32 %v246, %v246
  %v251 = vmul.f32 %v247, %v247
  %v252 = vmul.f32 %v248, %v248
  %v253 = vsel %vm47, %v249, 0.0
  %v254 = vrot.slane %v253, 4
  %v255 = vadd.f32 %v253, %v254
  %v256 = vrot.slane %v255, 2
  %v257 = vadd.f32 %v255, %v256
  %v258 = vrot.slane %v257, 1
  %v259 = vadd.f32 %v257, %v258
  %v260 = vsel %vm47, %v250, 0.0
  %v261 = vrot.slane %v260, 4
  %v262 = vadd.f32 %v260, %v261
  %v263 = vrot.slane %v262, 2
  %v264 = vadd.f32 %v262, %v263
  %v265 = vrot.slane %v264, 1
  %v266 = vadd.f32 %v264, %v265
  %v267 = vsel %vm47, %v251, 0.0
  %v268 = vrot.slane %v267, 4
  %v269 = vadd.f32 %v267, %v268
  %v270 = vrot.slane %v269, 2
  %v271 = vadd.f32 %v269, %v270
  %v272 = vrot.slane %v271, 1
  %v273 = vadd.f32 %v271, %v272
  %v274 = vsel %vm47, %v252, 0.0
  %v275 = vrot.slane %v274, 4
  %v276 = vadd.f32 %v274, %v275
  %v277 = vrot.slane %v276, 2
  %v278 = vadd.f32 %v276, %v277
  %v279 = vrot.slane %v278, 1
  %v280 = vadd.f32 %v278, %v279
  %v281 = vrcp.pop 4.0
  %v282 = vmul.f32 %v259, %v281
  %v283 = vmul.f32 %v266, %v281
  %v284 = vmul.f32 %v273, %v281
  %v285 = vmul.f32 %v280, %v281
  %v286 = vadd.f32 %v282, 1e-08
  %v287 = vadd.f32 %v283, 1e-08
  %v288 = vadd.f32 %v284, 1e-08
  %v289 = vadd.f32 %v285, 1e-08
  %v290 = vrsqrt.pop %v286
  %v291 = vrsqrt.pop %v287
  %v292 = vrsqrt.pop %v288
  %v293 = vrsqrt.pop %v289
  %v294 = vmul.f32 %v245, %v290
  %v295 = vmul.f32 %v246, %v291
  %v296 = vmul.f32 %v247, %v292
  %v297 = vmul.f32 %v248, %v293
  %v302 = vcombine.low %v294, %v295
  %v303 = vcombine.low %v296, %v297
  %306 = vst [vmem:[%s5] sm:$0xff] %v302
  %307 = vst [vmem:[%s5 + $0x8] sm:$0xff] %v303
  // Predicated region
  $region22: #{_lambda_.29} parent=0 // pred_check
    _
  $region23: #{_lambda_.29} parent=0 // pred_check_branch
    %309 = sbr.rel (0) target = $region25
  $region24: #{_lambda_.29} parent=0 // pred_region
    _
  $region25: #{_lambda_.29} parent=0 // pred_fallthru
    _
  // Predicated region
  $region26: #{_lambda_.29} parent=0 // pred_check
    _
  $region27: #{_lambda_.29} parent=0 // pred_check_branch
    %311 = sbr.rel (0) target = $region29
  $region28: #{_lambda_.29} parent=0 // pred_region
    _
  $region29: #{_lambda_.29} parent=0 // pred_fallthru
    _

// kernel: _lambda_.26
$region0: #{_lambda_.26}
  #allocation0 [shape = 'u32[]', space=smem, size = 0x4, offset = 0x4, fixed_abs, tag = 'smem constant byte address 0x4 - core index']
  #allocation1 [shape = 'u32[144,128]{1,0:T(1,128)}', space=vmem, size = 0x12000, scoped, tag = 'internal scratch']
  %s0 = inlined_call_operand.vmem [shape: f32[6,16], index: 0, kind: input, shape index: {}]
  %s1 = inlined_call_operand.vmem [shape: f32[16,64], index: 1, kind: input, shape index: {}]
  %s2 = inlined_call_operand.vmem [shape: f32[6,64], index: 2, kind: input, shape index: {}]
  %s3 = inlined_call_operand.vmem [shape: f32[6,64], index: 3, kind: output, shape index: {0}]
  %s4 = inlined_call_operand.vmem [shape: f32[6,64], index: 4, kind: output, shape index: {1}]
  %5 = xla_tuple %s3, %s4
  %s6 = sld [smem:[#allocation0]]
  $region30: #{_lambda_.26} parent=0
    _
  %s8 = ssub.s32 1, %s6
  %s9 = scalar_select 0, %s8, %s6
  // Predicated region
  $region2: #{_lambda_.26} parent=0 // pred_check
    _
  $region3: #{_lambda_.26} parent=0 // pred_check_branch
    %11 = sbr.rel (0) target = $region5
  $region4: #{_lambda_.26} parent=0 // pred_region
    _
  $region5: #{_lambda_.26} parent=0 // pred_fallthru
    _
  // Predicated region
  $region6: #{_lambda_.26} parent=0 // pred_check
    _
  $region7: #{_lambda_.26} parent=0 // pred_check_branch
    %13 = sbr.rel (0) target = $region9
  $region8: #{_lambda_.26} parent=0 // pred_region
    _
  $region9: #{_lambda_.26} parent=0 // pred_fallthru
    _
  // Predicated region
  $region10: #{_lambda_.26} parent=0 // pred_check
    _
  $region11: #{_lambda_.26} parent=0 // pred_check_branch
    %15 = sbr.rel (0) target = $region13
  $region12: #{_lambda_.26} parent=0 // pred_region
    _
  $region13: #{_lambda_.26} parent=0 // pred_fallthru
    _
  %v16 = vld [vmem:[%s0] sm:$0x3f]
  %v17 = vld [vmem:[%s1] sm:$0xff]
  %v18 = vld [vmem:[%s1 + $0x8] sm:$0xff]
  %vm19 = vcmask 130048
  %v21 = vsel %vm19, %v16, 0
  %23 = vmatprep.subr.mxu0 0.0
  %24 = vmatpush1.msra.mxu0 0.0
  %25 = vmatprep.subr.mxu0 0.0
  %26 = vmatpush1.msra.mxu0 0.0
  %27 = vmatprep.subr.mxu0 0.0
  %28 = vmatpush1.msra.mxu0 0.0
  %29 = vmatprep.subr.mxu0 0.0
  %30 = vmatpush1.msra.mxu0 0.0
  %31 = vmatprep.subr.mxu0 0.0
  %32 = vmatpush1.msra.mxu0 0.0
  %33 = vmatprep.subr.mxu0 0.0
  %34 = vmatpush1.msra.mxu0 0.0
  %35 = vmatprep.subr.mxu0 0.0
  %36 = vmatpush1.msra.mxu0 0.0
  %37 = vmatprep.subr.mxu0 0.0
  %38 = vmatpush1.msra.mxu0 0.0
  %39 = vmatprep.subr.mxu0 0.0
  %40 = vmatpush1.msra.mxu0 0.0
  %41 = vmatprep.subr.mxu0 0.0
  %42 = vmatpush1.msra.mxu0 0.0
  %43 = vmatprep.subr.mxu0 0.0
  %44 = vmatpush1.msra.mxu0 0.0
  %45 = vmatprep.subr.mxu0 0.0
  %46 = vmatpush1.msra.mxu0 0.0
  %47 = vmatprep.subr.mxu0 0.0
  %48 = vmatpush1.msra.mxu0 0.0
  %49 = vmatprep.subr.mxu0 0.0
  %50 = vmatpush1.msra.mxu0 0.0
  %51 = vmatprep.subr.mxu0 0.0
  %52 = vmatpush1.msra.mxu0 %v18
  %53 = vmatprep.subr.mxu0 0.0
  %54 = vmatpush1.msra.mxu0 %v17
  %55 = vmatprep.subr.mxu0 0.0
  %56 = vmatpush2.msra.mxu0 0.0
  %57 = vmatprep.subr.mxu0 0.0
  %58 = vmatpush2.msra.mxu0 0.0
  %59 = vmatprep.subr.mxu0 0.0
  %60 = vmatpush2.msra.mxu0 0.0
  %61 = vmatprep.subr.mxu0 0.0
  %62 = vmatpush2.msra.mxu0 0.0
  %63 = vmatprep.subr.mxu0 0.0
  %64 = vmatpush2.msra.mxu0 0.0
  %65 = vmatprep.subr.mxu0 0.0
  %66 = vmatpush2.msra.mxu0 0.0
  %67 = vmatprep.subr.mxu0 0.0
  %68 = vmatpush2.msra.mxu0 0.0
  %69 = vmatprep.subr.mxu0 0.0
  %70 = vmatpush2.msra.mxu0 0.0
  %71 = vmatprep.subr.mxu0 0.0
  %72 = vmatpush2.msra.mxu0 0.0
  %73 = vmatprep.subr.mxu0 0.0
  %74 = vmatpush2.msra.mxu0 0.0
  %75 = vmatprep.subr.mxu0 0.0
  %76 = vmatpush2.msra.mxu0 0.0
  %77 = vmatprep.subr.mxu0 0.0
  %78 = vmatpush2.msra.mxu0 0.0
  %79 = vmatprep.subr.mxu0 0.0
  %80 = vmatpush2.msra.mxu0 0.0
  %81 = vmatprep.subr.mxu0 0.0
  %82 = vmatpush2.msra.mxu0 0.0
  %83 = vmatprep.subr.mxu0 0.0
  %84 = vmatpush2.msra.mxu0 0.0
  %85 = vmatprep.subr.mxu0 0.0
  %86 = vmatpush2.msra.mxu0 0.0
  %87 = vmatprep.mubr.f32.mxu0 0.0
  %88 = vmatmul.mubr.f32.gmra.mxu0 %v21
  %v89 = vpop.f32.mrf.mxu0
  %v90 = vadd.f32 0.0, %v89
  %v91 = vpop.f32.mrf.mxu0
  %92 = vdwg.mxu0
  %v93 = vld [vmem:[%s2] sm:$0x3f]
  %v94 = vadd.f32 %v93, %v90
  %vm95 = vcmask 521216
  %96 = vst.msk [vmem:[%s3] sm:$0x3f] %vm95, %v94
  %v97 = vsub.f32 0.0, %v94
  %v98 = vmul.f32 %v97, 1.442695
  %v99 = vpow.pop %v98
  %v100 = vadd.f32 %v99, 1.0
  %v101 = vrcp.pop %v100
  %v102 = vmul.f32 1.0, %v101
  %103 = vst.msk [vmem:[%s4] sm:$0x3f] %vm95, %v102
  // Predicated region
  $region14: #{_lambda_.26} parent=0 // pred_check
    _
  $region15: #{_lambda_.26} parent=0 // pred_check_branch
    %105 = sbr.rel (0) target = $region17
  $region16: #{_lambda_.26} parent=0 // pred_region
    _
  $region17: #{_lambda_.26} parent=0 // pred_fallthru
    _
  // Predicated region
  $region18: #{_lambda_.26} parent=0 // pred_check
    _
  $region19: #{_lambda_.26} parent=0 // pred_check_branch
    %107 = sbr.rel (0) target = $region21
  $region20: #{_lambda_.26} parent=0 // pred_region
    _
  $region21: #{_lambda_.26} parent=0 // pred_fallthru
    _
  // Predicated region
  $region22: #{_lambda_.26} parent=0 // pred_check
    _
  $region23: #{_lambda_.26} parent=0 // pred_check_branch
    %109 = sbr.rel (0) target = $region25
  $region24: #{_lambda_.26} parent=0 // pred_region
    _
  $region25: #{_lambda_.26} parent=0 // pred_fallthru
    _
  // Predicated region
  $region26: #{_lambda_.26} parent=0 // pred_check
    _
  $region27: #{_lambda_.26} parent=0 // pred_check_branch
    %111 = sbr.rel (0) target = $region29
  $region28: #{_lambda_.26} parent=0 // pred_region
    _
  $region29: #{_lambda_.26} parent=0 // pred_fallthru
    _

// kernel: _lambda_.31
$region0: #{_lambda_.31}
  #allocation0 [shape = 'u32[]', space=smem, size = 0x4, offset = 0x4, fixed_abs, tag = 'smem constant byte address 0x4 - core index']
  #allocation1 [shape = 'u32[144,128]{1,0:T(1,128)}', space=vmem, size = 0x12000, scoped, tag = 'internal scratch']
  %s0 = inlined_call_operand.vmem [shape: f32[6,64], index: 0, kind: input, shape index: {}]
  %s1 = inlined_call_operand.vmem [shape: f32[64,256], index: 1, kind: input, shape index: {}]
  %s2 = inlined_call_operand.vmem [shape: f32[6,256], index: 2, kind: input, shape index: {}]
  %s3 = inlined_call_operand.hbm [shape: f32[6,256], index: 3, kind: output, shape index: {0}]
  %s4 = inlined_call_operand.vmem [shape: f32[6,256], index: 4, kind: output, shape index: {1}]
  %5 = xla_tuple %s3, %s4
  %s6 = sld [smem:[#allocation0]]
  $region30: #{_lambda_.31} parent=0
    _
  %s8 = ssub.s32 1, %s6
  %s9 = scalar_select 0, %s8, %s6
  $region1: #{_lambda_.31} parent=0
    #allocation2 [shape = 'u8[8192]{0}', space=vmem, size = 0x2000, scoped, tag = 'output window, operand 0, single buffered']
    #allocation3 [shape = 's32[1]{0}', space=sflag, size = 0x4, scoped, tag = 'scoped memory for _lambda_.31']
    %10 = vsyncpa [#allocation3], 0
    // Predicated region
    $region2: #{_lambda_.31} parent=1 // pred_check
      _
    $region3: #{_lambda_.31} parent=1 // pred_check_branch
      %12 = sbr.rel (0) target = $region5
    $region4: #{_lambda_.31} parent=1 // pred_region
      _
    $region5: #{_lambda_.31} parent=1 // pred_fallthru
      _
    // Predicated region
    $region6: #{_lambda_.31} parent=1 // pred_check
      _
    $region7: #{_lambda_.31} parent=1 // pred_check_branch
      %14 = sbr.rel (0) target = $region9
    $region8: #{_lambda_.31} parent=1 // pred_region
      _
    $region9: #{_lambda_.31} parent=1 // pred_fallthru
      _
    // Predicated region
    $region10: #{_lambda_.31} parent=1 // pred_check
      _
    $region11: #{_lambda_.31} parent=1 // pred_check_branch
      %16 = sbr.rel (0) target = $region13
    $region12: #{_lambda_.31} parent=1 // pred_region
      _
    $region13: #{_lambda_.31} parent=1 // pred_fallthru
      _
    %v17 = vld [vmem:[%s0] sm:$0x3f]
    %v18 = vld [vmem:[%s1] sm:$0xff]
    %v19 = vld [vmem:[%s1 + $0x8] sm:$0xff]
    %v20 = vld [vmem:[%s1 + $0x10] sm:$0xff]
    %v21 = vld [vmem:[%s1 + $0x18] sm:$0xff]
    %v22 = vld [vmem:[%s1 + $0x20] sm:$0xff]
    %v23 = vld [vmem:[%s1 + $0x28] sm:$0xff]
    %v24 = vld [vmem:[%s1 + $0x30] sm:$0xff]
    %v25 = vld [vmem:[%s1 + $0x38] sm:$0xff]
    %v26 = vld [vmem:[%s1 + $0x40] sm:$0xff]
    %v27 = vld [vmem:[%s1 + $0x48] sm:$0xff]
    %v28 = vld [vmem:[%s1 + $0x50] sm:$0xff]
    %v29 = vld [vmem:[%s1 + $0x58] sm:$0xff]
    %v30 = vld [vmem:[%s1 + $0x60] sm:$0xff]
    %v31 = vld [vmem:[%s1 + $0x68] sm:$0xff]
    %v32 = vld [vmem:[%s1 + $0x70] sm:$0xff]
    %v33 = vld [vmem:[%s1 + $0x78] sm:$0xff]
    %vm34 = vcmask 523264
    %v36 = vsel %vm34, %v17, 0
    %38 = vmatprep.subr.mxu0 0.0
    %39 = vmatpush1.msra.mxu0 0.0
    %40 = vmatprep.subr.mxu0 0.0
    %41 = vmatpush1.msra.mxu0 0.0
    %42 = vmatprep.subr.mxu0 0.0
    %43 = vmatpush1.msra.mxu0 0.0
    %44 = vmatprep.subr.mxu0 0.0
    %45 = vmatpush1.msra.mxu0 0.0
    %46 = vmatprep.subr.mxu0 0.0
    %47 = vmatpush1.msra.mxu0 0.0
    %48 = vmatprep.subr.mxu0 0.0
    %49 = vmatpush1.msra.mxu0 0.0
    %50 = vmatprep.subr.mxu0 0.0
    %51 = vmatpush1.msra.mxu0 0.0
    %52 = vmatprep.subr.mxu0 0.0
    %53 = vmatpush1.msra.mxu0 0.0
    %54 = vmatprep.subr.mxu0 %v33
    %55 = vmatpush1.msra.mxu0 %v32
    %56 = vmatprep.subr.mxu0 %v31
    %57 = vmatpush1.msra.mxu0 %v30
    %58 = vmatprep.subr.mxu0 %v29
    %59 = vmatpush1.msra.mxu0 %v28
    %60 = vmatprep.subr.mxu0 %v27
    %61 = vmatpush1.msra.mxu0 %v26
    %62 = vmatprep.subr.mxu0 %v25
    %63 = vmatpush1.msra.mxu0 %v24
    %64 = vmatprep.subr.mxu0 %v23
    %65 = vmatpush1.msra.mxu0 %v22
    %66 = vmatprep.subr.mxu0 %v21
    %67 = vmatpush1.msra.mxu0 %v20
    %68 = vmatprep.subr.mxu0 %v19
    %69 = vmatpush1.msra.mxu0 %v18
    %70 = vmatprep.subr.mxu0 0.0
    %71 = vmatpush2.msra.mxu0 0.0
    %72 = vmatprep.subr.mxu0 0.0
    %73 = vmatpush2.msra.mxu0 0.0
    %74 = vmatprep.subr.mxu0 0.0
    %75 = vmatpush2.msra.mxu0 0.0
    %76 = vmatprep.subr.mxu0 0.0
    %77 = vmatpush2.msra.mxu0 0.0
    %78 = vmatprep.subr.mxu0 0.0
    %79 = vmatpush2.msra.mxu0 0.0
    %80 = vmatprep.subr.mxu0 0.0
    %81 = vmatpush2.msra.mxu0 0.0
    %82 = vmatprep.subr.mxu0 0.0
    %83 = vmatpush2.msra.mxu0 0.0
    %84 = vmatprep.subr.mxu0 0.0
    %85 = vmatpush2.msra.mxu0 0.0
    %86 = vmatprep.subr.mxu0 0.0
    %87 = vmatpush2.msra.mxu0 0.0
    %88 = vmatprep.subr.mxu0 0.0
    %89 = vmatpush2.msra.mxu0 0.0
    %90 = vmatprep.subr.mxu0 0.0
    %91 = vmatpush2.msra.mxu0 0.0
    %92 = vmatprep.subr.mxu0 0.0
    %93 = vmatpush2.msra.mxu0 0.0
    %94 = vmatprep.subr.mxu0 0.0
    %95 = vmatpush2.msra.mxu0 0.0
    %96 = vmatprep.subr.mxu0 0.0
    %97 = vmatpush2.msra.mxu0 0.0
    %98 = vmatprep.subr.mxu0 0.0
    %99 = vmatpush2.msra.mxu0 0.0
    %100 = vmatprep.subr.mxu0 0.0
    %101 = vmatpush2.msra.mxu0 0.0
    %102 = vmatprep.mubr.f32.mxu0 0.0
    %103 = vmatmul.mubr.f32.gmra.mxu0 %v36
    %v104 = vpop.f32.mrf.mxu0
    %v105 = vadd.f32 0.0, %v104
    %v106 = vpop.f32.mrf.mxu0
    %v107 = vadd.f32 0.0, %v106
    %108 = vdwg.mxu0
    %v109 = vld [vmem:[%s2] sm:$0x3f]
    %v110 = vld [vmem:[%s2 + $0x8] sm:$0x3f]
    %v111 = vadd.f32 %v109, %v105
    %v112 = vadd.f32 %v110, %v107
    %113 = vst [vmem:[#allocation2] sm:$0x3f] %v111
    %114 = vst [vmem:[#allocation2 + $0x8] sm:$0x3f] %v112
    %v115 = vsub.f32 0.0, %v111
    %v116 = vsub.f32 0.0, %v112
    %v117 = vmul.f32 %v115, 1.442695
    %v118 = vpow.pop %v117
    %v119 = vmul.f32 %v116, 1.442695
    %v120 = vpow.pop %v119
    %v121 = vadd.f32 %v118, 1.0
    %v122 = vadd.f32 %v120, 1.0
    %v123 = vrcp.pop %v121
    %v124 = vmul.f32 1.0, %v123
    %v125 = vrcp.pop %v122
    %v126 = vmul.f32 1.0, %v125
    %127 = vst [vmem:[%s4] sm:$0x3f] %v124
    %128 = vst [vmem:[%s4 + $0x8] sm:$0x3f] %v126
    // Predicated region
    $region14: #{_lambda_.31} parent=1 // pred_check
      _
    $region15: #{_lambda_.31} parent=1 // pred_check_branch
      %130 = sbr.rel (0) target = $region17
    $region16: #{_lambda_.31} parent=1 // pred_region
      %s132 = ssub.s32 256, 256
      %133 = vsyncadd [#allocation3], %s132
      %s135 = sshll.u32 [#allocation2], 4
      %s136 = int_to_ptr.vmem [resolvable:$true] %s135
      %138 = dma.vmem_to_hbm [thread:$0]  %s136, 256, %s3, [#allocation3]
    $region17: #{_lambda_.31} parent=1 // pred_fallthru
      _
    // Predicated region
    $region18: #{_lambda_.31} parent=1 // pred_check
      _
    $region19: #{_lambda_.31} parent=1 // pred_check_branch
      %140 = sbr.rel (0) target = $region21
    $region20: #{_lambda_.31} parent=1 // pred_region
      _
    $region21: #{_lambda_.31} parent=1 // pred_fallthru
      _
    // Predicated region
    $region22: #{_lambda_.31} parent=1 // pred_check
      _
    $region23: #{_lambda_.31} parent=1 // pred_check_branch
      %142 = sbr.rel (0) target = $region25
    $region24: #{_lambda_.31} parent=1 // pred_region
      %143 = dma.done [#allocation3], 256
    $region25: #{_lambda_.31} parent=1 // pred_fallthru
      _
    // Predicated region
    $region26: #{_lambda_.31} parent=1 // pred_check
      _
    $region27: #{_lambda_.31} parent=1 // pred_check_branch
      %145 = sbr.rel (0) target = $region29
    $region28: #{_lambda_.31} parent=1 // pred_region
      _
    $region29: #{_lambda_.31} parent=1 // pred_fallthru
      _
    %146 = vsyncpa [#allocation3], 1

</llo_original>
